<compile_context>
chip_gen: v6e
topology: v6e:2x2x1
jax: 0.10.0
libtpu: 0.0.40
codegen_flags: <defaults>
</compile_context>

<pallas_src>
import functools

import jax
import jax.numpy as jnp
from jax import lax
from jax.experimental import pallas as pl
from jax.experimental.pallas import tpu as pltpu


# ---------------------------------------------------------------------------
# Fused residual-block kernel
# ---------------------------------------------------------------------------

def _gate(acc, cout):
    """WaveNet gate tanh(f) * sigmoid(g) on the f32 accumulator.

    sigmoid(g) is rewritten as 0.5*(tanh(0.5*g)+1): two EUP transcendentals per
    element instead of tanh + exp + reciprocal."""
    f = acc[:, :cout]
    g = acc[:, cout:]
    return jnp.tanh(f) * (0.5 * jnp.tanh(0.5 * g) + 0.5)


def _tcn_block_kernel(*refs, K, dilation, TL, H1, Hp, Cout,
                      has_prev, has_down, has_skip_in, first, last, use_skip):
    """One full TCN residual block for a (1, TL, C) tile of the sequence.

    Entirely in VMEM/registers:
        h1   = gate(causal_dilated_conv(x,  w1) + b1)
        h2   = gate(causal_dilated_conv(h1, w2) + b2)    # dropout = identity
        res  = x @ wdown + bdown          (only when Cin != Cout)
        h    = relu(h2 + res)                            -> h_out
        skip = skip_in + h2  (f32)                       -> skip_out (aliased)
        [last block] out = relu(skip)  (or h when skip connections are off)

    Causality: the Hp (sublane-aligned) rows of left context come from a
    halo-only block of the previous L-tile (zeros for the first tile); halo +
    current tile are staged in a persistent VMEM scratch and both convs run as
    a single im2col contraction each.
    """
    it = iter(refs)
    x_cur = next(it)                               # (1, TL, Cin)
    x_prev = next(it) if has_prev else None        # (1, Hp, Cin) halo
    w1 = next(it); b1 = next(it)                   # (K*Cin, 2Cout), (1, 2Cout)
    w2 = next(it); b2 = next(it)                   # (K*Cout, 2Cout), (1, 2Cout)
    wdown = next(it) if has_down else None
    bdown = next(it) if has_down else None
    skip_in = next(it) if has_skip_in else None    # (1, TL, Cout) f32
    if last:
        out_ref = next(it)
        h_out_ref = None
        skip_out_ref = None
    else:
        h_out_ref = next(it)
        skip_out_ref = next(it) if use_skip else None
    xpad_ref = next(it)                            # VMEM scratch (TL+Hp, Cin)

    l = pl.program_id(1)          # L-tile index within the sequence
    H = 2 * H1                    # x context needed by the fused conv pair
    off = Hp - H                  # slack from rounding the halo up to 8 rows
    T1 = TL + H1                  # conv1 rows (covers conv2's causal halo)

    # --- stage halo + current tile into the persistent scratch (no concat temp)
    xc = x_cur[0]                                              # (TL, Cin)
    xpad_ref[Hp:, :] = xc
    if Hp > 0:
        if has_prev:
            halo = x_prev[0]                                   # (Hp, Cin)
            halo = jnp.where(l > 0, halo, jnp.zeros_like(halo))  # seq start -> 0
        else:
            halo = jnp.zeros((Hp, xc.shape[1]), xc.dtype)
        xpad_ref[:Hp, :] = halo

    # --- conv1 (+gate) as ONE im2col contraction over (T1, K*Cin)
    cols1 = [xpad_ref[off + k * dilation: off + k * dilation + T1, :]
             for k in range(K)]
    x_im = cols1[0] if K == 1 else jnp.concatenate(cols1, axis=-1)
    acc1 = jnp.dot(x_im, w1[...], preferred_element_type=jnp.float32) + b1[...]
    h1 = _gate(acc1, Cout)                                     # (T1, Cout) f32

    # conv2's input is zero-padded at the *sequence* start (first tile only).
    if H1 > 0:
        rows = lax.broadcasted_iota(jnp.int32, (T1, 1), 0)
        h1 = jnp.where(jnp.logical_and(l == 0, rows < H1), 0.0, h1)

    # --- conv2 (+gate) as ONE im2col contraction over (TL, K*Cout)
    h1c = h1.astype(w2.dtype)
    cols2 = [h1c[k * dilation: k * dilation + TL, :] for k in range(K)]
    h_im = cols2[0] if K == 1 else jnp.concatenate(cols2, axis=-1)
    acc2 = jnp.dot(h_im, w2[...], preferred_element_type=jnp.float32) + b2[...]
    h2 = _gate(acc2, Cout)                                     # (TL, Cout) f32
    # TODO(synk): dropout is treated as identity (eval mode); no RNG applied.

    # --- residual add + ReLU (block output feeding the next block)
    if has_down:
        res = jnp.dot(xc, wdown[...], preferred_element_type=jnp.float32)
        res = res + bdown[...]
    else:
        res = xc.astype(jnp.float32)
    h_new = jnp.maximum(h2 + res, 0.0)

    # --- skip accumulation (kept f32 across blocks) / outputs
    if use_skip:
        s_tot = h2 if first else skip_in[0] + h2
    if last:
        if use_skip:
            out_ref[0] = jnp.maximum(s_tot, 0.0).astype(out_ref.dtype)
        else:
            out_ref[0] = h_new.astype(out_ref.dtype)
    else:
        h_out_ref[0] = h_new.astype(h_out_ref.dtype)
        if use_skip:
            skip_out_ref[0] = s_tot.astype(skip_out_ref.dtype)


# ---------------------------------------------------------------------------
# Block wrapper: tiling, BlockSpecs, aliasing, VMEM budgeting
# ---------------------------------------------------------------------------

def _round_up(v, m):
    return ((v + m - 1) // m) * m


def _vmem_budget_bytes():
    """Scoped VMEM budget per kernel: half the physical capacity, capped at
    64 MiB (=> 64 MiB on v5e/v6e's 128 MiB, 32 MiB on v7x's 64 MiB)."""
    try:
        phys = int(pltpu.get_tpu_info().vmem_capacity_bytes)
    except Exception:                       # interpret mode / info unavailable
        phys = 64 * 1024 * 1024
    return min(phys // 2, 64 * 1024 * 1024)


def _choose_l_tile(L, Hp, footprint_fn, budget, user_cap=None, prefer_multi=False):
    """Largest L-tile that (a) divides L, (b) is a multiple of max(Hp, 8) so the
    previous tile's tail covers the conv halo exactly, (c) whose estimated
    working set fits `budget`, and (d) respects the optional user cap."""
    step = max(Hp, 8)
    cands = sorted((t for t in range(step, L + 1, step) if L % t == 0),
                   reverse=True)
    if not cands:
        return L                  # no clean tiling; single tile (halo unused)
    smallest = cands[-1]

    def ok(t):
        if user_cap is not None and t > user_cap and t != smallest:
            return False
        return footprint_fn(t) <= budget

    picks = [t for t in cands if ok(t)]
    if not picks:
        return smallest           # over budget; vmem_limit is raised to cover it
    best = picks[0]
    if prefer_multi and best == L and len(picks) > 1:
        best = picks[1]           # keep >=2 L-tiles so both TCs (v7x) get work
    return best


def _tcn_block(h, blk, skip, *, dilation, K, first, last, use_skip,
               compute_dtype, l_tile_cap=None):
    """One fused residual block.  h: (N, L, Cin) -> see kernel docstring."""
    N, L, Cin = h.shape
    C2 = blk["w1"].shape[-1]
    Cout = C2 // 2
    has_down = blk["wdown"] is not None
    has_skip_in = use_skip and (not first)

    H1 = (K - 1) * dilation                 # halo of a single conv
    H = 2 * H1                              # x halo needed by the fused pair
    Hp = _round_up(H, 8) if H > 0 else 0    # sublane-aligned halo
    cd = jnp.dtype(compute_dtype).itemsize
    budget = _vmem_budget_bytes()

    def footprint(TL):
        """Rough per-step VMEM working set (double-buffered blocks + scratch +
        f32 intermediates + im2col operands)."""
        T1 = TL + H1
        b = 2 * TL * Cin * cd                       # x_cur (double buffered)
        b += 2 * Hp * Cin * cd                      # halo block
        if has_skip_in:
            b += 2 * TL * Cout * 4                  # skip in (f32)
        if last:
            b += 2 * TL * Cout * 4                  # f32 output
        else:
            b += 2 * TL * Cout * cd                 # h out
            if use_skip:
                b += 2 * TL * Cout * 4              # skip out (f32)
        b += 2 * (K * Cin * C2 + K * Cout * C2
                  + (Cin * Cout if has_down else 0)) * cd      # weights
        b += 2 * (2 * C2 + Cout) * 4                            # biases
        b += (TL + Hp) * Cin * cd                   # xpad scratch
        b += T1 * (C2 + Cout) * 4                   # acc1 + h1
        b += T1 * K * Cin * cd + TL * K * Cout * cd  # im2col operands
        b += TL * (C2 + 4 * Cout) * 4               # acc2, h2, res, h_new, skip
        return b

    TL = _choose_l_tile(L, Hp, footprint, int(0.75 * budget),
                        user_cap=l_tile_cap, prefer_multi=(N == 1))
    nl = L // TL
    has_prev = (Hp > 0) and (nl > 1)
    vmem_limit = int(max(budget, 1.25 * footprint(TL)))

    # Weights reshaped once at trace time for the im2col contraction.
    w1r = blk["w1"].reshape(K * Cin, C2).astype(compute_dtype)
    b1 = blk["b1"].reshape(1, C2).astype(jnp.float32)
    w2r = blk["w2"].reshape(K * Cout, C2).astype(compute_dtype)
    b2 = blk["b2"].reshape(1, C2).astype(jnp.float32)

    inputs = [h]
    in_specs = [pl.BlockSpec((1, TL, Cin), lambda n, l: (n, l, 0))]
    if has_prev:
        r = TL // Hp              # Hp | TL by construction of the tiler
        inputs.append(h)          # same array; halo-only block of previous tile
        in_specs.append(pl.BlockSpec(
            (1, Hp, Cin),
            lambda n, l, r=r: (n, jnp.maximum(l * r - 1, 0), 0)))
    inputs += [w1r, b1, w2r, b2]
    in_specs += [
        pl.BlockSpec((K * Cin, C2), lambda n, l: (0, 0)),
        pl.BlockSpec((1, C2), lambda n, l: (0, 0)),
        pl.BlockSpec((K * Cout, C2), lambda n, l: (0, 0)),
        pl.BlockSpec((1, C2), lambda n, l: (0, 0)),
    ]
    if has_down:
        inputs += [blk["wdown"].astype(compute_dtype),
                   blk["bdown"].reshape(1, Cout).astype(jnp.float32)]
        in_specs += [pl.BlockSpec((Cin, Cout), lambda n, l: (0, 0)),
                     pl.BlockSpec((1, Cout), lambda n, l: (0, 0))]

    io_aliases = {}
    if has_skip_in:
        skip_idx = len(inputs)
        inputs.append(skip)
        in_specs.append(pl.BlockSpec((1, TL, Cout), lambda n, l: (n, l, 0)))
        if not last:
            io_aliases = {skip_idx: 1}      # skip accumulates in place (f32)

    o_spec = pl.BlockSpec((1, TL, Cout), lambda n, l: (n, l, 0))
    if last:
        out_shape = jax.ShapeDtypeStruct((N, L, Cout), jnp.float32)
        out_specs = o_spec
    elif use_skip:
        out_shape = (jax.ShapeDtypeStruct((N, L, Cout), compute_dtype),
                     jax.ShapeDtypeStruct((N, L, Cout), jnp.float32))
        out_specs = (o_spec, o_spec)
    else:
        out_shape = jax.ShapeDtypeStruct((N, L, Cout), compute_dtype)
        out_specs = o_spec

    # Advisory cost estimate so XLA schedules the boundary transposes sensibly.
    flops = 2 * N * L * (K * Cin * C2 + K * Cout * C2
                         + (Cin * Cout if has_down else 0))
    transc = 4 * N * L * Cout
    bytes_rw = N * L * Cin * cd + N * nl * Hp * Cin * cd
    bytes_rw += (K * Cin + K * Cout) * C2 * cd + (2 * C2 + Cout) * 4
    if has_down:
        bytes_rw += Cin * Cout * cd
    if has_skip_in:
        bytes_rw += N * L * Cout * 4
    if last:
        bytes_rw += N * L * Cout * 4
    else:
        bytes_rw += N * L * Cout * cd + (N * L * Cout * 4 if use_skip else 0)
    cost = pl.CostEstimate(flops=int(flops), transcendentals=int(transc),
                           bytes_accessed=int(bytes_rw))

    kern = functools.partial(
        _tcn_block_kernel, K=K, dilation=dilation, TL=TL, H1=H1, Hp=Hp,
        Cout=Cout, has_prev=has_prev, has_down=has_down,
        has_skip_in=has_skip_in, first=first, last=last, use_skip=use_skip)

    return pl.pallas_call(
        kern,
        grid=(N, nl),
        in_specs=in_specs,
        out_specs=out_specs,
        out_shape=out_shape,
        scratch_shapes=[pltpu.VMEM((TL + Hp, Cin), compute_dtype)],
        input_output_aliases=io_aliases,
        cost_estimate=cost,
        compiler_params=pltpu.CompilerParams(
            dimension_semantics=("parallel", "parallel"),
            vmem_limit_bytes=vmem_limit),
    )(*inputs)


# ---------------------------------------------------------------------------
# SharedTCN: parameter init + forward
# ---------------------------------------------------------------------------

def init_shared_tcn_params(key, num_inputs, num_channels, kernel_size):
    """Deterministic synthetic parameters (shapes follow the TCN __init__)."""
    # TODO(synk): weight_norm reparameterization and xavier_uniform init are
    # replaced by plain deterministic normal weights (tensor shapes preserved).
    blocks = []
    c_in = num_inputs
    for c_out in num_channels:
        key, k1, k2, k3, k4, k5, k6 = jax.random.split(key, 7)
        blk = {
            "w1": 0.1 * jax.random.normal(k1, (kernel_size, c_in, 2 * c_out), jnp.float32),
            "b1": 0.01 * jax.random.normal(k2, (2 * c_out,), jnp.float32),
            "w2": 0.1 * jax.random.normal(k3, (kernel_size, c_out, 2 * c_out), jnp.float32),
            "b2": 0.01 * jax.random.normal(k4, (2 * c_out,), jnp.float32),
        }
        if c_in != c_out:
            blk["wdown"] = 0.1 * jax.random.normal(k5, (c_in, c_out), jnp.float32)
            blk["bdown"] = 0.01 * jax.random.normal(k6, (c_out,), jnp.float32)
        else:
            blk["wdown"] = None
            blk["bdown"] = None
        blocks.append(blk)
        c_in = c_out
    return {"blocks": blocks}


def shared_tcn_forward(x_ncl, params, *, kernel_size, use_skip_connections=True,
                       compute_dtype=jnp.bfloat16, l_tile_cap=None):
    """SharedTCN forward: x (N, C_in, L) -> (N, C_out, L).

    Residual block i (dilation 2**i):
        h1   = gate(dilated_causal_conv(h,  w1, b1))
        h2   = gate(dilated_causal_conv(h1, w2, b2))     # dropout = identity
        res  = 1x1_conv(h) if channel mismatch else h
        h    = relu(h2 + res)
        skip = skip + h2      (accumulated in f32)
    Output = relu(skip) if use_skip_connections else h  (back in NCL layout).
    """
    # Boundary layout change only; every block's compute runs inside a single
    # fused Pallas kernel.
    h = jnp.transpose(x_ncl, (0, 2, 1)).astype(compute_dtype)
    n_blocks = len(params["blocks"])
    skip = None
    out = None
    for i, blk in enumerate(params["blocks"]):
        first = i == 0
        last = i == n_blocks - 1
        res = _tcn_block(h, blk, skip, dilation=2 ** i, K=kernel_size,
                         first=first, last=last, use_skip=use_skip_connections,
                         compute_dtype=compute_dtype, l_tile_cap=l_tile_cap)
        if last:
            out = res
        elif use_skip_connections:
            h, skip = res
        else:
            h = res
    # TODO(synk): the final NLC->NCL transpose stays as XLA glue; folding it
    # into the last kernel requires a lane-dense (TL % 128 == 0) output tile.
    return jnp.transpose(out, (0, 2, 1))


# ---------------------------------------------------------------------------
# Pure-JAX reference (for the in-script f32 correctness check)
# ---------------------------------------------------------------------------

def _reference_forward(x_ncl, params, *, kernel_size, use_skip_connections=True):
    h = jnp.transpose(x_ncl, (0, 2, 1)).astype(jnp.float32)
    K = kernel_size
    skips = []
    for i, blk in enumerate(params["blocks"]):
        d = 2 ** i
        pad = (K - 1) * d

        def gated_conv(z, w, b):
            zp = jnp.pad(z, ((0, 0), (pad, 0), (0, 0)))
            acc = b.reshape(1, 1, -1)
            for k in range(K):
                acc = acc + jnp.einsum("nlc,co->nlo",
                                       zp[:, k * d:k * d + z.shape[1], :], w[k])
            c = w.shape[-1] // 2
            return jnp.tanh(acc[..., :c]) * jax.nn.sigmoid(acc[..., c:])

        h1 = gated_conv(h, blk["w1"], blk["b1"])
        h2 = gated_conv(h1, blk["w2"], blk["b2"])
        if blk["wdown"] is not None:
            res = jnp.einsum("nlc,co->nlo", h, blk["wdown"]) + blk["bdown"]
        else:
            res = h
        h = jnp.maximum(h2 + res, 0.0)
        skips.append(h2)
    out = jnp.maximum(sum(skips), 0.0) if use_skip_connections else h
    return jnp.transpose(out, (0, 2, 1))


# ---------------------------------------------------------------------------
# Demo
# ---------------------------------------------------------------------------

if __name__ == "__main__":
    tcn_params = {
        "num_inputs": 4,
        "num_channels": [8, 8, 8],
        "kernel_size": 3,
        "dropout": 0.0,                 # eval mode -> identity
        "causal": True,
        "use_norm": "weight_norm",
        "activation": "relu",
        "kernel_initializer": "xavier_uniform",
        "use_skip_connections": True,
    }

    key = jax.random.PRNGKey(0)
    kp, kx = jax.random.split(key)
    params = init_shared_tcn_params(
        kp, tcn_params["num_inputs"], tcn_params["num_channels"],
        tcn_params["kernel_size"])

    N, C_in, L = 2, tcn_params["num_inputs"], 32
    x = jax.random.normal(kx, (N, C_in, L), jnp.float32)   # PyTorch NCL layout

    # l_tile_cap=16 forces >= 2 L-tiles even at this tiny demo size so the
    # halo-only cross-tile fetch and in-place skip-accumulation paths are
    # exercised.
    common = dict(kernel_size=tcn_params["kernel_size"],
                  use_skip_connections=tcn_params["use_skip_connections"],
                  l_tile_cap=16)

    # Exact-precision path checked against a pure-JAX reference.
    fwd_f32 = jax.jit(functools.partial(
        shared_tcn_forward, compute_dtype=jnp.float32, **common))
    y_f32 = jax.block_until_ready(fwd_f32(x, params))
    ref_fn = jax.jit(functools.partial(
        _reference_forward,
        kernel_size=tcn_params["kernel_size"],
        use_skip_connections=tcn_params["use_skip_connections"]))
    y_ref = jax.block_until_ready(ref_fn(x, params))
    assert y_f32.shape == (N, tcn_params["num_channels"][-1], L), y_f32.shape
    err = float(jnp.max(jnp.abs(y_f32 - y_ref)))
    assert err < 2e-3, f"mismatch vs reference: max abs err = {err}"

    # Default path: bf16 dot operands / bf16 inter-block activations, f32 skip.
    fwd = jax.jit(functools.partial(shared_tcn_forward, **common))
    y = jax.block_until_ready(fwd(x, params))
    assert y.shape == (N, tcn_params["num_channels"][-1], L), y.shape
    assert bool(jnp.isfinite(y).all())
    print("KERNEL_OK")
</pallas_src>

<mosaic_0001>
module attributes {stable_mosaic.version = 11 : i64} {
  func.func @_tcn_block_kernel(%arg0: i32, %arg1: i32, %arg2: memref<1x16x8xf32, #tpu.memory_space<vmem>>, %arg3: memref<1x8x8xf32, #tpu.memory_space<vmem>>, %arg4: memref<24x16xf32, #tpu.memory_space<vmem>>, %arg5: memref<1x16xf32, #tpu.memory_space<vmem>>, %arg6: memref<24x16xf32, #tpu.memory_space<vmem>>, %arg7: memref<1x16xf32, #tpu.memory_space<vmem>>, %arg8: memref<1x16x8xf32, #tpu.memory_space<vmem>>, %arg9: memref<1x16x8xf32, #tpu.memory_space<vmem>>, %arg10: memref<1x16x8xf32, #tpu.memory_space<vmem>>, %arg11: memref<24x8xf32, #tpu.memory_space<vmem>>) attributes {dimension_semantics = [#tpu.dimension_semantics<parallel>, #tpu.dimension_semantics<parallel>], iteration_bounds = array<i64: 2, 2>, scalar_prefetch = 0 : i64, scratch_operands = 1 : i64, tpu.core_type = #tpu.core_type<tc>, window_params = [{transform_indices = @transform_0, window_bounds = array<i64: 1, 16, 8>}, {transform_indices = @transform_1, window_bounds = array<i64: 1, 8, 8>}, {pipeline_mode = #tpu.pipeline_mode<synchronous>, transform_indices = @transform_2, window_bounds = array<i64: 24, 16>}, {pipeline_mode = #tpu.pipeline_mode<synchronous>, transform_indices = @transform_3, window_bounds = array<i64: 1, 16>}, {pipeline_mode = #tpu.pipeline_mode<synchronous>, transform_indices = @transform_4, window_bounds = array<i64: 24, 16>}, {pipeline_mode = #tpu.pipeline_mode<synchronous>, transform_indices = @transform_5, window_bounds = array<i64: 1, 16>}, {transform_indices = @transform_6, window_bounds = array<i64: 1, 16, 8>}, {transform_indices = @transform_7, window_bounds = array<i64: 1, 16, 8>}, {transform_indices = @transform_8, window_bounds = array<i64: 1, 16, 8>}]} {
    %c0 = arith.constant 0 : index
    %c0_0 = arith.constant 0 : index
    %c0_1 = arith.constant 0 : index
    %0 = vector.load %arg2[%c0, %c0_0, %c0_1] : memref<1x16x8xf32, #tpu.memory_space<vmem>>, vector<1x16x8xf32>
    %1 = vector.shape_cast %0 : vector<1x16x8xf32> to vector<16x8xf32>
    %c8 = arith.constant 8 : index
    %c0_2 = arith.constant 0 : index
    %2 = vector.load %arg11[%c8, %c0_2] : memref<24x8xf32, #tpu.memory_space<vmem>>, vector<16x8xf32>
    tpu.vector_store %arg11[%c8, %c0_2], %1 {strides = array<i32>} : memref<24x8xf32, #tpu.memory_space<vmem>>, vector<16x8xf32>,
    %c0_3 = arith.constant 0 : index
    %c0_4 = arith.constant 0 : index
    %c0_5 = arith.constant 0 : index
    %3 = vector.load %arg3[%c0_3, %c0_4, %c0_5] : memref<1x8x8xf32, #tpu.memory_space<vmem>>, vector<1x8x8xf32>
    %4 = vector.shape_cast %3 : vector<1x8x8xf32> to vector<8x8xf32>
    %c0_i32 = arith.constant 0 : i32
    %5 = arith.cmpi sgt, %arg1, %c0_i32 : i32
    %cst = arith.constant 0.000000e+00 : f32
    %6 = vector.broadcast %cst : f32 to vector<8x8xf32>
    %7 = arith.select %5, %4, %6 : vector<8x8xf32>
    %c0_6 = arith.constant 0 : index
    %c0_7 = arith.constant 0 : index
    %8 = vector.load %arg11[%c0_6, %c0_7] : memref<24x8xf32, #tpu.memory_space<vmem>>, vector<8x8xf32>
    tpu.vector_store %arg11[%c0_6, %c0_7], %7 {strides = array<i32>} : memref<24x8xf32, #tpu.memory_space<vmem>>, vector<8x8xf32>,
    %c0_8 = arith.constant 0 : index
    %c0_9 = arith.constant 0 : index
    %9 = vector.load %arg11[%c0_8, %c0_9] : memref<24x8xf32, #tpu.memory_space<vmem>>, vector<20x8xf32>
    %c2 = arith.constant 2 : index
    %c0_10 = arith.constant 0 : index
    %10 = vector.load %arg11[%c2, %c0_10] : memref<24x8xf32, #tpu.memory_space<vmem>>, vector<20x8xf32>
    %c4 = arith.constant 4 : index
    %c0_11 = arith.constant 0 : index
    %11 = vector.load %arg11[%c4, %c0_11] : memref<24x8xf32, #tpu.memory_space<vmem>>, vector<20x8xf32>
    %12 = tpu.concatenate %9, %10, %11 in 1 : vector<20x8xf32>, vector<20x8xf32>, vector<20x8xf32> -> vector<20x24xf32>
    %c0_12 = arith.constant 0 : index
    %c0_13 = arith.constant 0 : index
    %13 = vector.load %arg4[%c0_12, %c0_13] : memref<24x16xf32, #tpu.memory_space<vmem>>, vector<24x16xf32>
    %cst_14 = arith.constant dense<0.000000e+00> : vector<20x16xf32>
    %14 = tpu.matmul %12, %13, %cst_14 {dimension_numbers = #tpu.dot_dimension_numbers<[1], [0], [0], [1], [0, 0, 1, 1], [], []>} : vector<20x24xf32>, vector<24x16xf32>, vector<20x16xf32> -> vector<20x16xf32>
    %c0_15 = arith.constant 0 : index
    %c0_16 = arith.constant 0 : index
    %15 = vector.load %arg5[%c0_15, %c0_16] : memref<1x16xf32, #tpu.memory_space<vmem>>, vector<1x16xf32>
    %16 = vector.broadcast %15 : vector<1x16xf32> to vector<20x16xf32>
    %17 = arith.addf %14, %16 : vector<20x16xf32>
    %18 = vector.extract_strided_slice %17 {offsets = [0, 0], sizes = [20, 8], strides = [1, 1]} : vector<20x16xf32> to vector<20x8xf32>
    %19 = vector.extract_strided_slice %17 {offsets = [0, 8], sizes = [20, 8], strides = [1, 1]} : vector<20x16xf32> to vector<20x8xf32>
    %20 = math.tanh %18 : vector<20x8xf32>
    %cst_17 = arith.constant 5.000000e-01 : f32
    %21 = vector.broadcast %cst_17 : f32 to vector<20x8xf32>
    %22 = arith.mulf %21, %19 : vector<20x8xf32>
    %23 = math.tanh %22 : vector<20x8xf32>
    %cst_18 = arith.constant 5.000000e-01 : f32
    %24 = vector.broadcast %cst_18 : f32 to vector<20x8xf32>
    %25 = arith.mulf %24, %23 : vector<20x8xf32>
    %cst_19 = arith.constant 5.000000e-01 : f32
    %26 = vector.broadcast %cst_19 : f32 to vector<20x8xf32>
    %27 = arith.addf %25, %26 : vector<20x8xf32>
    %28 = arith.mulf %20, %27 : vector<20x8xf32>
    %29 = tpu.iota {dimensions = array<i32: 0>} : vector<20x1xi32>
    %c0_i32_20 = arith.constant 0 : i32
    %30 = arith.cmpi eq, %arg1, %c0_i32_20 : i32
    %c4_i32 = arith.constant 4 : i32
    %31 = vector.broadcast %c4_i32 : i32 to vector<20x1xi32>
    %32 = arith.cmpi slt, %29, %31 : vector<20x1xi32>
    %33 = vector.broadcast %30 : i1 to vector<20x1xi1>
    %34 = arith.andi %33, %32 : vector<20x1xi1>
    %cst_21 = arith.constant 0.000000e+00 : f32
    %35 = vector.shape_cast %34 : vector<20x1xi1> to vector<20x1xi1>
    %36 = vector.broadcast %35 : vector<20x1xi1> to vector<20x8xi1>
    %37 = vector.broadcast %cst_21 : f32 to vector<20x8xf32>
    %38 = arith.select %36, %37, %28 : vector<20x8xi1>, vector<20x8xf32>
    %39 = vector.extract_strided_slice %38 {offsets = [0, 0], sizes = [16, 8], strides = [1, 1]} : vector<20x8xf32> to vector<16x8xf32>
    %40 = vector.extract_strided_slice %38 {offsets = [2, 0], sizes = [16, 8], strides = [1, 1]} : vector<20x8xf32> to vector<16x8xf32>
    %41 = vector.extract_strided_slice %38 {offsets = [4, 0], sizes = [16, 8], strides = [1, 1]} : vector<20x8xf32> to vector<16x8xf32>
    %42 = tpu.concatenate %39, %40, %41 in 1 : vector<16x8xf32>, vector<16x8xf32>, vector<16x8xf32> -> vector<16x24xf32>
    %c0_22 = arith.constant 0 : index
    %c0_23 = arith.constant 0 : index
    %43 = vector.load %arg6[%c0_22, %c0_23] : memref<24x16xf32, #tpu.memory_space<vmem>>, vector<24x16xf32>
    %cst_24 = arith.constant dense<0.000000e+00> : vector<16x16xf32>
    %44 = tpu.matmul %42, %43, %cst_24 {dimension_numbers = #tpu.dot_dimension_numbers<[1], [0], [0], [1], [0, 0, 1, 1], [], []>} : vector<16x24xf32>, vector<24x16xf32>, vector<16x16xf32> -> vector<16x16xf32>
    %c0_25 = arith.constant 0 : index
    %c0_26 = arith.constant 0 : index
    %45 = vector.load %arg7[%c0_25, %c0_26] : memref<1x16xf32, #tpu.memory_space<vmem>>, vector<1x16xf32>
    %46 = vector.broadcast %45 : vector<1x16xf32> to vector<16x16xf32>
    %47 = arith.addf %44, %46 : vector<16x16xf32>
    %48 = vector.extract_strided_slice %47 {offsets = [0, 0], sizes = [16, 8], strides = [1, 1]} : vector<16x16xf32> to vector<16x8xf32>
    %49 = vector.extract_strided_slice %47 {offsets = [0, 8], sizes = [16, 8], strides = [1, 1]} : vector<16x16xf32> to vector<16x8xf32>
    %50 = math.tanh %48 : vector<16x8xf32>
    %cst_27 = arith.constant 5.000000e-01 : f32
    %51 = vector.broadcast %cst_27 : f32 to vector<16x8xf32>
    %52 = arith.mulf %51, %49 : vector<16x8xf32>
    %53 = math.tanh %52 : vector<16x8xf32>
    %cst_28 = arith.constant 5.000000e-01 : f32
    %54 = vector.broadcast %cst_28 : f32 to vector<16x8xf32>
    %55 = arith.mulf %54, %53 : vector<16x8xf32>
    %cst_29 = arith.constant 5.000000e-01 : f32
    %56 = vector.broadcast %cst_29 : f32 to vector<16x8xf32>
    %57 = arith.addf %55, %56 : vector<16x8xf32>
    %58 = arith.mulf %50, %57 : vector<16x8xf32>
    %59 = arith.addf %58, %1 : vector<16x8xf32>
    %cst_30 = arith.constant 0.000000e+00 : f32
    %60 = vector.broadcast %cst_30 : f32 to vector<16x8xf32>
    %61 = arith.maximumf %59, %60 : vector<16x8xf32>
    %c0_31 = arith.constant 0 : index
    %c0_32 = arith.constant 0 : index
    %c0_33 = arith.constant 0 : index
    %62 = vector.load %arg8[%c0_31, %c0_32, %c0_33] : memref<1x16x8xf32, #tpu.memory_space<vmem>>, vector<1x16x8xf32>
    %63 = vector.shape_cast %62 : vector<1x16x8xf32> to vector<16x8xf32>
    %64 = arith.addf %63, %58 : vector<16x8xf32>
    %c0_34 = arith.constant 0 : index
    %c0_35 = arith.constant 0 : index
    %c0_36 = arith.constant 0 : index
    %65 = vector.load %arg9[%c0_34, %c0_35, %c0_36] : memref<1x16x8xf32, #tpu.memory_space<vmem>>, vector<1x16x8xf32>
    %66 = vector.shape_cast %65 : vector<1x16x8xf32> to vector<16x8xf32>
    %67 = vector.shape_cast %61 : vector<16x8xf32> to vector<1x16x8xf32>
    tpu.vector_store %arg9[%c0_34, %c0_35, %c0_36], %67 {strides = array<i32>} : memref<1x16x8xf32, #tpu.memory_space<vmem>>, vector<1x16x8xf32>,
    %c0_37 = arith.constant 0 : index
    %c0_38 = arith.constant 0 : index
    %c0_39 = arith.constant 0 : index
    %68 = vector.load %arg10[%c0_37, %c0_38, %c0_39] : memref<1x16x8xf32, #tpu.memory_space<vmem>>, vector<1x16x8xf32>
    %69 = vector.shape_cast %68 : vector<1x16x8xf32> to vector<16x8xf32>
    %70 = vector.shape_cast %64 : vector<16x8xf32> to vector<1x16x8xf32>
    tpu.vector_store %arg10[%c0_37, %c0_38, %c0_39], %70 {strides = array<i32>} : memref<1x16x8xf32, #tpu.memory_space<vmem>>, vector<1x16x8xf32>,
    return
  }
  func.func @transform_0(%arg0: i32, %arg1: i32) -> (i32, i32, i32) {
    %c0_i32 = arith.constant 0 : i32
    %c0_i32_0 = arith.constant 0 : i32
    return %arg0, %arg1, %c0_i32 : i32, i32, i32
  }
  func.func @transform_1(%arg0: i32, %arg1: i32) -> (i32, i32, i32) {
    %c2_i32 = arith.constant 2 : i32
    %0 = arith.muli %arg1, %c2_i32 : i32
    %c1_i32 = arith.constant 1 : i32
    %1 = arith.subi %0, %c1_i32 : i32
    %c0_i32 = arith.constant 0 : i32
    %2 = arith.maxsi %1, %c0_i32 : i32
    %c0_i32_0 = arith.constant 0 : i32
    %c0_i32_1 = arith.constant 0 : i32
    return %arg0, %2, %c0_i32_0 : i32, i32, i32
  }
  func.func @transform_2(%arg0: i32, %arg1: i32) -> (i32, i32) {
    %c0_i32 = arith.constant 0 : i32
    %c0_i32_0 = arith.constant 0 : i32
    %c0_i32_1 = arith.constant 0 : i32
    return %c0_i32, %c0_i32_0 : i32, i32
  }
  func.func @transform_3(%arg0: i32, %arg1: i32) -> (i32, i32) {
    %c0_i32 = arith.constant 0 : i32
    %c0_i32_0 = arith.constant 0 : i32
    %c0_i32_1 = arith.constant 0 : i32
    return %c0_i32, %c0_i32_0 : i32, i32
  }
  func.func @transform_4(%arg0: i32, %arg1: i32) -> (i32, i32) {
    %c0_i32 = arith.constant 0 : i32
    %c0_i32_0 = arith.constant 0 : i32
    %c0_i32_1 = arith.constant 0 : i32
    return %c0_i32, %c0_i32_0 : i32, i32
  }
  func.func @transform_5(%arg0: i32, %arg1: i32) -> (i32, i32) {
    %c0_i32 = arith.constant 0 : i32
    %c0_i32_0 = arith.constant 0 : i32
    %c0_i32_1 = arith.constant 0 : i32
    return %c0_i32, %c0_i32_0 : i32, i32
  }
  func.func @transform_6(%arg0: i32, %arg1: i32) -> (i32, i32, i32) {
    %c0_i32 = arith.constant 0 : i32
    %c0_i32_0 = arith.constant 0 : i32
    return %arg0, %arg1, %c0_i32 : i32, i32, i32
  }
  func.func @transform_7(%arg0: i32, %arg1: i32) -> (i32, i32, i32) {
    %c0_i32 = arith.constant 0 : i32
    %c0_i32_0 = arith.constant 0 : i32
    return %arg0, %arg1, %c0_i32 : i32, i32, i32
  }
  func.func @transform_8(%arg0: i32, %arg1: i32) -> (i32, i32, i32) {
    %c0_i32 = arith.constant 0 : i32
    %c0_i32_0 = arith.constant 0 : i32
    return %arg0, %arg1, %c0_i32 : i32, i32, i32
  }
}

module attributes {stable_mosaic.version = 11 : i64} {
  func.func @_tcn_block_kernel(%arg0: i32, %arg1: i32, %arg2: memref<1x16x4xf32, #tpu.memory_space<vmem>>, %arg3: memref<1x8x4xf32, #tpu.memory_space<vmem>>, %arg4: memref<12x16xf32, #tpu.memory_space<vmem>>, %arg5: memref<1x16xf32, #tpu.memory_space<vmem>>, %arg6: memref<24x16xf32, #tpu.memory_space<vmem>>, %arg7: memref<1x16xf32, #tpu.memory_space<vmem>>, %arg8: memref<4x8xf32, #tpu.memory_space<vmem>>, %arg9: memref<1x8xf32, #tpu.memory_space<vmem>>, %arg10: memref<1x16x8xf32, #tpu.memory_space<vmem>>, %arg11: memref<1x16x8xf32, #tpu.memory_space<vmem>>, %arg12: memref<24x4xf32, #tpu.memory_space<vmem>>) attributes {dimension_semantics = [#tpu.dimension_semantics<parallel>, #tpu.dimension_semantics<parallel>], iteration_bounds = array<i64: 2, 2>, scalar_prefetch = 0 : i64, scratch_operands = 1 : i64, tpu.core_type = #tpu.core_type<tc>, window_params = [{transform_indices = @transform_0, window_bounds = array<i64: 1, 16, 4>}, {transform_indices = @transform_1, window_bounds = array<i64: 1, 8, 4>}, {pipeline_mode = #tpu.pipeline_mode<synchronous>, transform_indices = @transform_2, window_bounds = array<i64: 12, 16>}, {pipeline_mode = #tpu.pipeline_mode<synchronous>, transform_indices = @transform_3, window_bounds = array<i64: 1, 16>}, {pipeline_mode = #tpu.pipeline_mode<synchronous>, transform_indices = @transform_4, window_bounds = array<i64: 24, 16>}, {pipeline_mode = #tpu.pipeline_mode<synchronous>, transform_indices = @transform_5, window_bounds = array<i64: 1, 16>}, {pipeline_mode = #tpu.pipeline_mode<synchronous>, transform_indices = @transform_6, window_bounds = array<i64: 4, 8>}, {pipeline_mode = #tpu.pipeline_mode<synchronous>, transform_indices = @transform_7, window_bounds = array<i64: 1, 8>}, {transform_indices = @transform_8, window_bounds = array<i64: 1, 16, 8>}, {transform_indices = @transform_9, window_bounds = array<i64: 1, 16, 8>}]} {
    %c0 = arith.constant 0 : index
    %c0_0 = arith.constant 0 : index
    %c0_1 = arith.constant 0 : index
    %0 = vector.load %arg2[%c0, %c0_0, %c0_1] : memref<1x16x4xf32, #tpu.memory_space<vmem>>, vector<1x16x4xf32>
    %1 = vector.shape_cast %0 : vector<1x16x4xf32> to vector<16x4xf32>
    %c8 = arith.constant 8 : index
    %c0_2 = arith.constant 0 : index
    %2 = vector.load %arg12[%c8, %c0_2] : memref<24x4xf32, #tpu.memory_space<vmem>>, vector<16x4xf32>
    tpu.vector_store %arg12[%c8, %c0_2], %1 {strides = array<i32>} : memref<24x4xf32, #tpu.memory_space<vmem>>, vector<16x4xf32>,
    %c0_3 = arith.constant 0 : index
    %c0_4 = arith.constant 0 : index
    %c0_5 = arith.constant 0 : index
    %3 = vector.load %arg3[%c0_3, %c0_4, %c0_5] : memref<1x8x4xf32, #tpu.memory_space<vmem>>, vector<1x8x4xf32>
    %4 = vector.shape_cast %3 : vector<1x8x4xf32> to vector<8x4xf32>
    %c0_i32 = arith.constant 0 : i32
    %5 = arith.cmpi sgt, %arg1, %c0_i32 : i32
    %cst = arith.constant 0.000000e+00 : f32
    %6 = vector.broadcast %cst : f32 to vector<8x4xf32>
    %7 = arith.select %5, %4, %6 : vector<8x4xf32>
    %c0_6 = arith.constant 0 : index
    %c0_7 = arith.constant 0 : index
    %8 = vector.load %arg12[%c0_6, %c0_7] : memref<24x4xf32, #tpu.memory_space<vmem>>, vector<8x4xf32>
    tpu.vector_store %arg12[%c0_6, %c0_7], %7 {strides = array<i32>} : memref<24x4xf32, #tpu.memory_space<vmem>>, vector<8x4xf32>,
    %c4 = arith.constant 4 : index
    %c0_8 = arith.constant 0 : index
    %9 = vector.load %arg12[%c4, %c0_8] : memref<24x4xf32, #tpu.memory_space<vmem>>, vector<18x4xf32>
    %c5 = arith.constant 5 : index
    %c0_9 = arith.constant 0 : index
    %10 = vector.load %arg12[%c5, %c0_9] : memref<24x4xf32, #tpu.memory_space<vmem>>, vector<18x4xf32>
    %c6 = arith.constant 6 : index
    %c0_10 = arith.constant 0 : index
    %11 = vector.load %arg12[%c6, %c0_10] : memref<24x4xf32, #tpu.memory_space<vmem>>, vector<18x4xf32>
    %12 = tpu.concatenate %9, %10, %11 in 1 : vector<18x4xf32>, vector<18x4xf32>, vector<18x4xf32> -> vector<18x12xf32>
    %c0_11 = arith.constant 0 : index
    %c0_12 = arith.constant 0 : index
    %13 = vector.load %arg4[%c0_11, %c0_12] : memref<12x16xf32, #tpu.memory_space<vmem>>, vector<12x16xf32>
    %cst_13 = arith.constant dense<0.000000e+00> : vector<18x16xf32>
    %14 = tpu.matmul %12, %13, %cst_13 {dimension_numbers = #tpu.dot_dimension_numbers<[1], [0], [0], [1], [0, 0, 1, 1], [], []>} : vector<18x12xf32>, vector<12x16xf32>, vector<18x16xf32> -> vector<18x16xf32>
    %c0_14 = arith.constant 0 : index
    %c0_15 = arith.constant 0 : index
    %15 = vector.load %arg5[%c0_14, %c0_15] : memref<1x16xf32, #tpu.memory_space<vmem>>, vector<1x16xf32>
    %16 = vector.broadcast %15 : vector<1x16xf32> to vector<18x16xf32>
    %17 = arith.addf %14, %16 : vector<18x16xf32>
    %18 = vector.extract_strided_slice %17 {offsets = [0, 0], sizes = [18, 8], strides = [1, 1]} : vector<18x16xf32> to vector<18x8xf32>
    %19 = vector.extract_strided_slice %17 {offsets = [0, 8], sizes = [18, 8], strides = [1, 1]} : vector<18x16xf32> to vector<18x8xf32>
    %20 = math.tanh %18 : vector<18x8xf32>
    %cst_16 = arith.constant 5.000000e-01 : f32
    %21 = vector.broadcast %cst_16 : f32 to vector<18x8xf32>
    %22 = arith.mulf %21, %19 : vector<18x8xf32>
    %23 = math.tanh %22 : vector<18x8xf32>
    %cst_17 = arith.constant 5.000000e-01 : f32
    %24 = vector.broadcast %cst_17 : f32 to vector<18x8xf32>
    %25 = arith.mulf %24, %23 : vector<18x8xf32>
    %cst_18 = arith.constant 5.000000e-01 : f32
    %26 = vector.broadcast %cst_18 : f32 to vector<18x8xf32>
    %27 = arith.addf %25, %26 : vector<18x8xf32>
    %28 = arith.mulf %20, %27 : vector<18x8xf32>
    %29 = tpu.iota {dimensions = array<i32: 0>} : vector<18x1xi32>
    %c0_i32_19 = arith.constant 0 : i32
    %30 = arith.cmpi eq, %arg1, %c0_i32_19 : i32
    %c2_i32 = arith.constant 2 : i32
    %31 = vector.broadcast %c2_i32 : i32 to vector<18x1xi32>
    %32 = arith.cmpi slt, %29, %31 : vector<18x1xi32>
    %33 = vector.broadcast %30 : i1 to vector<18x1xi1>
    %34 = arith.andi %33, %32 : vector<18x1xi1>
    %cst_20 = arith.constant 0.000000e+00 : f32
    %35 = vector.shape_cast %34 : vector<18x1xi1> to vector<18x1xi1>
    %36 = vector.broadcast %35 : vector<18x1xi1> to vector<18x8xi1>
    %37 = vector.broadcast %cst_20 : f32 to vector<18x8xf32>
    %38 = arith.select %36, %37, %28 : vector<18x8xi1>, vector<18x8xf32>
    %39 = vector.extract_strided_slice %38 {offsets = [0, 0], sizes = [16, 8], strides = [1, 1]} : vector<18x8xf32> to vector<16x8xf32>
    %40 = vector.extract_strided_slice %38 {offsets = [1, 0], sizes = [16, 8], strides = [1, 1]} : vector<18x8xf32> to vector<16x8xf32>
    %41 = vector.extract_strided_slice %38 {offsets = [2, 0], sizes = [16, 8], strides = [1, 1]} : vector<18x8xf32> to vector<16x8xf32>
    %42 = tpu.concatenate %39, %40, %41 in 1 : vector<16x8xf32>, vector<16x8xf32>, vector<16x8xf32> -> vector<16x24xf32>
    %c0_21 = arith.constant 0 : index
    %c0_22 = arith.constant 0 : index
    %43 = vector.load %arg6[%c0_21, %c0_22] : memref<24x16xf32, #tpu.memory_space<vmem>>, vector<24x16xf32>
    %cst_23 = arith.constant dense<0.000000e+00> : vector<16x16xf32>
    %44 = tpu.matmul %42, %43, %cst_23 {dimension_numbers = #tpu.dot_dimension_numbers<[1], [0], [0], [1], [0, 0, 1, 1], [], []>} : vector<16x24xf32>, vector<24x16xf32>, vector<16x16xf32> -> vector<16x16xf32>
    %c0_24 = arith.constant 0 : index
    %c0_25 = arith.constant 0 : index
    %45 = vector.load %arg7[%c0_24, %c0_25] : memref<1x16xf32, #tpu.memory_space<vmem>>, vector<1x16xf32>
    %46 = vector.broadcast %45 : vector<1x16xf32> to vector<16x16xf32>
    %47 = arith.addf %44, %46 : vector<16x16xf32>
    %48 = vector.extract_strided_slice %47 {offsets = [0, 0], sizes = [16, 8], strides = [1, 1]} : vector<16x16xf32> to vector<16x8xf32>
    %49 = vector.extract_strided_slice %47 {offsets = [0, 8], sizes = [16, 8], strides = [1, 1]} : vector<16x16xf32> to vector<16x8xf32>
    %50 = math.tanh %48 : vector<16x8xf32>
    %cst_26 = arith.constant 5.000000e-01 : f32
    %51 = vector.broadcast %cst_26 : f32 to vector<16x8xf32>
    %52 = arith.mulf %51, %49 : vector<16x8xf32>
    %53 = math.tanh %52 : vector<16x8xf32>
    %cst_27 = arith.constant 5.000000e-01 : f32
    %54 = vector.broadcast %cst_27 : f32 to vector<16x8xf32>
    %55 = arith.mulf %54, %53 : vector<16x8xf32>
    %cst_28 = arith.constant 5.000000e-01 : f32
    %56 = vector.broadcast %cst_28 : f32 to vector<16x8xf32>
    %57 = arith.addf %55, %56 : vector<16x8xf32>
    %58 = arith.mulf %50, %57 : vector<16x8xf32>
    %c0_29 = arith.constant 0 : index
    %c0_30 = arith.constant 0 : index
    %59 = vector.load %arg8[%c0_29, %c0_30] : memref<4x8xf32, #tpu.memory_space<vmem>>, vector<4x8xf32>
    %cst_31 = arith.constant dense<0.000000e+00> : vector<16x8xf32>
    %60 = tpu.matmul %1, %59, %cst_31 {dimension_numbers = #tpu.dot_dimension_numbers<[1], [0], [0], [1], [0, 0, 1, 1], [], []>} : vector<16x4xf32>, vector<4x8xf32>, vector<16x8xf32> -> vector<16x8xf32>
    %c0_32 = arith.constant 0 : index
    %c0_33 = arith.constant 0 : index
    %61 = vector.load %arg9[%c0_32, %c0_33] : memref<1x8xf32, #tpu.memory_space<vmem>>, vector<1x8xf32>
    %62 = vector.broadcast %61 : vector<1x8xf32> to vector<16x8xf32>
    %63 = arith.addf %60, %62 : vector<16x8xf32>
    %64 = arith.addf %58, %63 : vector<16x8xf32>
    %cst_34 = arith.constant 0.000000e+00 : f32
    %65 = vector.broadcast %cst_34 : f32 to vector<16x8xf32>
    %66 = arith.maximumf %64, %65 : vector<16x8xf32>
    %c0_35 = arith.constant 0 : index
    %c0_36 = arith.constant 0 : index
    %c0_37 = arith.constant 0 : index
    %67 = vector.load %arg10[%c0_35, %c0_36, %c0_37] : memref<1x16x8xf32, #tpu.memory_space<vmem>>, vector<1x16x8xf32>
    %68 = vector.shape_cast %67 : vector<1x16x8xf32> to vector<16x8xf32>
    %69 = vector.shape_cast %66 : vector<16x8xf32> to vector<1x16x8xf32>
    tpu.vector_store %arg10[%c0_35, %c0_36, %c0_37], %69 {strides = array<i32>} : memref<1x16x8xf32, #tpu.memory_space<vmem>>, vector<1x16x8xf32>,
    %c0_38 = arith.constant 0 : index
    %c0_39 = arith.constant 0 : index
    %c0_40 = arith.constant 0 : index
    %70 = vector.load %arg11[%c0_38, %c0_39, %c0_40] : memref<1x16x8xf32, #tpu.memory_space<vmem>>, vector<1x16x8xf32>
    %71 = vector.shape_cast %70 : vector<1x16x8xf32> to vector<16x8xf32>
    %72 = vector.shape_cast %58 : vector<16x8xf32> to vector<1x16x8xf32>
    tpu.vector_store %arg11[%c0_38, %c0_39, %c0_40], %72 {strides = array<i32>} : memref<1x16x8xf32, #tpu.memory_space<vmem>>, vector<1x16x8xf32>,
    return
  }
  func.func @transform_0(%arg0: i32, %arg1: i32) -> (i32, i32, i32) {
    %c0_i32 = arith.constant 0 : i32
    %c0_i32_0 = arith.constant 0 : i32
    return %arg0, %arg1, %c0_i32 : i32, i32, i32
  }
  func.func @transform_1(%arg0: i32, %arg1: i32) -> (i32, i32, i32) {
    %c2_i32 = arith.constant 2 : i32
    %0 = arith.muli %arg1, %c2_i32 : i32
    %c1_i32 = arith.constant 1 : i32
    %1 = arith.subi %0, %c1_i32 : i32
    %c0_i32 = arith.constant 0 : i32
    %2 = arith.maxsi %1, %c0_i32 : i32
    %c0_i32_0 = arith.constant 0 : i32
    %c0_i32_1 = arith.constant 0 : i32
    return %arg0, %2, %c0_i32_0 : i32, i32, i32
  }
  func.func @transform_2(%arg0: i32, %arg1: i32) -> (i32, i32) {
    %c0_i32 = arith.constant 0 : i32
    %c0_i32_0 = arith.constant 0 : i32
    %c0_i32_1 = arith.constant 0 : i32
    return %c0_i32, %c0_i32_0 : i32, i32
  }
  func.func @transform_3(%arg0: i32, %arg1: i32) -> (i32, i32) {
    %c0_i32 = arith.constant 0 : i32
    %c0_i32_0 = arith.constant 0 : i32
    %c0_i32_1 = arith.constant 0 : i32
    return %c0_i32, %c0_i32_0 : i32, i32
  }
  func.func @transform_4(%arg0: i32, %arg1: i32) -> (i32, i32) {
    %c0_i32 = arith.constant 0 : i32
    %c0_i32_0 = arith.constant 0 : i32
    %c0_i32_1 = arith.constant 0 : i32
    return %c0_i32, %c0_i32_0 : i32, i32
  }
  func.func @transform_5(%arg0: i32, %arg1: i32) -> (i32, i32) {
    %c0_i32 = arith.constant 0 : i32
    %c0_i32_0 = arith.constant 0 : i32
    %c0_i32_1 = arith.constant 0 : i32
    return %c0_i32, %c0_i32_0 : i32, i32
  }
  func.func @transform_6(%arg0: i32, %arg1: i32) -> (i32, i32) {
    %c0_i32 = arith.constant 0 : i32
    %c0_i32_0 = arith.constant 0 : i32
    %c0_i32_1 = arith.constant 0 : i32
    return %c0_i32, %c0_i32_0 : i32, i32
  }
  func.func @transform_7(%arg0: i32, %arg1: i32) -> (i32, i32) {
    %c0_i32 = arith.constant 0 : i32
    %c0_i32_0 = arith.constant 0 : i32
    %c0_i32_1 = arith.constant 0 : i32
    return %c0_i32, %c0_i32_0 : i32, i32
  }
  func.func @transform_8(%arg0: i32, %arg1: i32) -> (i32, i32, i32) {
    %c0_i32 = arith.constant 0 : i32
    %c0_i32_0 = arith.constant 0 : i32
    return %arg0, %arg1, %c0_i32 : i32, i32, i32
  }
  func.func @transform_9(%arg0: i32, %arg1: i32) -> (i32, i32, i32) {
    %c0_i32 = arith.constant 0 : i32
    %c0_i32_0 = arith.constant 0 : i32
    return %arg0, %arg1, %c0_i32 : i32, i32, i32
  }
}

module attributes {stable_mosaic.version = 11 : i64} {
  func.func @_tcn_block_kernel(%arg0: i32, %arg1: i32, %arg2: memref<1x16x8xf32, #tpu.memory_space<vmem>>, %arg3: memref<1x16x8xf32, #tpu.memory_space<vmem>>, %arg4: memref<24x16xf32, #tpu.memory_space<vmem>>, %arg5: memref<1x16xf32, #tpu.memory_space<vmem>>, %arg6: memref<24x16xf32, #tpu.memory_space<vmem>>, %arg7: memref<1x16xf32, #tpu.memory_space<vmem>>, %arg8: memref<1x16x8xf32, #tpu.memory_space<vmem>>, %arg9: memref<1x16x8xf32, #tpu.memory_space<vmem>>, %arg10: memref<32x8xf32, #tpu.memory_space<vmem>>) attributes {dimension_semantics = [#tpu.dimension_semantics<parallel>, #tpu.dimension_semantics<parallel>], iteration_bounds = array<i64: 2, 2>, scalar_prefetch = 0 : i64, scratch_operands = 1 : i64, tpu.core_type = #tpu.core_type<tc>, window_params = [{transform_indices = @transform_0, window_bounds = array<i64: 1, 16, 8>}, {transform_indices = @transform_1, window_bounds = array<i64: 1, 16, 8>}, {pipeline_mode = #tpu.pipeline_mode<synchronous>, transform_indices = @transform_2, window_bounds = array<i64: 24, 16>}, {pipeline_mode = #tpu.pipeline_mode<synchronous>, transform_indices = @transform_3, window_bounds = array<i64: 1, 16>}, {pipeline_mode = #tpu.pipeline_mode<synchronous>, transform_indices = @transform_4, window_bounds = array<i64: 24, 16>}, {pipeline_mode = #tpu.pipeline_mode<synchronous>, transform_indices = @transform_5, window_bounds = array<i64: 1, 16>}, {transform_indices = @transform_6, window_bounds = array<i64: 1, 16, 8>}, {transform_indices = @transform_7, window_bounds = array<i64: 1, 16, 8>}]} {
    %c0 = arith.constant 0 : index
    %c0_0 = arith.constant 0 : index
    %c0_1 = arith.constant 0 : index
    %0 = vector.load %arg2[%c0, %c0_0, %c0_1] : memref<1x16x8xf32, #tpu.memory_space<vmem>>, vector<1x16x8xf32>
    %1 = vector.shape_cast %0 : vector<1x16x8xf32> to vector<16x8xf32>
    %c16 = arith.constant 16 : index
    %c0_2 = arith.constant 0 : index
    %2 = vector.load %arg10[%c16, %c0_2] : memref<32x8xf32, #tpu.memory_space<vmem>>, vector<16x8xf32>
    tpu.vector_store %arg10[%c16, %c0_2], %1 {strides = array<i32>} : memref<32x8xf32, #tpu.memory_space<vmem>>, vector<16x8xf32>,
    %c0_3 = arith.constant 0 : index
    %c0_4 = arith.constant 0 : index
    %c0_5 = arith.constant 0 : index
    %3 = vector.load %arg3[%c0_3, %c0_4, %c0_5] : memref<1x16x8xf32, #tpu.memory_space<vmem>>, vector<1x16x8xf32>
    %4 = vector.shape_cast %3 : vector<1x16x8xf32> to vector<16x8xf32>
    %c0_i32 = arith.constant 0 : i32
    %5 = arith.cmpi sgt, %arg1, %c0_i32 : i32
    %cst = arith.constant 0.000000e+00 : f32
    %6 = vector.broadcast %cst : f32 to vector<16x8xf32>
    %7 = arith.select %5, %4, %6 : vector<16x8xf32>
    %c0_6 = arith.constant 0 : index
    %c0_7 = arith.constant 0 : index
    %8 = vector.load %arg10[%c0_6, %c0_7] : memref<32x8xf32, #tpu.memory_space<vmem>>, vector<16x8xf32>
    tpu.vector_store %arg10[%c0_6, %c0_7], %7 {strides = array<i32>} : memref<32x8xf32, #tpu.memory_space<vmem>>, vector<16x8xf32>,
    %c0_8 = arith.constant 0 : index
    %c0_9 = arith.constant 0 : index
    %9 = vector.load %arg10[%c0_8, %c0_9] : memref<32x8xf32, #tpu.memory_space<vmem>>, vector<24x8xf32>
    %c4 = arith.constant 4 : index
    %c0_10 = arith.constant 0 : index
    %10 = vector.load %arg10[%c4, %c0_10] : memref<32x8xf32, #tpu.memory_space<vmem>>, vector<24x8xf32>
    %c8 = arith.constant 8 : index
    %c0_11 = arith.constant 0 : index
    %11 = vector.load %arg10[%c8, %c0_11] : memref<32x8xf32, #tpu.memory_space<vmem>>, vector<24x8xf32>
    %12 = tpu.concatenate %9, %10, %11 in 1 : vector<24x8xf32>, vector<24x8xf32>, vector<24x8xf32> -> vector<24x24xf32>
    %c0_12 = arith.constant 0 : index
    %c0_13 = arith.constant 0 : index
    %13 = vector.load %arg4[%c0_12, %c0_13] : memref<24x16xf32, #tpu.memory_space<vmem>>, vector<24x16xf32>
    %cst_14 = arith.constant dense<0.000000e+00> : vector<24x16xf32>
    %14 = tpu.matmul %12, %13, %cst_14 {dimension_numbers = #tpu.dot_dimension_numbers<[1], [0], [0], [1], [0, 0, 1, 1], [], []>} : vector<24x24xf32>, vector<24x16xf32>, vector<24x16xf32> -> vector<24x16xf32>
    %c0_15 = arith.constant 0 : index
    %c0_16 = arith.constant 0 : index
    %15 = vector.load %arg5[%c0_15, %c0_16] : memref<1x16xf32, #tpu.memory_space<vmem>>, vector<1x16xf32>
    %16 = vector.broadcast %15 : vector<1x16xf32> to vector<24x16xf32>
    %17 = arith.addf %14, %16 : vector<24x16xf32>
    %18 = vector.extract_strided_slice %17 {offsets = [0, 0], sizes = [24, 8], strides = [1, 1]} : vector<24x16xf32> to vector<24x8xf32>
    %19 = vector.extract_strided_slice %17 {offsets = [0, 8], sizes = [24, 8], strides = [1, 1]} : vector<24x16xf32> to vector<24x8xf32>
    %20 = math.tanh %18 : vector<24x8xf32>
    %cst_17 = arith.constant 5.000000e-01 : f32
    %21 = vector.broadcast %cst_17 : f32 to vector<24x8xf32>
    %22 = arith.mulf %21, %19 : vector<24x8xf32>
    %23 = math.tanh %22 : vector<24x8xf32>
    %cst_18 = arith.constant 5.000000e-01 : f32
    %24 = vector.broadcast %cst_18 : f32 to vector<24x8xf32>
    %25 = arith.mulf %24, %23 : vector<24x8xf32>
    %cst_19 = arith.constant 5.000000e-01 : f32
    %26 = vector.broadcast %cst_19 : f32 to vector<24x8xf32>
    %27 = arith.addf %25, %26 : vector<24x8xf32>
    %28 = arith.mulf %20, %27 : vector<24x8xf32>
    %29 = tpu.iota {dimensions = array<i32: 0>} : vector<24x1xi32>
    %c0_i32_20 = arith.constant 0 : i32
    %30 = arith.cmpi eq, %arg1, %c0_i32_20 : i32
    %c8_i32 = arith.constant 8 : i32
    %31 = vector.broadcast %c8_i32 : i32 to vector<24x1xi32>
    %32 = arith.cmpi slt, %29, %31 : vector<24x1xi32>
    %33 = vector.broadcast %30 : i1 to vector<24x1xi1>
    %34 = arith.andi %33, %32 : vector<24x1xi1>
    %cst_21 = arith.constant 0.000000e+00 : f32
    %35 = vector.shape_cast %34 : vector<24x1xi1> to vector<24x1xi1>
    %36 = vector.broadcast %35 : vector<24x1xi1> to vector<24x8xi1>
    %37 = vector.broadcast %cst_21 : f32 to vector<24x8xf32>
    %38 = arith.select %36, %37, %28 : vector<24x8xi1>, vector<24x8xf32>
    %39 = vector.extract_strided_slice %38 {offsets = [0, 0], sizes = [16, 8], strides = [1, 1]} : vector<24x8xf32> to vector<16x8xf32>
    %40 = vector.extract_strided_slice %38 {offsets = [4, 0], sizes = [16, 8], strides = [1, 1]} : vector<24x8xf32> to vector<16x8xf32>
    %41 = vector.extract_strided_slice %38 {offsets = [8, 0], sizes = [16, 8], strides = [1, 1]} : vector<24x8xf32> to vector<16x8xf32>
    %42 = tpu.concatenate %39, %40, %41 in 1 : vector<16x8xf32>, vector<16x8xf32>, vector<16x8xf32> -> vector<16x24xf32>
    %c0_22 = arith.constant 0 : index
    %c0_23 = arith.constant 0 : index
    %43 = vector.load %arg6[%c0_22, %c0_23] : memref<24x16xf32, #tpu.memory_space<vmem>>, vector<24x16xf32>
    %cst_24 = arith.constant dense<0.000000e+00> : vector<16x16xf32>
    %44 = tpu.matmul %42, %43, %cst_24 {dimension_numbers = #tpu.dot_dimension_numbers<[1], [0], [0], [1], [0, 0, 1, 1], [], []>} : vector<16x24xf32>, vector<24x16xf32>, vector<16x16xf32> -> vector<16x16xf32>
    %c0_25 = arith.constant 0 : index
    %c0_26 = arith.constant 0 : index
    %45 = vector.load %arg7[%c0_25, %c0_26] : memref<1x16xf32, #tpu.memory_space<vmem>>, vector<1x16xf32>
    %46 = vector.broadcast %45 : vector<1x16xf32> to vector<16x16xf32>
    %47 = arith.addf %44, %46 : vector<16x16xf32>
    %48 = vector.extract_strided_slice %47 {offsets = [0, 0], sizes = [16, 8], strides = [1, 1]} : vector<16x16xf32> to vector<16x8xf32>
    %49 = vector.extract_strided_slice %47 {offsets = [0, 8], sizes = [16, 8], strides = [1, 1]} : vector<16x16xf32> to vector<16x8xf32>
    %50 = math.tanh %48 : vector<16x8xf32>
    %cst_27 = arith.constant 5.000000e-01 : f32
    %51 = vector.broadcast %cst_27 : f32 to vector<16x8xf32>
    %52 = arith.mulf %51, %49 : vector<16x8xf32>
    %53 = math.tanh %52 : vector<16x8xf32>
    %cst_28 = arith.constant 5.000000e-01 : f32
    %54 = vector.broadcast %cst_28 : f32 to vector<16x8xf32>
    %55 = arith.mulf %54, %53 : vector<16x8xf32>
    %cst_29 = arith.constant 5.000000e-01 : f32
    %56 = vector.broadcast %cst_29 : f32 to vector<16x8xf32>
    %57 = arith.addf %55, %56 : vector<16x8xf32>
    %58 = arith.mulf %50, %57 : vector<16x8xf32>
    %c0_30 = arith.constant 0 : index
    %c0_31 = arith.constant 0 : index
    %c0_32 = arith.constant 0 : index
    %59 = vector.load %arg8[%c0_30, %c0_31, %c0_32] : memref<1x16x8xf32, #tpu.memory_space<vmem>>, vector<1x16x8xf32>
    %60 = vector.shape_cast %59 : vector<1x16x8xf32> to vector<16x8xf32>
    %61 = arith.addf %60, %58 : vector<16x8xf32>
    %cst_33 = arith.constant 0.000000e+00 : f32
    %62 = vector.broadcast %cst_33 : f32 to vector<16x8xf32>
    %63 = arith.maximumf %61, %62 : vector<16x8xf32>
    %c0_34 = arith.constant 0 : index
    %c0_35 = arith.constant 0 : index
    %c0_36 = arith.constant 0 : index
    %64 = vector.load %arg9[%c0_34, %c0_35, %c0_36] : memref<1x16x8xf32, #tpu.memory_space<vmem>>, vector<1x16x8xf32>
    %65 = vector.shape_cast %64 : vector<1x16x8xf32> to vector<16x8xf32>
    %66 = vector.shape_cast %63 : vector<16x8xf32> to vector<1x16x8xf32>
    tpu.vector_store %arg9[%c0_34, %c0_35, %c0_36], %66 {strides = array<i32>} : memref<1x16x8xf32, #tpu.memory_space<vmem>>, vector<1x16x8xf32>,
    return
  }
  func.func @transform_0(%arg0: i32, %arg1: i32) -> (i32, i32, i32) {
    %c0_i32 = arith.constant 0 : i32
    %c0_i32_0 = arith.constant 0 : i32
    return %arg0, %arg1, %c0_i32 : i32, i32, i32
  }
  func.func @transform_1(%arg0: i32, %arg1: i32) -> (i32, i32, i32) {
    %c1_i32 = arith.constant 1 : i32
    %0 = arith.muli %arg1, %c1_i32 : i32
    %c1_i32_0 = arith.constant 1 : i32
    %1 = arith.subi %0, %c1_i32_0 : i32
    %c0_i32 = arith.constant 0 : i32
    %2 = arith.maxsi %1, %c0_i32 : i32
    %c0_i32_1 = arith.constant 0 : i32
    %c0_i32_2 = arith.constant 0 : i32
    return %arg0, %2, %c0_i32_1 : i32, i32, i32
  }
  func.func @transform_2(%arg0: i32, %arg1: i32) -> (i32, i32) {
    %c0_i32 = arith.constant 0 : i32
    %c0_i32_0 = arith.constant 0 : i32
    %c0_i32_1 = arith.constant 0 : i32
    return %c0_i32, %c0_i32_0 : i32, i32
  }
  func.func @transform_3(%arg0: i32, %arg1: i32) -> (i32, i32) {
    %c0_i32 = arith.constant 0 : i32
    %c0_i32_0 = arith.constant 0 : i32
    %c0_i32_1 = arith.constant 0 : i32
    return %c0_i32, %c0_i32_0 : i32, i32
  }
  func.func @transform_4(%arg0: i32, %arg1: i32) -> (i32, i32) {
    %c0_i32 = arith.constant 0 : i32
    %c0_i32_0 = arith.constant 0 : i32
    %c0_i32_1 = arith.constant 0 : i32
    return %c0_i32, %c0_i32_0 : i32, i32
  }
  func.func @transform_5(%arg0: i32, %arg1: i32) -> (i32, i32) {
    %c0_i32 = arith.constant 0 : i32
    %c0_i32_0 = arith.constant 0 : i32
    %c0_i32_1 = arith.constant 0 : i32
    return %c0_i32, %c0_i32_0 : i32, i32
  }
  func.func @transform_6(%arg0: i32, %arg1: i32) -> (i32, i32, i32) {
    %c0_i32 = arith.constant 0 : i32
    %c0_i32_0 = arith.constant 0 : i32
    return %arg0, %arg1, %c0_i32 : i32, i32, i32
  }
  func.func @transform_7(%arg0: i32, %arg1: i32) -> (i32, i32, i32) {
    %c0_i32 = arith.constant 0 : i32
    %c0_i32_0 = arith.constant 0 : i32
    return %arg0, %arg1, %c0_i32 : i32, i32, i32
  }
}

</mosaic_0001>

<llo_original>
// kernel: shared_tcn_forward.4
$region0: #{shared_tcn_forward.4}
  #allocation0 [shape = 'u32[]', space=smem, size = 0x4, offset = 0x4, fixed_abs, tag = 'smem constant byte address 0x4 - core index']
  #allocation1 [shape = 'u32[144,128]{1,0:T(1,128)}', space=vmem, size = 0x12000, scoped, tag = 'internal scratch']
  #allocation2 [shape = 'f32[24,8]{1,0:T(8,128)}', space=vmem, size = 0x3000, scoped, tag = 'scratch operand']
  %s0 = inlined_call_operand.vmem [shape: f32[2,32,8], index: 0, kind: input, shape index: {}, may-alias: {0,1}]
  %s1 = inlined_call_operand.vmem [shape: f32[2,32,8], index: 1, kind: input, shape index: {}, may-alias: {0,1}]
  %s2 = inlined_call_operand.vmem [shape: f32[24,16], index: 2, kind: input, shape index: {}]
  %s3 = inlined_call_operand.vmem [shape: f32[1,16], index: 3, kind: input, shape index: {}]
  %s4 = inlined_call_operand.vmem [shape: f32[24,16], index: 4, kind: input, shape index: {}]
  %s5 = inlined_call_operand.vmem [shape: f32[1,16], index: 5, kind: input, shape index: {}]
  %s6 = inlined_call_operand.vmem [shape: f32[2,32,8], index: 6, kind: input, shape index: {}, may-alias: {6,8}]
  %s7 = inlined_call_operand.vmem [shape: f32[2,32,8], index: 7, kind: output, shape index: {0}]
  %s8 = inlined_call_operand.vmem [shape: f32[2,32,8], index: 8, kind: output, shape index: {1}, may-alias: {6,8}]
  %9 = xla_tuple %s7, %s8
  %s10 = sld [smem:[#allocation0]]
  $region69: #{shared_tcn_forward.4} parent=0
    _
  %s12 = ssub.s32 1, %s10
  %s13 = scalar_select 0, %s12, %s10
  loop: start=0, step=1, limit=6
  $region2: #{shared_tcn_forward.4} parent=0 // loop_pre_header
    _
  $region3: #{shared_tcn_forward.4} parent=0 // loop_header
    %s15 = sphi 0, %s19
    %p16 = scmp.ge.s32.totalorder %s15, 6
    %s22 = sphi 0, %s34
    %s23 = sphi 0, %s30
    %s24 = sphi 0, %s22
    %s25 = sphi 0, %s23
    %s26 = sphi 0, %s24
    %s27 = sphi 0, %s25
    %s39 = sphi 0, %s41
    %s42 = sphi 0, %s39
    %s43 = sphi 0, %s42
    %s59 = sphi 0, %s43
    %s75 = sphi 0, %s77
    %s78 = sphi 0, %s75
    %s79 = sphi 0, %s78
    %s95 = sphi 0, %s79
    %s99 = sphi 0, %s99
    %s101 = sphi 0, %s99
    %s102 = sphi 0, %s101
    %s116 = sphi 0, %s102
    %s120 = sphi 0, %s120
    %s122 = sphi 0, %s120
    %s123 = sphi 0, %s122
    %s137 = sphi 0, %s123
    %s141 = sphi 0, %s141
    %s143 = sphi 0, %s141
    %s144 = sphi 0, %s143
    %s158 = sphi 0, %s144
    %s162 = sphi 0, %s162
    %s164 = sphi 0, %s162
    %s165 = sphi 0, %s164
    %s179 = sphi 0, %s165
    %s187 = sphi 0, %s189
    %s190 = sphi 0, %s187
    %s191 = sphi 0, %s190
    %s207 = sphi 0, %s191
    %s215 = sphi 0, %s217
    %s218 = sphi 0, %s215
    %s219 = sphi 0, %s218
    %s235 = sphi 0, %s219
    %s243 = sphi 0, %s245
    %s246 = sphi 0, %s243
    %s247 = sphi 0, %s246
    %s263 = sphi 0, %s247
  $region4: #{shared_tcn_forward.4} parent=0 // loop_header_branch
    %18 = sbr.rel (%p16) target = $region8
  $region5: #{shared_tcn_forward.4} parent=0 // loop_body
    %s20 = ssub.s32 %s15, 1
    %s21 = ssub.s32 %s15, 2
    %s28 = sadd.s32 1, %s23
    %p29 = scmp.ge.s32.totalorder %s28, 2
    %s30 = scalar_select %p29, 0, %s28
    %s31 = sadd.s32 1, %s22
    %s32 = scalar_select %p29, %s31, %s22
    %p33 = scmp.ge.s32.totalorder %s32, 2
    %s34 = scalar_select %p33, 0, %s32
    %s35 = ssub.s32 %s22, %s34
    %s36 = ssub.s32 %s23, %s30
    %s37 = sor.u32 %s35, %s36
    %p38 = scmp.eq.s32.totalorder %s37, 0
    %s40 = sadd.s32 %s39, 1
    %s41 = scalar_select %p38, %s39, %s40
    %p44 = pneg %p38
    %p45 = scmp.eq.s32.totalorder %s15, 3
    %p46 = por %p44, %p45
    %p47 = scmp.ne.s32.totalorder %s39, %s42
    %p48 = scmp.eq.s32.totalorder %s15, 0
    %p49 = por %p47, %p48
    %p50 = scmp.ne.s32.totalorder %s39, %s42
    %p51 = scmp.eq.s32.totalorder %s20, 3
    %p52 = por %p50, %p51
    %p53 = scmp.ne.s32.totalorder %s42, %s43
    %p54 = scmp.eq.s32.totalorder %s20, 0
    %p55 = por %p53, %p54
    %p56 = scmp.ne.s32.totalorder %s42, %s43
    %p57 = scmp.eq.s32.totalorder %s21, 3
    %p58 = por %p56, %p57
    %p60 = scmp.ne.s32.totalorder %s43, %s59
    %p61 = scmp.eq.s32.totalorder %s21, 0
    %p62 = por %p60, %p61
    %s63 = smul.u32 %s23, 2
    %s64 = ssub.s32 %s63, 1
    %p65 = scmp.gt.s32.totalorder %s64, 0
    %s66 = scalar_select %p65, %s64, 0
    %s67 = smul.u32 %s30, 2
    %s68 = ssub.s32 %s67, 1
    %p69 = scmp.gt.s32.totalorder %s68, 0
    %s70 = scalar_select %p69, %s68, 0
    %s71 = ssub.s32 %s22, %s34
    %s72 = ssub.s32 %s66, %s70
    %s73 = sor.u32 %s71, %s72
    %p74 = scmp.eq.s32.totalorder %s73, 0
    %s76 = sadd.s32 %s75, 1
    %s77 = scalar_select %p74, %s75, %s76
    %p80 = pneg %p74
    %p81 = scmp.eq.s32.totalorder %s15, 3
    %p82 = por %p80, %p81
    %p83 = scmp.ne.s32.totalorder %s75, %s78
    %p84 = scmp.eq.s32.totalorder %s15, 0
    %p85 = por %p83, %p84
    %p86 = scmp.ne.s32.totalorder %s75, %s78
    %p87 = scmp.eq.s32.totalorder %s20, 3
    %p88 = por %p86, %p87
    %p89 = scmp.ne.s32.totalorder %s78, %s79
    %p90 = scmp.eq.s32.totalorder %s20, 0
    %p91 = por %p89, %p90
    %p92 = scmp.ne.s32.totalorder %s78, %s79
    %p93 = scmp.eq.s32.totalorder %s21, 3
    %p94 = por %p92, %p93
    %p96 = scmp.ne.s32.totalorder %s79, %s95
    %p97 = scmp.eq.s32.totalorder %s21, 0
    %p98 = por %p96, %p97
    %s100 = sadd.s32 %s99, 1
    %p103 = scmp.eq.s32.totalorder %s15, 3
    %p104 = scmp.ne.s32.totalorder %s99, %s101
    %p105 = scmp.eq.s32.totalorder %s15, 0
    %p106 = por %p104, %p105
    %p107 = scmp.ne.s32.totalorder %s99, %s101
    %p108 = scmp.eq.s32.totalorder %s20, 3
    %p109 = por %p107, %p108
    %p110 = scmp.ne.s32.totalorder %s101, %s102
    %p111 = scmp.eq.s32.totalorder %s20, 0
    %p112 = por %p110, %p111
    %p113 = scmp.ne.s32.totalorder %s101, %s102
    %p114 = scmp.eq.s32.totalorder %s21, 3
    %p115 = por %p113, %p114
    %p117 = scmp.ne.s32.totalorder %s102, %s116
    %p118 = scmp.eq.s32.totalorder %s21, 0
    %p119 = por %p117, %p118
    %s121 = sadd.s32 %s120, 1
    %p124 = scmp.eq.s32.totalorder %s15, 3
    %p125 = scmp.ne.s32.totalorder %s120, %s122
    %p126 = scmp.eq.s32.totalorder %s15, 0
    %p127 = por %p125, %p126
    %p128 = scmp.ne.s32.totalorder %s120, %s122
    %p129 = scmp.eq.s32.totalorder %s20, 3
    %p130 = por %p128, %p129
    %p131 = scmp.ne.s32.totalorder %s122, %s123
    %p132 = scmp.eq.s32.totalorder %s20, 0
    %p133 = por %p131, %p132
    %p134 = scmp.ne.s32.totalorder %s122, %s123
    %p135 = scmp.eq.s32.totalorder %s21, 3
    %p136 = por %p134, %p135
    %p138 = scmp.ne.s32.totalorder %s123, %s137
    %p139 = scmp.eq.s32.totalorder %s21, 0
    %p140 = por %p138, %p139
    %s142 = sadd.s32 %s141, 1
    %p145 = scmp.eq.s32.totalorder %s15, 3
    %p146 = scmp.ne.s32.totalorder %s141, %s143
    %p147 = scmp.eq.s32.totalorder %s15, 0
    %p148 = por %p146, %p147
    %p149 = scmp.ne.s32.totalorder %s141, %s143
    %p150 = scmp.eq.s32.totalorder %s20, 3
    %p151 = por %p149, %p150
    %p152 = scmp.ne.s32.totalorder %s143, %s144
    %p153 = scmp.eq.s32.totalorder %s20, 0
    %p154 = por %p152, %p153
    %p155 = scmp.ne.s32.totalorder %s143, %s144
    %p156 = scmp.eq.s32.totalorder %s21, 3
    %p157 = por %p155, %p156
    %p159 = scmp.ne.s32.totalorder %s144, %s158
    %p160 = scmp.eq.s32.totalorder %s21, 0
    %p161 = por %p159, %p160
    %s163 = sadd.s32 %s162, 1
    %p166 = scmp.eq.s32.totalorder %s15, 3
    %p167 = scmp.ne.s32.totalorder %s162, %s164
    %p168 = scmp.eq.s32.totalorder %s15, 0
    %p169 = por %p167, %p168
    %p170 = scmp.ne.s32.totalorder %s162, %s164
    %p171 = scmp.eq.s32.totalorder %s20, 3
    %p172 = por %p170, %p171
    %p173 = scmp.ne.s32.totalorder %s164, %s165
    %p174 = scmp.eq.s32.totalorder %s20, 0
    %p175 = por %p173, %p174
    %p176 = scmp.ne.s32.totalorder %s164, %s165
    %p177 = scmp.eq.s32.totalorder %s21, 3
    %p178 = por %p176, %p177
    %p180 = scmp.ne.s32.totalorder %s165, %s179
    %p181 = scmp.eq.s32.totalorder %s21, 0
    %p182 = por %p180, %p181
    %s183 = ssub.s32 %s22, %s34
    %s184 = ssub.s32 %s23, %s30
    %s185 = sor.u32 %s183, %s184
    %p186 = scmp.eq.s32.totalorder %s185, 0
    %s188 = sadd.s32 %s187, 1
    %s189 = scalar_select %p186, %s187, %s188
    %p192 = pneg %p186
    %p193 = scmp.eq.s32.totalorder %s15, 3
    %p194 = por %p192, %p193
    %p195 = scmp.ne.s32.totalorder %s187, %s190
    %p196 = scmp.eq.s32.totalorder %s15, 0
    %p197 = por %p195, %p196
    %p198 = scmp.ne.s32.totalorder %s187, %s190
    %p199 = scmp.eq.s32.totalorder %s20, 3
    %p200 = por %p198, %p199
    %p201 = scmp.ne.s32.totalorder %s190, %s191
    %p202 = scmp.eq.s32.totalorder %s20, 0
    %p203 = por %p201, %p202
    %p204 = scmp.ne.s32.totalorder %s190, %s191
    %p205 = scmp.eq.s32.totalorder %s21, 3
    %p206 = por %p204, %p205
    %p208 = scmp.ne.s32.totalorder %s191, %s207
    %p209 = scmp.eq.s32.totalorder %s21, 0
    %p210 = por %p208, %p209
    %s211 = ssub.s32 %s22, %s34
    %s212 = ssub.s32 %s23, %s30
    %s213 = sor.u32 %s211, %s212
    %p214 = scmp.eq.s32.totalorder %s213, 0
    %s216 = sadd.s32 %s215, 1
    %s217 = scalar_select %p214, %s215, %s216
    %p220 = pneg %p214
    %p221 = scmp.eq.s32.totalorder %s15, 3
    %p222 = por %p220, %p221
    %p223 = scmp.ne.s32.totalorder %s215, %s218
    %p224 = scmp.eq.s32.totalorder %s15, 0
    %p225 = por %p223, %p224
    %p226 = scmp.ne.s32.totalorder %s215, %s218
    %p227 = scmp.eq.s32.totalorder %s20, 3
    %p228 = por %p226, %p227
    %p229 = scmp.ne.s32.totalorder %s218, %s219
    %p230 = scmp.eq.s32.totalorder %s20, 0
    %p231 = por %p229, %p230
    %p232 = scmp.ne.s32.totalorder %s218, %s219
    %p233 = scmp.eq.s32.totalorder %s21, 3
    %p234 = por %p232, %p233
    %p236 = scmp.ne.s32.totalorder %s219, %s235
    %p237 = scmp.eq.s32.totalorder %s21, 0
    %p238 = por %p236, %p237
    %s239 = ssub.s32 %s22, %s34
    %s240 = ssub.s32 %s23, %s30
    %s241 = sor.u32 %s239, %s240
    %p242 = scmp.eq.s32.totalorder %s241, 0
    %s244 = sadd.s32 %s243, 1
    %s245 = scalar_select %p242, %s243, %s244
    %p248 = pneg %p242
    %p249 = scmp.eq.s32.totalorder %s15, 3
    %p250 = por %p248, %p249
    %p251 = scmp.ne.s32.totalorder %s243, %s246
    %p252 = scmp.eq.s32.totalorder %s15, 0
    %p253 = por %p251, %p252
    %p254 = scmp.ne.s32.totalorder %s243, %s246
    %p255 = scmp.eq.s32.totalorder %s20, 3
    %p256 = por %p254, %p255
    %p257 = scmp.ne.s32.totalorder %s246, %s247
    %p258 = scmp.eq.s32.totalorder %s20, 0
    %p259 = por %p257, %p258
    %p260 = scmp.ne.s32.totalorder %s246, %s247
    %p261 = scmp.eq.s32.totalorder %s21, 3
    %p262 = por %p260, %p261
    %p264 = scmp.ne.s32.totalorder %s247, %s263
    %p265 = scmp.eq.s32.totalorder %s21, 0
    %p266 = por %p264, %p265
    %p267 = scmp.le.s32.totalorder 1, %s15
    %p268 = scmp.lt.s32.totalorder %s15, 5
    %p269 = pnand %p267, %p268
    %p270 = pneg %p269
    // Predicated region
    $region9: #{shared_tcn_forward.4} parent=5 // pred_check
      _
    $region10: #{shared_tcn_forward.4} parent=5 // pred_check_branch
      %272 = sbr.rel (%p269) target = $region12
    $region11: #{shared_tcn_forward.4} parent=5 // pred_region
      %s273 = ssub.s32 %s15, 1
      // Predicated region
      $region13: #{shared_tcn_forward.4} parent=11 // pred_check
        %p274 = pneg %p112
      $region14: #{shared_tcn_forward.4} parent=11 // pred_check_branch
        %276 = sbr.rel (%p274) target = $region16
      $region15: #{shared_tcn_forward.4} parent=11 // pred_region
        _
      $region16: #{shared_tcn_forward.4} parent=11 // pred_fallthru
        _
      // Predicated region
      $region17: #{shared_tcn_forward.4} parent=11 // pred_check
        %p277 = pneg %p133
      $region18: #{shared_tcn_forward.4} parent=11 // pred_check_branch
        %279 = sbr.rel (%p277) target = $region20
      $region19: #{shared_tcn_forward.4} parent=11 // pred_region
        _
      $region20: #{shared_tcn_forward.4} parent=11 // pred_fallthru
        _
      // Predicated region
      $region21: #{shared_tcn_forward.4} parent=11 // pred_check
        %p280 = pneg %p154
      $region22: #{shared_tcn_forward.4} parent=11 // pred_check_branch
        %282 = sbr.rel (%p280) target = $region24
      $region23: #{shared_tcn_forward.4} parent=11 // pred_region
        _
      $region24: #{shared_tcn_forward.4} parent=11 // pred_fallthru
        _
      // Predicated region
      $region25: #{shared_tcn_forward.4} parent=11 // pred_check
        %p283 = pneg %p175
      $region26: #{shared_tcn_forward.4} parent=11 // pred_check_branch
        %285 = sbr.rel (%p283) target = $region28
      $region27: #{shared_tcn_forward.4} parent=11 // pred_region
        _
      $region28: #{shared_tcn_forward.4} parent=11 // pred_fallthru
        _
    $region12: #{shared_tcn_forward.4} parent=5 // pred_fallthru
      _
    %p286 = scmp.lt.s32.totalorder %s15, 4
    // Predicated region
    $region29: #{shared_tcn_forward.4} parent=5 // pred_check
      %p287 = pneg %p286
    $region30: #{shared_tcn_forward.4} parent=5 // pred_check_branch
      %289 = sbr.rel (%p287) target = $region32
    $region31: #{shared_tcn_forward.4} parent=5 // pred_region
      // Predicated region
      $region33: #{shared_tcn_forward.4} parent=31 // pred_check
        %p290 = pneg %p49
      $region34: #{shared_tcn_forward.4} parent=31 // pred_check_branch
        %292 = sbr.rel (%p290) target = $region36
      $region35: #{shared_tcn_forward.4} parent=31 // pred_region
        %s293 = smul.u32 2, %s23
        %p294 = scmp.lt.s32.totalorder %s22, 1
        %s295 = scalar_select %p294, %s22, 1
        %p296 = scmp.lt.s32.totalorder %s293, 3
        %s297 = scalar_select %p296, %s293, 3
        %s298 = smul.addr %s295, 4
        %s299 = sadd.s32 %s297, %s298
        %s300 = smul.addr %s299, 8
        %s301 = scalar_lea.vmem %s0, %s300
        %s302 = smul.u32 2, %s23
      $region36: #{shared_tcn_forward.4} parent=31 // pred_fallthru
        _
      // Predicated region
      $region37: #{shared_tcn_forward.4} parent=31 // pred_check
        %p303 = pneg %p85
      $region38: #{shared_tcn_forward.4} parent=31 // pred_check_branch
        %305 = sbr.rel (%p303) target = $region40
      $region39: #{shared_tcn_forward.4} parent=31 // pred_region
        %s306 = smul.u32 %s23, 2
        %s307 = ssub.s32 %s306, 1
        %p308 = scmp.gt.s32.totalorder %s307, 0
        %s309 = scalar_select %p308, %s307, 0
        %p310 = scmp.lt.s32.totalorder %s22, 1
        %s311 = scalar_select %p310, %s22, 1
        %p312 = scmp.lt.s32.totalorder %s309, 3
        %s313 = scalar_select %p312, %s309, 3
        %s314 = smul.addr %s311, 4
        %s315 = sadd.s32 %s313, %s314
        %s316 = smul.addr %s315, 8
        %s317 = scalar_lea.vmem %s1, %s316
        %s318 = smul.u32 %s23, 2
        %s319 = ssub.s32 %s318, 1
        %p320 = scmp.gt.s32.totalorder %s319, 0
        %s321 = scalar_select %p320, %s319, 0
      $region40: #{shared_tcn_forward.4} parent=31 // pred_fallthru
        _
      // Predicated region
      $region41: #{shared_tcn_forward.4} parent=31 // pred_check
        %p322 = pneg %p197
      $region42: #{shared_tcn_forward.4} parent=31 // pred_check_branch
        %324 = sbr.rel (%p322) target = $region44
      $region43: #{shared_tcn_forward.4} parent=31 // pred_region
        %s325 = smul.u32 2, %s23
        %p326 = scmp.lt.s32.totalorder %s22, 1
        %s327 = scalar_select %p326, %s22, 1
        %p328 = scmp.lt.s32.totalorder %s325, 3
        %s329 = scalar_select %p328, %s325, 3
        %s330 = smul.addr %s327, 4
        %s331 = sadd.s32 %s329, %s330
        %s332 = smul.addr %s331, 8
        %s333 = scalar_lea.vmem %s6, %s332
        %s334 = smul.u32 2, %s23
      $region44: #{shared_tcn_forward.4} parent=31 // pred_fallthru
        _
    $region32: #{shared_tcn_forward.4} parent=5 // pred_fallthru
      _
    %p335 = scmp.le.s32.totalorder 1, %s15
    %p336 = scmp.lt.s32.totalorder %s15, 5
    %p337 = pnand %p335, %p336
    %p338 = pneg %p337
    // Predicated region
    $region45: #{shared_tcn_forward.4} parent=5 // pred_check
      _
    $region46: #{shared_tcn_forward.4} parent=5 // pred_check_branch
      %340 = sbr.rel (%p337) target = $region48
    $region47: #{shared_tcn_forward.4} parent=5 // pred_region
      %s341 = ssub.s32 %s15, 1
      %s342 = smul.u32 2, %s25
      %p343 = scmp.lt.s32.totalorder %s24, 1
      %s344 = scalar_select %p343, %s24, 1
      %p345 = scmp.lt.s32.totalorder %s342, 3
      %s346 = scalar_select %p345, %s342, 3
      %s347 = smul.addr %s344, 4
      %s348 = sadd.s32 %s346, %s347
      %s349 = smul.addr %s348, 8
      %s350 = scalar_lea.vmem %s0, %s349
      %p351 = pneg %p55
      %p352 = pneg %p52
      %s353 = smul.u32 %s25, 2
      %s354 = ssub.s32 %s353, 1
      %p355 = scmp.gt.s32.totalorder %s354, 0
      %s356 = scalar_select %p355, %s354, 0
      %p357 = scmp.lt.s32.totalorder %s24, 1
      %s358 = scalar_select %p357, %s24, 1
      %p359 = scmp.lt.s32.totalorder %s356, 3
      %s360 = scalar_select %p359, %s356, 3
      %s361 = smul.addr %s358, 4
      %s362 = sadd.s32 %s360, %s361
      %s363 = smul.addr %s362, 8
      %s364 = scalar_lea.vmem %s1, %s363
      %p365 = pneg %p91
      %p366 = pneg %p88
      %p367 = pneg %p112
      %p368 = pneg %p109
      %p369 = pneg %p133
      %p370 = pneg %p130
      %p371 = pneg %p154
      %p372 = pneg %p151
      %p373 = pneg %p175
      %p374 = pneg %p172
      %s375 = smul.u32 2, %s25
      %p376 = scmp.lt.s32.totalorder %s24, 1
      %s377 = scalar_select %p376, %s24, 1
      %p378 = scmp.lt.s32.totalorder %s375, 3
      %s379 = scalar_select %p378, %s375, 3
      %s380 = smul.addr %s377, 4
      %s381 = sadd.s32 %s379, %s380
      %s382 = smul.addr %s381, 8
      %s383 = scalar_lea.vmem %s6, %s382
      %p384 = pneg %p203
      %p385 = pneg %p200
      %p386 = pneg %p231
      %p387 = pneg %p228
      %s388 = smul.u32 2, %s25
      %p389 = scmp.lt.s32.totalorder %s24, 1
      %s390 = scalar_select %p389, %s24, 1
      %p391 = scmp.lt.s32.totalorder %s388, 3
      %s392 = scalar_select %p391, %s388, 3
      %s393 = smul.addr %s390, 4
      %s394 = sadd.s32 %s392, %s393
      %s395 = smul.addr %s394, 8
      %s396 = scalar_lea.vmem %s7, %s395
      %p397 = pneg %p259
      %p398 = pneg %p256
      %s399 = smul.u32 2, %s25
      %p400 = scmp.lt.s32.totalorder %s24, 1
      %s401 = scalar_select %p400, %s24, 1
      %p402 = scmp.lt.s32.totalorder %s399, 3
      %s403 = scalar_select %p402, %s399, 3
      %s404 = smul.addr %s401, 4
      %s405 = sadd.s32 %s403, %s404
      %s406 = smul.addr %s405, 8
      %s407 = scalar_lea.vmem %s8, %s406
      %s408 = smul.u32 2, %s25
      %p409 = scmp.lt.s32.totalorder %s24, 1
      %s410 = scalar_select %p409, %s24, 1
      %p411 = scmp.lt.s32.totalorder %s408, 3
      %s412 = scalar_select %p411, %s408, 3
      %s413 = smul.addr %s410, 4
      %s414 = sadd.s32 %s412, %s413
      %s415 = smul.addr %s414, 8
      %s416 = scalar_lea.vmem %s0, %s415
      %s417 = smul.u32 2, %s25
      %s418 = smul.u32 %s25, 2
      %s419 = ssub.s32 %s418, 1
      %p420 = scmp.gt.s32.totalorder %s419, 0
      %s421 = scalar_select %p420, %s419, 0
      %p422 = scmp.lt.s32.totalorder %s24, 1
      %s423 = scalar_select %p422, %s24, 1
      %p424 = scmp.lt.s32.totalorder %s421, 3
      %s425 = scalar_select %p424, %s421, 3
      %s426 = smul.addr %s423, 4
      %s427 = sadd.s32 %s425, %s426
      %s428 = smul.addr %s427, 8
      %s429 = scalar_lea.vmem %s1, %s428
      %s430 = smul.u32 %s25, 2
      %s431 = ssub.s32 %s430, 1
      %p432 = scmp.gt.s32.totalorder %s431, 0
      %s433 = scalar_select %p432, %s431, 0
      %s434 = smul.u32 2, %s25
      %p435 = scmp.lt.s32.totalorder %s24, 1
      %s436 = scalar_select %p435, %s24, 1
      %p437 = scmp.lt.s32.totalorder %s434, 3
      %s438 = scalar_select %p437, %s434, 3
      %s439 = smul.addr %s436, 4
      %s440 = sadd.s32 %s438, %s439
      %s441 = smul.addr %s440, 8
      %s442 = scalar_lea.vmem %s6, %s441
      %s443 = smul.u32 2, %s25
      %s444 = smul.u32 2, %s25
      %p445 = scmp.lt.s32.totalorder %s24, 1
      %s446 = scalar_select %p445, %s24, 1
      %p447 = scmp.lt.s32.totalorder %s444, 3
      %s448 = scalar_select %p447, %s444, 3
      %s449 = smul.addr %s446, 4
      %s450 = sadd.s32 %s448, %s449
      %s451 = smul.addr %s450, 8
      %s452 = scalar_lea.vmem %s7, %s451
      %s453 = smul.u32 2, %s25
      %s454 = smul.u32 2, %s25
      %p455 = scmp.lt.s32.totalorder %s24, 1
      %s456 = scalar_select %p455, %s24, 1
      %p457 = scmp.lt.s32.totalorder %s454, 3
      %s458 = scalar_select %p457, %s454, 3
      %s459 = smul.addr %s456, 4
      %s460 = sadd.s32 %s458, %s459
      %s461 = smul.addr %s460, 8
      %s462 = scalar_lea.vmem %s8, %s461
      %s463 = smul.u32 2, %s25
      %v464 = vld [vmem:[%s416] sm:$0xff]
      %v465 = vld [vmem:[%s416 + $0x8] sm:$0xff]
      %vm466 = vcmask 64512
      %467 = vst.msk [vmem:[#allocation2 + $0x8] sm:$0xff] %vm466, %v464
      %468 = vst.msk [vmem:[#allocation2 + $0x10] sm:$0xff] %vm466, %v465
      %v469 = vld [vmem:[%s429] sm:$0xff]
      %p470 = scmp.gt.s32.totalorder %s25, 0
      %s471 = scalar_select %p470, 1, 0
      %v472 = vstv %s471
      %vm473 = vcmp.eq.s32.totalorder %v472, 1
      %v474 = vsel %vm473, %v469, 0.0
      %475 = vst.msk [vmem:[#allocation2] sm:$0xff] %vm466, %v474
      %v476 = vld [vmem:[#allocation2] sm:$0xff]
      %v477 = vld [vmem:[#allocation2 + $0x8] sm:$0xff]
      %v478 = vld [vmem:[#allocation2 + $0x10] sm:$0xf]
      %v479 = vld [vmem:[#allocation2 + $0x2] sm:$0xff]
      %v480 = vld [vmem:[#allocation2 + $0xa] sm:$0xff]
      %v481 = vld [vmem:[#allocation2 + $0x12] sm:$0xf]
      %v482 = vld [vmem:[#allocation2 + $0x4] sm:$0xff]
      %v483 = vld [vmem:[#allocation2 + $0xc] sm:$0xff]
      %v484 = vld [vmem:[#allocation2 + $0x14] sm:$0xf]
      %488 = vrot.lane.b32.xlu0 %v479, 8
      %v489 = vpop.permute.xlu0 %488
      %490 = vrot.lane.b32.xlu0 %v480, 8
      %v491 = vpop.permute.xlu0 %490
      %492 = vrot.lane.b32.xlu0 %v481, 8
      %v493 = vpop.permute.xlu0 %492
      %500 = vrot.lane.b32.xlu0 %v482, 16
      %v501 = vpop.permute.xlu0 %500
      %502 = vrot.lane.b32.xlu0 %v483, 16
      %v503 = vpop.permute.xlu0 %502
      %504 = vrot.lane.b32.xlu0 %v484, 16
      %v505 = vpop.permute.xlu0 %504
      %v509 = vsel %vm466, %v476, %v489
      %v510 = vsel %vm466, %v477, %v491
      %v511 = vsel %vm466, %v478, %v493
      %vm512 = vcmask 130048
      %v513 = vsel %vm512, %v509, %v501
      %v514 = vsel %vm512, %v510, %v503
      %v515 = vsel %vm512, %v511, %v505
      %v516 = vld [vmem:[%s2] sm:$0xff]
      %v517 = vld [vmem:[%s2 + $0x8] sm:$0xff]
      %v518 = vld [vmem:[%s2 + $0x10] sm:$0xff]
      %v519 = vld [vmem:[%s3] sm:$0x1]
      %v521 = vlaneseq
      %v522 = vshrl.u32 %v521, 7
      %v523 = vsub.s32 0, %v522
      %v524 = vrot.slane %v519, %v523
      %vm526 = vcmask 195584
      %v528 = vsel %vm526, %v513, 0
      %v531 = vsel %vm526, %v514, 0
      %v534 = vsel %vm526, %v515, 0
      %536 = vmatprep.subr.mxu0 0.0
      %537 = vmatpush1.msra.mxu0 0.0
      %538 = vmatprep.subr.mxu0 0.0
      %539 = vmatpush1.msra.mxu0 0.0
      %540 = vmatprep.subr.mxu0 0.0
      %541 = vmatpush1.msra.mxu0 0.0
      %542 = vmatprep.subr.mxu0 0.0
      %543 = vmatpush1.msra.mxu0 0.0
      %544 = vmatprep.subr.mxu0 0.0
      %545 = vmatpush1.msra.mxu0 0.0
      %546 = vmatprep.subr.mxu0 0.0
      %547 = vmatpush1.msra.mxu0 0.0
      %548 = vmatprep.subr.mxu0 0.0
      %549 = vmatpush1.msra.mxu0 0.0
      %550 = vmatprep.subr.mxu0 0.0
      %551 = vmatpush1.msra.mxu0 0.0
      %552 = vmatprep.subr.mxu0 0.0
      %553 = vmatpush1.msra.mxu0 0.0
      %554 = vmatprep.subr.mxu0 0.0
      %555 = vmatpush1.msra.mxu0 0.0
      %556 = vmatprep.subr.mxu0 0.0
      %557 = vmatpush1.msra.mxu0 0.0
      %558 = vmatprep.subr.mxu0 0.0
      %559 = vmatpush1.msra.mxu0 0.0
      %560 = vmatprep.subr.mxu0 0.0
      %561 = vmatpush1.msra.mxu0 0.0
      %562 = vmatprep.subr.mxu0 0.0
      %563 = vmatpush1.msra.mxu0 %v518
      %564 = vmatprep.subr.mxu0 0.0
      %565 = vmatpush1.msra.mxu0 %v517
      %566 = vmatprep.subr.mxu0 0.0
      %567 = vmatpush1.msra.mxu0 %v516
      %568 = vmatprep.subr.mxu0 0.0
      %569 = vmatpush2.msra.mxu0 0.0
      %570 = vmatprep.subr.mxu0 0.0
      %571 = vmatpush2.msra.mxu0 0.0
      %572 = vmatprep.subr.mxu0 0.0
      %573 = vmatpush2.msra.mxu0 0.0
      %574 = vmatprep.subr.mxu0 0.0
      %575 = vmatpush2.msra.mxu0 0.0
      %576 = vmatprep.subr.mxu0 0.0
      %577 = vmatpush2.msra.mxu0 0.0
      %578 = vmatprep.subr.mxu0 0.0
      %579 = vmatpush2.msra.mxu0 0.0
      %580 = vmatprep.subr.mxu0 0.0
      %581 = vmatpush2.msra.mxu0 0.0
      %582 = vmatprep.subr.mxu0 0.0
      %583 = vmatpush2.msra.mxu0 0.0
      %584 = vmatprep.subr.mxu0 0.0
      %585 = vmatpush2.msra.mxu0 0.0
      %586 = vmatprep.subr.mxu0 0.0
      %587 = vmatpush2.msra.mxu0 0.0
      %588 = vmatprep.subr.mxu0 0.0
      %589 = vmatpush2.msra.mxu0 0.0
      %590 = vmatprep.subr.mxu0 0.0
      %591 = vmatpush2.msra.mxu0 0.0
      %592 = vmatprep.subr.mxu0 0.0
      %593 = vmatpush2.msra.mxu0 0.0
      %594 = vmatprep.subr.mxu0 0.0
      %595 = vmatpush2.msra.mxu0 0.0
      %596 = vmatprep.subr.mxu0 0.0
      %597 = vmatpush2.msra.mxu0 0.0
      %598 = vmatprep.subr.mxu0 0.0
      %599 = vmatpush2.msra.mxu0 0.0
      %600 = vmatprep.mubr.f32.mxu0 0.0
      %601 = vmatmul.mubr.f32.gmra.mxu0 %v528
      %v602 = vpop.f32.mrf.mxu0
      %v603 = vadd.f32 %v524, %v602
      %v604 = vpop.f32.mrf.mxu0
      %605 = vmatprep.mubr.f32.mxu0 0.0
      %606 = vmatmul.mubr.f32.gmra.mxu0 %v531
      %v607 = vpop.f32.mrf.mxu0
      %v608 = vadd.f32 %v524, %v607
      %v609 = vpop.f32.mrf.mxu0
      %610 = vmatprep.mubr.f32.mxu0 0.0
      %611 = vmatmul.mubr.f32.gmra.mxu0 %v534
      %v612 = vpop.f32.mrf.mxu0
      %v613 = vadd.f32 %v524, %v612
      %v614 = vpop.f32.mrf.mxu0
      %615 = vdwg.mxu0
      %v616 = vtanh.pop %v603
      %v617 = vtanh.pop %v608
      %v618 = vtanh.pop %v613
      %v619 = vmul.f32 %v603, 0.5
      %v620 = vmul.f32 %v608, 0.5
      %v621 = vmul.f32 %v613, 0.5
      %v622 = vtanh.pop %v619
      %v623 = vtanh.pop %v620
      %v624 = vtanh.pop %v621
      %v625 = vmul.f32 %v622, 0.5
      %v626 = vmul.f32 %v623, 0.5
      %v627 = vmul.f32 %v624, 0.5
      %v628 = vadd.f32 %v625, 0.5
      %v629 = vadd.f32 %v626, 0.5
      %v630 = vadd.f32 %v627, 0.5
      %634 = vrot.lane.b32.xlu0 %v628, 120
      %v635 = vpop.permute.xlu0 %634
      %636 = vrot.lane.b32.xlu0 %v629, 120
      %v637 = vpop.permute.xlu0 %636
      %638 = vrot.lane.b32.xlu0 %v630, 120
      %v639 = vpop.permute.xlu0 %638
      %v643 = vmul.f32 %v616, %v635
      %v644 = vmul.f32 %v617, %v637
      %v645 = vmul.f32 %v618, %v639
      %v646 = vlaneseq
      %v647 = vshrl.u32 %v646, 7
      %v648 = vadd.s32 %v647, 8
      %v649 = vadd.s32 %v647, 16
      %p650 = scmp.eq.s32.totalorder %s25, 0
      %vm651 = vcmp.lt.s32.totalorder %v647, 4
      %vm652 = vcmp.lt.s32.totalorder %v648, 4
      %vm653 = vcmp.lt.s32.totalorder %v649, 4
      %s654 = scalar_select %p650, 1, 0
      %v655 = vstv %s654
      %vm656 = vcmp.eq.s32.totalorder %v655, 1
      %vm657 = vmand %vm656, %vm651
      %vm658 = vmand %vm656, %vm652
      %vm659 = vmand %vm656, %vm653
      %v660 = vsel %vm657, 1, 0
      %v661 = vsel %vm658, 1, 0
      %v662 = vsel %vm659, 1, 0
      %vm663 = vcmp.eq.s32.totalorder %v660, 1
      %vm664 = vcmp.eq.s32.totalorder %v661, 1
      %vm665 = vcmp.eq.s32.totalorder %v662, 1
      %v666 = vsel %vm663, 0.0, %v643
      %v667 = vsel %vm664, 0.0, %v644
      %v668 = vsel %vm665, 0.0, %v645
      %vm672 = vcmask 1045504
      %v673 = vrot.slane %v666, 2
      %v674 = vrot.slane %v667, 2
      %v675 = vsel %vm672, %v673, %v674
      %v676 = vrot.slane %v668, 2
      %v677 = vsel %vm672, %v674, %v676
      %678 = vrot.lane.b32.xlu0 %v675, 8
      %v679 = vpop.permute.xlu0 %678
      %680 = vrot.lane.b32.xlu0 %v677, 8
      %v681 = vpop.permute.xlu0 %680
      %vm684 = vcmask 1043456
      %v685 = vrot.slane %v666, 4
      %v686 = vrot.slane %v667, 4
      %v687 = vsel %vm684, %v685, %v686
      %v688 = vrot.slane %v668, 4
      %v689 = vsel %vm684, %v686, %v688
      %690 = vrot.lane.b32.xlu0 %v687, 16
      %v691 = vpop.permute.xlu0 %690
      %692 = vrot.lane.b32.xlu0 %v689, 16
      %v693 = vpop.permute.xlu0 %692
      %v696 = vsel %vm466, %v666, %v679
      %v697 = vsel %vm466, %v667, %v681
      %v698 = vsel %vm512, %v696, %v691
      %v699 = vsel %vm512, %v697, %v693
      %v700 = vld [vmem:[%s4] sm:$0xff]
      %v701 = vld [vmem:[%s4 + $0x8] sm:$0xff]
      %v702 = vld [vmem:[%s4 + $0x10] sm:$0xff]
      %v703 = vld [vmem:[%s5] sm:$0x1]
      %v705 = vlaneseq
      %v706 = vshrl.u32 %v705, 7
      %v707 = vsub.s32 0, %v706
      %v708 = vrot.slane %v703, %v707
      %v711 = vsel %vm526, %v698, 0
      %v714 = vsel %vm526, %v699, 0
      %716 = vmatprep.subr.mxu0 0.0
      %717 = vmatpush1.msra.mxu0 0.0
      %718 = vmatprep.subr.mxu0 0.0
      %719 = vmatpush1.msra.mxu0 0.0
      %720 = vmatprep.subr.mxu0 0.0
      %721 = vmatpush1.msra.mxu0 0.0
      %722 = vmatprep.subr.mxu0 0.0
      %723 = vmatpush1.msra.mxu0 0.0
      %724 = vmatprep.subr.mxu0 0.0
      %725 = vmatpush1.msra.mxu0 0.0
      %726 = vmatprep.subr.mxu0 0.0
      %727 = vmatpush1.msra.mxu0 0.0
      %728 = vmatprep.subr.mxu0 0.0
      %729 = vmatpush1.msra.mxu0 0.0
      %730 = vmatprep.subr.mxu0 0.0
      %731 = vmatpush1.msra.mxu0 0.0
      %732 = vmatprep.subr.mxu0 0.0
      %733 = vmatpush1.msra.mxu0 0.0
      %734 = vmatprep.subr.mxu0 0.0
      %735 = vmatpush1.msra.mxu0 0.0
      %736 = vmatprep.subr.mxu0 0.0
      %737 = vmatpush1.msra.mxu0 0.0
      %738 = vmatprep.subr.mxu0 0.0
      %739 = vmatpush1.msra.mxu0 0.0
      %740 = vmatprep.subr.mxu0 0.0
      %741 = vmatpush1.msra.mxu0 0.0
      %742 = vmatprep.subr.mxu0 0.0
      %743 = vmatpush1.msra.mxu0 %v702
      %744 = vmatprep.subr.mxu0 0.0
      %745 = vmatpush1.msra.mxu0 %v701
      %746 = vmatprep.subr.mxu0 0.0
      %747 = vmatpush1.msra.mxu0 %v700
      %748 = vmatprep.subr.mxu0 0.0
      %749 = vmatpush2.msra.mxu0 0.0
      %750 = vmatprep.subr.mxu0 0.0
      %751 = vmatpush2.msra.mxu0 0.0
      %752 = vmatprep.subr.mxu0 0.0
      %753 = vmatpush2.msra.mxu0 0.0
      %754 = vmatprep.subr.mxu0 0.0
      %755 = vmatpush2.msra.mxu0 0.0
      %756 = vmatprep.subr.mxu0 0.0
      %757 = vmatpush2.msra.mxu0 0.0
      %758 = vmatprep.subr.mxu0 0.0
      %759 = vmatpush2.msra.mxu0 0.0
      %760 = vmatprep.subr.mxu0 0.0
      %761 = vmatpush2.msra.mxu0 0.0
      %762 = vmatprep.subr.mxu0 0.0
      %763 = vmatpush2.msra.mxu0 0.0
      %764 = vmatprep.subr.mxu0 0.0
      %765 = vmatpush2.msra.mxu0 0.0
      %766 = vmatprep.subr.mxu0 0.0
      %767 = vmatpush2.msra.mxu0 0.0
      %768 = vmatprep.subr.mxu0 0.0
      %769 = vmatpush2.msra.mxu0 0.0
      %770 = vmatprep.subr.mxu0 0.0
      %771 = vmatpush2.msra.mxu0 0.0
      %772 = vmatprep.subr.mxu0 0.0
      %773 = vmatpush2.msra.mxu0 0.0
      %774 = vmatprep.subr.mxu0 0.0
      %775 = vmatpush2.msra.mxu0 0.0
      %776 = vmatprep.subr.mxu0 0.0
      %777 = vmatpush2.msra.mxu0 0.0
      %778 = vmatprep.subr.mxu0 0.0
      %779 = vmatpush2.msra.mxu0 0.0
      %780 = vmatprep.mubr.f32.mxu0 0.0
      %781 = vmatmul.mubr.f32.gmra.mxu0 %v711
      %v782 = vpop.f32.mrf.mxu0
      %v783 = vadd.f32 %v708, %v782
      %v784 = vpop.f32.mrf.mxu0
      %785 = vmatprep.mubr.f32.mxu0 0.0
      %786 = vmatmul.mubr.f32.gmra.mxu0 %v714
      %v787 = vpop.f32.mrf.mxu0
      %v788 = vadd.f32 %v708, %v787
      %v789 = vpop.f32.mrf.mxu0
      %790 = vdwg.mxu0
      %v791 = vtanh.pop %v783
      %v792 = vtanh.pop %v788
      %v793 = vmul.f32 %v783, 0.5
      %v794 = vmul.f32 %v788, 0.5
      %v795 = vtanh.pop %v793
      %v796 = vtanh.pop %v794
      %v797 = vmul.f32 %v795, 0.5
      %v798 = vmul.f32 %v796, 0.5
      %v799 = vadd.f32 %v797, 0.5
      %v800 = vadd.f32 %v798, 0.5
      %803 = vrot.lane.b32.xlu0 %v799, 120
      %v804 = vpop.permute.xlu0 %803
      %805 = vrot.lane.b32.xlu0 %v800, 120
      %v806 = vpop.permute.xlu0 %805
      %v809 = vmul.f32 %v791, %v804
      %v810 = vmul.f32 %v792, %v806
      %v811 = vadd.f32 %v809, %v464
      %v812 = vadd.f32 %v810, %v465
      %v813 = vmax.f32 %v811, 0.0
      %v814 = vmax.f32 %v812, 0.0
      %v815 = vld [vmem:[%s442] sm:$0xff]
      %v816 = vld [vmem:[%s442 + $0x8] sm:$0xff]
      %v817 = vadd.f32 %v815, %v809
      %v818 = vadd.f32 %v816, %v810
      %819 = vst.msk [vmem:[%s452] sm:$0xff] %vm466, %v813
      %820 = vst.msk [vmem:[%s452 + $0x8] sm:$0xff] %vm466, %v814
      %821 = vst.msk [vmem:[%s462] sm:$0xff] %vm466, %v817
      %822 = vst.msk [vmem:[%s462 + $0x8] sm:$0xff] %vm466, %v818
      %s823 = smul.u32 2, %s25
      %p824 = scmp.lt.s32.totalorder %s24, 1
      %s825 = scalar_select %p824, %s24, 1
      %p826 = scmp.lt.s32.totalorder %s823, 3
      %s827 = scalar_select %p826, %s823, 3
      %s828 = smul.addr %s825, 4
      %s829 = sadd.s32 %s827, %s828
      %s830 = smul.addr %s829, 8
      %s831 = scalar_lea.vmem %s7, %s830
      %s832 = smul.u32 2, %s25
      %p833 = scmp.lt.s32.totalorder %s24, 1
      %s834 = scalar_select %p833, %s24, 1
      %p835 = scmp.lt.s32.totalorder %s832, 3
      %s836 = scalar_select %p835, %s832, 3
      %s837 = smul.addr %s834, 4
      %s838 = sadd.s32 %s836, %s837
      %s839 = smul.addr %s838, 8
      %s840 = scalar_lea.vmem %s8, %s839
      // Predicated region
      $region49: #{shared_tcn_forward.4} parent=47 // pred_check
        %p841 = pneg %p228
      $region50: #{shared_tcn_forward.4} parent=47 // pred_check_branch
        %843 = sbr.rel (%p841) target = $region52
      $region51: #{shared_tcn_forward.4} parent=47 // pred_region
        %s844 = smul.u32 2, %s25
      $region52: #{shared_tcn_forward.4} parent=47 // pred_fallthru
        _
      // Predicated region
      $region53: #{shared_tcn_forward.4} parent=47 // pred_check
        %p845 = pneg %p256
      $region54: #{shared_tcn_forward.4} parent=47 // pred_check_branch
        %847 = sbr.rel (%p845) target = $region56
      $region55: #{shared_tcn_forward.4} parent=47 // pred_region
        %s848 = smul.u32 2, %s25
      $region56: #{shared_tcn_forward.4} parent=47 // pred_fallthru
        _
    $region48: #{shared_tcn_forward.4} parent=5 // pred_fallthru
      _
    %p849 = scmp.le.s32.totalorder 2, %s15
    // Predicated region
    $region57: #{shared_tcn_forward.4} parent=5 // pred_check
      %p850 = pneg %p849
    $region58: #{shared_tcn_forward.4} parent=5 // pred_check_branch
      %852 = sbr.rel (%p850) target = $region60
    $region59: #{shared_tcn_forward.4} parent=5 // pred_region
      %s853 = ssub.s32 %s15, 2
      // Predicated region
      $region61: #{shared_tcn_forward.4} parent=59 // pred_check
        %p854 = pneg %p234
      $region62: #{shared_tcn_forward.4} parent=59 // pred_check_branch
        %856 = sbr.rel (%p854) target = $region64
      $region63: #{shared_tcn_forward.4} parent=59 // pred_region
        %s857 = smul.u32 2, %s27
        %p858 = scmp.lt.s32.totalorder %s26, 1
        %s859 = scalar_select %p858, %s26, 1
        %p860 = scmp.lt.s32.totalorder %s857, 3
        %s861 = scalar_select %p860, %s857, 3
        %s862 = smul.addr %s859, 4
        %s863 = sadd.s32 %s861, %s862
        %s864 = smul.addr %s863, 8
        %s865 = scalar_lea.vmem %s7, %s864
      $region64: #{shared_tcn_forward.4} parent=59 // pred_fallthru
        _
      // Predicated region
      $region65: #{shared_tcn_forward.4} parent=59 // pred_check
        %p866 = pneg %p262
      $region66: #{shared_tcn_forward.4} parent=59 // pred_check_branch
        %868 = sbr.rel (%p866) target = $region68
      $region67: #{shared_tcn_forward.4} parent=59 // pred_region
        %s869 = smul.u32 2, %s27
        %p870 = scmp.lt.s32.totalorder %s26, 1
        %s871 = scalar_select %p870, %s26, 1
        %p872 = scmp.lt.s32.totalorder %s869, 3
        %s873 = scalar_select %p872, %s869, 3
        %s874 = smul.addr %s871, 4
        %s875 = sadd.s32 %s873, %s874
        %s876 = smul.addr %s875, 8
        %s877 = scalar_lea.vmem %s8, %s876
      $region68: #{shared_tcn_forward.4} parent=59 // pred_fallthru
        _
    $region60: #{shared_tcn_forward.4} parent=5 // pred_fallthru
      _
  $region6: #{shared_tcn_forward.4} parent=0 // loop_footer
    %s19 = sadd.s32 1, %s15
  $region7: #{shared_tcn_forward.4} parent=0 // loop_footer_branch
    %14 = sbr.rel target = $region3
  $region8: #{shared_tcn_forward.4} parent=0 // loop_exit
    _

// kernel: shared_tcn_forward.3
$region0: #{shared_tcn_forward.3}
  #allocation0 [shape = 'u32[]', space=smem, size = 0x4, offset = 0x4, fixed_abs, tag = 'smem constant byte address 0x4 - core index']
  #allocation1 [shape = 'u32[144,128]{1,0:T(1,128)}', space=vmem, size = 0x12000, scoped, tag = 'internal scratch']
  #allocation2 [shape = 'f32[24,4]{1,0:T(8,128)}', space=vmem, size = 0x3000, scoped, tag = 'scratch operand']
  %s0 = inlined_call_operand.vmem [shape: f32[2,32,4], index: 0, kind: input, shape index: {}, may-alias: {0,1}]
  %s1 = inlined_call_operand.vmem [shape: f32[2,32,4], index: 1, kind: input, shape index: {}, may-alias: {0,1}]
  %s2 = inlined_call_operand.vmem [shape: f32[12,16], index: 2, kind: input, shape index: {}]
  %s3 = inlined_call_operand.vmem [shape: f32[1,16], index: 3, kind: input, shape index: {}]
  %s4 = inlined_call_operand.vmem [shape: f32[24,16], index: 4, kind: input, shape index: {}]
  %s5 = inlined_call_operand.vmem [shape: f32[1,16], index: 5, kind: input, shape index: {}]
  %s6 = inlined_call_operand.vmem [shape: f32[4,8], index: 6, kind: input, shape index: {}]
  %s7 = inlined_call_operand.vmem [shape: f32[1,8], index: 7, kind: input, shape index: {}]
  %s8 = inlined_call_operand.vmem [shape: f32[2,32,8], index: 8, kind: output, shape index: {0}]
  %s9 = inlined_call_operand.vmem [shape: f32[2,32,8], index: 9, kind: output, shape index: {1}]
  %10 = xla_tuple %s8, %s9
  %s11 = sld [smem:[#allocation0]]
  $region73: #{shared_tcn_forward.3} parent=0
    _
  %s13 = ssub.s32 1, %s11
  %s14 = scalar_select 0, %s13, %s11
  loop: start=0, step=1, limit=6
  $region2: #{shared_tcn_forward.3} parent=0 // loop_pre_header
    _
  $region3: #{shared_tcn_forward.3} parent=0 // loop_header
    %s16 = sphi 0, %s20
    %p17 = scmp.ge.s32.totalorder %s16, 6
    %s23 = sphi 0, %s35
    %s24 = sphi 0, %s31
    %s25 = sphi 0, %s23
    %s26 = sphi 0, %s24
    %s27 = sphi 0, %s25
    %s28 = sphi 0, %s26
    %s40 = sphi 0, %s42
    %s43 = sphi 0, %s40
    %s44 = sphi 0, %s43
    %s60 = sphi 0, %s44
    %s76 = sphi 0, %s78
    %s79 = sphi 0, %s76
    %s80 = sphi 0, %s79
    %s96 = sphi 0, %s80
    %s100 = sphi 0, %s100
    %s102 = sphi 0, %s100
    %s103 = sphi 0, %s102
    %s117 = sphi 0, %s103
    %s121 = sphi 0, %s121
    %s123 = sphi 0, %s121
    %s124 = sphi 0, %s123
    %s138 = sphi 0, %s124
    %s142 = sphi 0, %s142
    %s144 = sphi 0, %s142
    %s145 = sphi 0, %s144
    %s159 = sphi 0, %s145
    %s163 = sphi 0, %s163
    %s165 = sphi 0, %s163
    %s166 = sphi 0, %s165
    %s180 = sphi 0, %s166
    %s184 = sphi 0, %s184
    %s186 = sphi 0, %s184
    %s187 = sphi 0, %s186
    %s201 = sphi 0, %s187
    %s205 = sphi 0, %s205
    %s207 = sphi 0, %s205
    %s208 = sphi 0, %s207
    %s222 = sphi 0, %s208
    %s230 = sphi 0, %s232
    %s233 = sphi 0, %s230
    %s234 = sphi 0, %s233
    %s250 = sphi 0, %s234
    %s258 = sphi 0, %s260
    %s261 = sphi 0, %s258
    %s262 = sphi 0, %s261
    %s278 = sphi 0, %s262
  $region4: #{shared_tcn_forward.3} parent=0 // loop_header_branch
    %19 = sbr.rel (%p17) target = $region8
  $region5: #{shared_tcn_forward.3} parent=0 // loop_body
    %s21 = ssub.s32 %s16, 1
    %s22 = ssub.s32 %s16, 2
    %s29 = sadd.s32 1, %s24
    %p30 = scmp.ge.s32.totalorder %s29, 2
    %s31 = scalar_select %p30, 0, %s29
    %s32 = sadd.s32 1, %s23
    %s33 = scalar_select %p30, %s32, %s23
    %p34 = scmp.ge.s32.totalorder %s33, 2
    %s35 = scalar_select %p34, 0, %s33
    %s36 = ssub.s32 %s23, %s35
    %s37 = ssub.s32 %s24, %s31
    %s38 = sor.u32 %s36, %s37
    %p39 = scmp.eq.s32.totalorder %s38, 0
    %s41 = sadd.s32 %s40, 1
    %s42 = scalar_select %p39, %s40, %s41
    %p45 = pneg %p39
    %p46 = scmp.eq.s32.totalorder %s16, 3
    %p47 = por %p45, %p46
    %p48 = scmp.ne.s32.totalorder %s40, %s43
    %p49 = scmp.eq.s32.totalorder %s16, 0
    %p50 = por %p48, %p49
    %p51 = scmp.ne.s32.totalorder %s40, %s43
    %p52 = scmp.eq.s32.totalorder %s21, 3
    %p53 = por %p51, %p52
    %p54 = scmp.ne.s32.totalorder %s43, %s44
    %p55 = scmp.eq.s32.totalorder %s21, 0
    %p56 = por %p54, %p55
    %p57 = scmp.ne.s32.totalorder %s43, %s44
    %p58 = scmp.eq.s32.totalorder %s22, 3
    %p59 = por %p57, %p58
    %p61 = scmp.ne.s32.totalorder %s44, %s60
    %p62 = scmp.eq.s32.totalorder %s22, 0
    %p63 = por %p61, %p62
    %s64 = smul.u32 %s24, 2
    %s65 = ssub.s32 %s64, 1
    %p66 = scmp.gt.s32.totalorder %s65, 0
    %s67 = scalar_select %p66, %s65, 0
    %s68 = smul.u32 %s31, 2
    %s69 = ssub.s32 %s68, 1
    %p70 = scmp.gt.s32.totalorder %s69, 0
    %s71 = scalar_select %p70, %s69, 0
    %s72 = ssub.s32 %s23, %s35
    %s73 = ssub.s32 %s67, %s71
    %s74 = sor.u32 %s72, %s73
    %p75 = scmp.eq.s32.totalorder %s74, 0
    %s77 = sadd.s32 %s76, 1
    %s78 = scalar_select %p75, %s76, %s77
    %p81 = pneg %p75
    %p82 = scmp.eq.s32.totalorder %s16, 3
    %p83 = por %p81, %p82
    %p84 = scmp.ne.s32.totalorder %s76, %s79
    %p85 = scmp.eq.s32.totalorder %s16, 0
    %p86 = por %p84, %p85
    %p87 = scmp.ne.s32.totalorder %s76, %s79
    %p88 = scmp.eq.s32.totalorder %s21, 3
    %p89 = por %p87, %p88
    %p90 = scmp.ne.s32.totalorder %s79, %s80
    %p91 = scmp.eq.s32.totalorder %s21, 0
    %p92 = por %p90, %p91
    %p93 = scmp.ne.s32.totalorder %s79, %s80
    %p94 = scmp.eq.s32.totalorder %s22, 3
    %p95 = por %p93, %p94
    %p97 = scmp.ne.s32.totalorder %s80, %s96
    %p98 = scmp.eq.s32.totalorder %s22, 0
    %p99 = por %p97, %p98
    %s101 = sadd.s32 %s100, 1
    %p104 = scmp.eq.s32.totalorder %s16, 3
    %p105 = scmp.ne.s32.totalorder %s100, %s102
    %p106 = scmp.eq.s32.totalorder %s16, 0
    %p107 = por %p105, %p106
    %p108 = scmp.ne.s32.totalorder %s100, %s102
    %p109 = scmp.eq.s32.totalorder %s21, 3
    %p110 = por %p108, %p109
    %p111 = scmp.ne.s32.totalorder %s102, %s103
    %p112 = scmp.eq.s32.totalorder %s21, 0
    %p113 = por %p111, %p112
    %p114 = scmp.ne.s32.totalorder %s102, %s103
    %p115 = scmp.eq.s32.totalorder %s22, 3
    %p116 = por %p114, %p115
    %p118 = scmp.ne.s32.totalorder %s103, %s117
    %p119 = scmp.eq.s32.totalorder %s22, 0
    %p120 = por %p118, %p119
    %s122 = sadd.s32 %s121, 1
    %p125 = scmp.eq.s32.totalorder %s16, 3
    %p126 = scmp.ne.s32.totalorder %s121, %s123
    %p127 = scmp.eq.s32.totalorder %s16, 0
    %p128 = por %p126, %p127
    %p129 = scmp.ne.s32.totalorder %s121, %s123
    %p130 = scmp.eq.s32.totalorder %s21, 3
    %p131 = por %p129, %p130
    %p132 = scmp.ne.s32.totalorder %s123, %s124
    %p133 = scmp.eq.s32.totalorder %s21, 0
    %p134 = por %p132, %p133
    %p135 = scmp.ne.s32.totalorder %s123, %s124
    %p136 = scmp.eq.s32.totalorder %s22, 3
    %p137 = por %p135, %p136
    %p139 = scmp.ne.s32.totalorder %s124, %s138
    %p140 = scmp.eq.s32.totalorder %s22, 0
    %p141 = por %p139, %p140
    %s143 = sadd.s32 %s142, 1
    %p146 = scmp.eq.s32.totalorder %s16, 3
    %p147 = scmp.ne.s32.totalorder %s142, %s144
    %p148 = scmp.eq.s32.totalorder %s16, 0
    %p149 = por %p147, %p148
    %p150 = scmp.ne.s32.totalorder %s142, %s144
    %p151 = scmp.eq.s32.totalorder %s21, 3
    %p152 = por %p150, %p151
    %p153 = scmp.ne.s32.totalorder %s144, %s145
    %p154 = scmp.eq.s32.totalorder %s21, 0
    %p155 = por %p153, %p154
    %p156 = scmp.ne.s32.totalorder %s144, %s145
    %p157 = scmp.eq.s32.totalorder %s22, 3
    %p158 = por %p156, %p157
    %p160 = scmp.ne.s32.totalorder %s145, %s159
    %p161 = scmp.eq.s32.totalorder %s22, 0
    %p162 = por %p160, %p161
    %s164 = sadd.s32 %s163, 1
    %p167 = scmp.eq.s32.totalorder %s16, 3
    %p168 = scmp.ne.s32.totalorder %s163, %s165
    %p169 = scmp.eq.s32.totalorder %s16, 0
    %p170 = por %p168, %p169
    %p171 = scmp.ne.s32.totalorder %s163, %s165
    %p172 = scmp.eq.s32.totalorder %s21, 3
    %p173 = por %p171, %p172
    %p174 = scmp.ne.s32.totalorder %s165, %s166
    %p175 = scmp.eq.s32.totalorder %s21, 0
    %p176 = por %p174, %p175
    %p177 = scmp.ne.s32.totalorder %s165, %s166
    %p178 = scmp.eq.s32.totalorder %s22, 3
    %p179 = por %p177, %p178
    %p181 = scmp.ne.s32.totalorder %s166, %s180
    %p182 = scmp.eq.s32.totalorder %s22, 0
    %p183 = por %p181, %p182
    %s185 = sadd.s32 %s184, 1
    %p188 = scmp.eq.s32.totalorder %s16, 3
    %p189 = scmp.ne.s32.totalorder %s184, %s186
    %p190 = scmp.eq.s32.totalorder %s16, 0
    %p191 = por %p189, %p190
    %p192 = scmp.ne.s32.totalorder %s184, %s186
    %p193 = scmp.eq.s32.totalorder %s21, 3
    %p194 = por %p192, %p193
    %p195 = scmp.ne.s32.totalorder %s186, %s187
    %p196 = scmp.eq.s32.totalorder %s21, 0
    %p197 = por %p195, %p196
    %p198 = scmp.ne.s32.totalorder %s186, %s187
    %p199 = scmp.eq.s32.totalorder %s22, 3
    %p200 = por %p198, %p199
    %p202 = scmp.ne.s32.totalorder %s187, %s201
    %p203 = scmp.eq.s32.totalorder %s22, 0
    %p204 = por %p202, %p203
    %s206 = sadd.s32 %s205, 1
    %p209 = scmp.eq.s32.totalorder %s16, 3
    %p210 = scmp.ne.s32.totalorder %s205, %s207
    %p211 = scmp.eq.s32.totalorder %s16, 0
    %p212 = por %p210, %p211
    %p213 = scmp.ne.s32.totalorder %s205, %s207
    %p214 = scmp.eq.s32.totalorder %s21, 3
    %p215 = por %p213, %p214
    %p216 = scmp.ne.s32.totalorder %s207, %s208
    %p217 = scmp.eq.s32.totalorder %s21, 0
    %p218 = por %p216, %p217
    %p219 = scmp.ne.s32.totalorder %s207, %s208
    %p220 = scmp.eq.s32.totalorder %s22, 3
    %p221 = por %p219, %p220
    %p223 = scmp.ne.s32.totalorder %s208, %s222
    %p224 = scmp.eq.s32.totalorder %s22, 0
    %p225 = por %p223, %p224
    %s226 = ssub.s32 %s23, %s35
    %s227 = ssub.s32 %s24, %s31
    %s228 = sor.u32 %s226, %s227
    %p229 = scmp.eq.s32.totalorder %s228, 0
    %s231 = sadd.s32 %s230, 1
    %s232 = scalar_select %p229, %s230, %s231
    %p235 = pneg %p229
    %p236 = scmp.eq.s32.totalorder %s16, 3
    %p237 = por %p235, %p236
    %p238 = scmp.ne.s32.totalorder %s230, %s233
    %p239 = scmp.eq.s32.totalorder %s16, 0
    %p240 = por %p238, %p239
    %p241 = scmp.ne.s32.totalorder %s230, %s233
    %p242 = scmp.eq.s32.totalorder %s21, 3
    %p243 = por %p241, %p242
    %p244 = scmp.ne.s32.totalorder %s233, %s234
    %p245 = scmp.eq.s32.totalorder %s21, 0
    %p246 = por %p244, %p245
    %p247 = scmp.ne.s32.totalorder %s233, %s234
    %p248 = scmp.eq.s32.totalorder %s22, 3
    %p249 = por %p247, %p248
    %p251 = scmp.ne.s32.totalorder %s234, %s250
    %p252 = scmp.eq.s32.totalorder %s22, 0
    %p253 = por %p251, %p252
    %s254 = ssub.s32 %s23, %s35
    %s255 = ssub.s32 %s24, %s31
    %s256 = sor.u32 %s254, %s255
    %p257 = scmp.eq.s32.totalorder %s256, 0
    %s259 = sadd.s32 %s258, 1
    %s260 = scalar_select %p257, %s258, %s259
    %p263 = pneg %p257
    %p264 = scmp.eq.s32.totalorder %s16, 3
    %p265 = por %p263, %p264
    %p266 = scmp.ne.s32.totalorder %s258, %s261
    %p267 = scmp.eq.s32.totalorder %s16, 0
    %p268 = por %p266, %p267
    %p269 = scmp.ne.s32.totalorder %s258, %s261
    %p270 = scmp.eq.s32.totalorder %s21, 3
    %p271 = por %p269, %p270
    %p272 = scmp.ne.s32.totalorder %s261, %s262
    %p273 = scmp.eq.s32.totalorder %s21, 0
    %p274 = por %p272, %p273
    %p275 = scmp.ne.s32.totalorder %s261, %s262
    %p276 = scmp.eq.s32.totalorder %s22, 3
    %p277 = por %p275, %p276
    %p279 = scmp.ne.s32.totalorder %s262, %s278
    %p280 = scmp.eq.s32.totalorder %s22, 0
    %p281 = por %p279, %p280
    %p282 = scmp.le.s32.totalorder 1, %s16
    %p283 = scmp.lt.s32.totalorder %s16, 5
    %p284 = pnand %p282, %p283
    %p285 = pneg %p284
    // Predicated region
    $region9: #{shared_tcn_forward.3} parent=5 // pred_check
      _
    $region10: #{shared_tcn_forward.3} parent=5 // pred_check_branch
      %287 = sbr.rel (%p284) target = $region12
    $region11: #{shared_tcn_forward.3} parent=5 // pred_region
      %s288 = ssub.s32 %s16, 1
      // Predicated region
      $region13: #{shared_tcn_forward.3} parent=11 // pred_check
        %p289 = pneg %p113
      $region14: #{shared_tcn_forward.3} parent=11 // pred_check_branch
        %291 = sbr.rel (%p289) target = $region16
      $region15: #{shared_tcn_forward.3} parent=11 // pred_region
        _
      $region16: #{shared_tcn_forward.3} parent=11 // pred_fallthru
        _
      // Predicated region
      $region17: #{shared_tcn_forward.3} parent=11 // pred_check
        %p292 = pneg %p134
      $region18: #{shared_tcn_forward.3} parent=11 // pred_check_branch
        %294 = sbr.rel (%p292) target = $region20
      $region19: #{shared_tcn_forward.3} parent=11 // pred_region
        _
      $region20: #{shared_tcn_forward.3} parent=11 // pred_fallthru
        _
      // Predicated region
      $region21: #{shared_tcn_forward.3} parent=11 // pred_check
        %p295 = pneg %p155
      $region22: #{shared_tcn_forward.3} parent=11 // pred_check_branch
        %297 = sbr.rel (%p295) target = $region24
      $region23: #{shared_tcn_forward.3} parent=11 // pred_region
        _
      $region24: #{shared_tcn_forward.3} parent=11 // pred_fallthru
        _
      // Predicated region
      $region25: #{shared_tcn_forward.3} parent=11 // pred_check
        %p298 = pneg %p176
      $region26: #{shared_tcn_forward.3} parent=11 // pred_check_branch
        %300 = sbr.rel (%p298) target = $region28
      $region27: #{shared_tcn_forward.3} parent=11 // pred_region
        _
      $region28: #{shared_tcn_forward.3} parent=11 // pred_fallthru
        _
      // Predicated region
      $region29: #{shared_tcn_forward.3} parent=11 // pred_check
        %p301 = pneg %p197
      $region30: #{shared_tcn_forward.3} parent=11 // pred_check_branch
        %303 = sbr.rel (%p301) target = $region32
      $region31: #{shared_tcn_forward.3} parent=11 // pred_region
        _
      $region32: #{shared_tcn_forward.3} parent=11 // pred_fallthru
        _
      // Predicated region
      $region33: #{shared_tcn_forward.3} parent=11 // pred_check
        %p304 = pneg %p218
      $region34: #{shared_tcn_forward.3} parent=11 // pred_check_branch
        %306 = sbr.rel (%p304) target = $region36
      $region35: #{shared_tcn_forward.3} parent=11 // pred_region
        _
      $region36: #{shared_tcn_forward.3} parent=11 // pred_fallthru
        _
    $region12: #{shared_tcn_forward.3} parent=5 // pred_fallthru
      _
    %p307 = scmp.lt.s32.totalorder %s16, 4
    // Predicated region
    $region37: #{shared_tcn_forward.3} parent=5 // pred_check
      %p308 = pneg %p307
    $region38: #{shared_tcn_forward.3} parent=5 // pred_check_branch
      %310 = sbr.rel (%p308) target = $region40
    $region39: #{shared_tcn_forward.3} parent=5 // pred_region
      // Predicated region
      $region41: #{shared_tcn_forward.3} parent=39 // pred_check
        %p311 = pneg %p50
      $region42: #{shared_tcn_forward.3} parent=39 // pred_check_branch
        %313 = sbr.rel (%p311) target = $region44
      $region43: #{shared_tcn_forward.3} parent=39 // pred_region
        %s314 = smul.u32 2, %s24
        %p315 = scmp.lt.s32.totalorder %s23, 1
        %s316 = scalar_select %p315, %s23, 1
        %p317 = scmp.lt.s32.totalorder %s314, 3
        %s318 = scalar_select %p317, %s314, 3
        %s319 = smul.addr %s316, 4
        %s320 = sadd.s32 %s318, %s319
        %s321 = smul.addr %s320, 8
        %s322 = scalar_lea.vmem %s0, %s321
        %s323 = smul.u32 2, %s24
      $region44: #{shared_tcn_forward.3} parent=39 // pred_fallthru
        _
      // Predicated region
      $region45: #{shared_tcn_forward.3} parent=39 // pred_check
        %p324 = pneg %p86
      $region46: #{shared_tcn_forward.3} parent=39 // pred_check_branch
        %326 = sbr.rel (%p324) target = $region48
      $region47: #{shared_tcn_forward.3} parent=39 // pred_region
        %s327 = smul.u32 %s24, 2
        %s328 = ssub.s32 %s327, 1
        %p329 = scmp.gt.s32.totalorder %s328, 0
        %s330 = scalar_select %p329, %s328, 0
        %p331 = scmp.lt.s32.totalorder %s23, 1
        %s332 = scalar_select %p331, %s23, 1
        %p333 = scmp.lt.s32.totalorder %s330, 3
        %s334 = scalar_select %p333, %s330, 3
        %s335 = smul.addr %s332, 4
        %s336 = sadd.s32 %s334, %s335
        %s337 = smul.addr %s336, 8
        %s338 = scalar_lea.vmem %s1, %s337
        %s339 = smul.u32 %s24, 2
        %s340 = ssub.s32 %s339, 1
        %p341 = scmp.gt.s32.totalorder %s340, 0
        %s342 = scalar_select %p341, %s340, 0
      $region48: #{shared_tcn_forward.3} parent=39 // pred_fallthru
        _
    $region40: #{shared_tcn_forward.3} parent=5 // pred_fallthru
      _
    %p343 = scmp.le.s32.totalorder 1, %s16
    %p344 = scmp.lt.s32.totalorder %s16, 5
    %p345 = pnand %p343, %p344
    %p346 = pneg %p345
    // Predicated region
    $region49: #{shared_tcn_forward.3} parent=5 // pred_check
      _
    $region50: #{shared_tcn_forward.3} parent=5 // pred_check_branch
      %348 = sbr.rel (%p345) target = $region52
    $region51: #{shared_tcn_forward.3} parent=5 // pred_region
      %s349 = ssub.s32 %s16, 1
      %s350 = smul.u32 2, %s26
      %p351 = scmp.lt.s32.totalorder %s25, 1
      %s352 = scalar_select %p351, %s25, 1
      %p353 = scmp.lt.s32.totalorder %s350, 3
      %s354 = scalar_select %p353, %s350, 3
      %s355 = smul.addr %s352, 4
      %s356 = sadd.s32 %s354, %s355
      %s357 = smul.addr %s356, 8
      %s358 = scalar_lea.vmem %s0, %s357
      %p359 = pneg %p56
      %p360 = pneg %p53
      %s361 = smul.u32 %s26, 2
      %s362 = ssub.s32 %s361, 1
      %p363 = scmp.gt.s32.totalorder %s362, 0
      %s364 = scalar_select %p363, %s362, 0
      %p365 = scmp.lt.s32.totalorder %s25, 1
      %s366 = scalar_select %p365, %s25, 1
      %p367 = scmp.lt.s32.totalorder %s364, 3
      %s368 = scalar_select %p367, %s364, 3
      %s369 = smul.addr %s366, 4
      %s370 = sadd.s32 %s368, %s369
      %s371 = smul.addr %s370, 8
      %s372 = scalar_lea.vmem %s1, %s371
      %p373 = pneg %p92
      %p374 = pneg %p89
      %p375 = pneg %p113
      %p376 = pneg %p110
      %p377 = pneg %p134
      %p378 = pneg %p131
      %p379 = pneg %p155
      %p380 = pneg %p152
      %p381 = pneg %p176
      %p382 = pneg %p173
      %p383 = pneg %p197
      %p384 = pneg %p194
      %p385 = pneg %p218
      %p386 = pneg %p215
      %p387 = pneg %p246
      %p388 = pneg %p243
      %s389 = smul.u32 2, %s26
      %p390 = scmp.lt.s32.totalorder %s25, 1
      %s391 = scalar_select %p390, %s25, 1
      %p392 = scmp.lt.s32.totalorder %s389, 3
      %s393 = scalar_select %p392, %s389, 3
      %s394 = smul.addr %s391, 4
      %s395 = sadd.s32 %s393, %s394
      %s396 = smul.addr %s395, 8
      %s397 = scalar_lea.vmem %s8, %s396
      %p398 = pneg %p274
      %p399 = pneg %p271
      %s400 = smul.u32 2, %s26
      %p401 = scmp.lt.s32.totalorder %s25, 1
      %s402 = scalar_select %p401, %s25, 1
      %p403 = scmp.lt.s32.totalorder %s400, 3
      %s404 = scalar_select %p403, %s400, 3
      %s405 = smul.addr %s402, 4
      %s406 = sadd.s32 %s404, %s405
      %s407 = smul.addr %s406, 8
      %s408 = scalar_lea.vmem %s9, %s407
      %s409 = smul.u32 2, %s26
      %p410 = scmp.lt.s32.totalorder %s25, 1
      %s411 = scalar_select %p410, %s25, 1
      %p412 = scmp.lt.s32.totalorder %s409, 3
      %s413 = scalar_select %p412, %s409, 3
      %s414 = smul.addr %s411, 4
      %s415 = sadd.s32 %s413, %s414
      %s416 = smul.addr %s415, 8
      %s417 = scalar_lea.vmem %s0, %s416
      %s418 = smul.u32 2, %s26
      %s419 = smul.u32 %s26, 2
      %s420 = ssub.s32 %s419, 1
      %p421 = scmp.gt.s32.totalorder %s420, 0
      %s422 = scalar_select %p421, %s420, 0
      %p423 = scmp.lt.s32.totalorder %s25, 1
      %s424 = scalar_select %p423, %s25, 1
      %p425 = scmp.lt.s32.totalorder %s422, 3
      %s426 = scalar_select %p425, %s422, 3
      %s427 = smul.addr %s424, 4
      %s428 = sadd.s32 %s426, %s427
      %s429 = smul.addr %s428, 8
      %s430 = scalar_lea.vmem %s1, %s429
      %s431 = smul.u32 %s26, 2
      %s432 = ssub.s32 %s431, 1
      %p433 = scmp.gt.s32.totalorder %s432, 0
      %s434 = scalar_select %p433, %s432, 0
      %s435 = smul.u32 2, %s26
      %p436 = scmp.lt.s32.totalorder %s25, 1
      %s437 = scalar_select %p436, %s25, 1
      %p438 = scmp.lt.s32.totalorder %s435, 3
      %s439 = scalar_select %p438, %s435, 3
      %s440 = smul.addr %s437, 4
      %s441 = sadd.s32 %s439, %s440
      %s442 = smul.addr %s441, 8
      %s443 = scalar_lea.vmem %s8, %s442
      %s444 = smul.u32 2, %s26
      %s445 = smul.u32 2, %s26
      %p446 = scmp.lt.s32.totalorder %s25, 1
      %s447 = scalar_select %p446, %s25, 1
      %p448 = scmp.lt.s32.totalorder %s445, 3
      %s449 = scalar_select %p448, %s445, 3
      %s450 = smul.addr %s447, 4
      %s451 = sadd.s32 %s449, %s450
      %s452 = smul.addr %s451, 8
      %s453 = scalar_lea.vmem %s9, %s452
      %s454 = smul.u32 2, %s26
      %v455 = vld [vmem:[%s417] sm:$0xff]
      %v456 = vld [vmem:[%s417 + $0x8] sm:$0xff]
      %vm457 = vcmask 31744
      %458 = vst.msk [vmem:[#allocation2 + $0x8] sm:$0xff] %vm457, %v455
      %459 = vst.msk [vmem:[#allocation2 + $0x10] sm:$0xff] %vm457, %v456
      %v460 = vld [vmem:[%s430] sm:$0xff]
      %p461 = scmp.gt.s32.totalorder %s26, 0
      %s462 = scalar_select %p461, 1, 0
      %v463 = vstv %s462
      %vm464 = vcmp.eq.s32.totalorder %v463, 1
      %v465 = vsel %vm464, %v460, 0.0
      %466 = vst.msk [vmem:[#allocation2] sm:$0xff] %vm457, %v465
      %v467 = vld [vmem:[#allocation2 + $0x4] sm:$0xff]
      %v468 = vld [vmem:[#allocation2 + $0xc] sm:$0xff]
      %v469 = vld [vmem:[#allocation2 + $0x14] sm:$0x3]
      %v470 = vld [vmem:[#allocation2 + $0x5] sm:$0xff]
      %v471 = vld [vmem:[#allocation2 + $0xd] sm:$0xff]
      %v472 = vld [vmem:[#allocation2 + $0x15] sm:$0x3]
      %v473 = vld [vmem:[#allocation2 + $0x6] sm:$0xff]
      %v474 = vld [vmem:[#allocation2 + $0xe] sm:$0xff]
      %v475 = vld [vmem:[#allocation2 + $0x16] sm:$0x3]
      %479 = vrot.lane.b32.xlu0 %v470, 4
      %v480 = vpop.permute.xlu0 %479
      %481 = vrot.lane.b32.xlu0 %v471, 4
      %v482 = vpop.permute.xlu0 %481
      %483 = vrot.lane.b32.xlu0 %v472, 4
      %v484 = vpop.permute.xlu0 %483
      %491 = vrot.lane.b32.xlu0 %v473, 8
      %v492 = vpop.permute.xlu0 %491
      %493 = vrot.lane.b32.xlu0 %v474, 8
      %v494 = vpop.permute.xlu0 %493
      %495 = vrot.lane.b32.xlu0 %v475, 8
      %v496 = vpop.permute.xlu0 %495
      %v500 = vsel %vm457, %v467, %v480
      %v501 = vsel %vm457, %v468, %v482
      %v502 = vsel %vm457, %v469, %v484
      %vm503 = vcmask 64512
      %v504 = vsel %vm503, %v500, %v492
      %v505 = vsel %vm503, %v501, %v494
      %v506 = vsel %vm503, %v502, %v496
      %v507 = vld [vmem:[%s2] sm:$0xff]
      %v508 = vld [vmem:[%s2 + $0x8] sm:$0xf]
      %v509 = vld [vmem:[%s3] sm:$0x1]
      %v511 = vlaneseq
      %v512 = vshrl.u32 %v511, 7
      %v513 = vsub.s32 0, %v512
      %v514 = vrot.slane %v509, %v513
      %vm516 = vcmask 97280
      %v518 = vsel %vm516, %v504, 0
      %v521 = vsel %vm516, %v505, 0
      %v524 = vsel %vm516, %v506, 0
      %vm526 = vcmask 1043456
      %v528 = vsel %vm526, %v508, 0
      %530 = vmatprep.subr.mxu0 0.0
      %531 = vmatpush1.msra.mxu0 0.0
      %532 = vmatprep.subr.mxu0 0.0
      %533 = vmatpush1.msra.mxu0 0.0
      %534 = vmatprep.subr.mxu0 0.0
      %535 = vmatpush1.msra.mxu0 0.0
      %536 = vmatprep.subr.mxu0 0.0
      %537 = vmatpush1.msra.mxu0 0.0
      %538 = vmatprep.subr.mxu0 0.0
      %539 = vmatpush1.msra.mxu0 0.0
      %540 = vmatprep.subr.mxu0 0.0
      %541 = vmatpush1.msra.mxu0 0.0
      %542 = vmatprep.subr.mxu0 0.0
      %543 = vmatpush1.msra.mxu0 0.0
      %544 = vmatprep.subr.mxu0 0.0
      %545 = vmatpush1.msra.mxu0 0.0
      %546 = vmatprep.subr.mxu0 0.0
      %547 = vmatpush1.msra.mxu0 0.0
      %548 = vmatprep.subr.mxu0 0.0
      %549 = vmatpush1.msra.mxu0 0.0
      %550 = vmatprep.subr.mxu0 0.0
      %551 = vmatpush1.msra.mxu0 0.0
      %552 = vmatprep.subr.mxu0 0.0
      %553 = vmatpush1.msra.mxu0 0.0
      %554 = vmatprep.subr.mxu0 0.0
      %555 = vmatpush1.msra.mxu0 0.0
      %556 = vmatprep.subr.mxu0 0.0
      %557 = vmatpush1.msra.mxu0 0.0
      %558 = vmatprep.subr.mxu0 0.0
      %559 = vmatpush1.msra.mxu0 %v528
      %560 = vmatprep.subr.mxu0 0.0
      %561 = vmatpush1.msra.mxu0 %v507
      %562 = vmatprep.subr.mxu0 0.0
      %563 = vmatpush2.msra.mxu0 0.0
      %564 = vmatprep.subr.mxu0 0.0
      %565 = vmatpush2.msra.mxu0 0.0
      %566 = vmatprep.subr.mxu0 0.0
      %567 = vmatpush2.msra.mxu0 0.0
      %568 = vmatprep.subr.mxu0 0.0
      %569 = vmatpush2.msra.mxu0 0.0
      %570 = vmatprep.subr.mxu0 0.0
      %571 = vmatpush2.msra.mxu0 0.0
      %572 = vmatprep.subr.mxu0 0.0
      %573 = vmatpush2.msra.mxu0 0.0
      %574 = vmatprep.subr.mxu0 0.0
      %575 = vmatpush2.msra.mxu0 0.0
      %576 = vmatprep.subr.mxu0 0.0
      %577 = vmatpush2.msra.mxu0 0.0
      %578 = vmatprep.subr.mxu0 0.0
      %579 = vmatpush2.msra.mxu0 0.0
      %580 = vmatprep.subr.mxu0 0.0
      %581 = vmatpush2.msra.mxu0 0.0
      %582 = vmatprep.subr.mxu0 0.0
      %583 = vmatpush2.msra.mxu0 0.0
      %584 = vmatprep.subr.mxu0 0.0
      %585 = vmatpush2.msra.mxu0 0.0
      %586 = vmatprep.subr.mxu0 0.0
      %587 = vmatpush2.msra.mxu0 0.0
      %588 = vmatprep.subr.mxu0 0.0
      %589 = vmatpush2.msra.mxu0 0.0
      %590 = vmatprep.subr.mxu0 0.0
      %591 = vmatpush2.msra.mxu0 0.0
      %592 = vmatprep.subr.mxu0 0.0
      %593 = vmatpush2.msra.mxu0 0.0
      %594 = vmatprep.mubr.f32.mxu0 0.0
      %595 = vmatmul.mubr.f32.gmra.mxu0 %v518
      %v596 = vpop.f32.mrf.mxu0
      %v597 = vadd.f32 %v514, %v596
      %v598 = vpop.f32.mrf.mxu0
      %599 = vmatprep.mubr.f32.mxu0 0.0
      %600 = vmatmul.mubr.f32.gmra.mxu0 %v521
      %v601 = vpop.f32.mrf.mxu0
      %v602 = vadd.f32 %v514, %v601
      %v603 = vpop.f32.mrf.mxu0
      %604 = vmatprep.mubr.f32.mxu0 0.0
      %605 = vmatmul.mubr.f32.gmra.mxu0 %v524
      %v606 = vpop.f32.mrf.mxu0
      %v607 = vadd.f32 %v514, %v606
      %v608 = vpop.f32.mrf.mxu0
      %609 = vdwg.mxu0
      %v610 = vtanh.pop %v597
      %v611 = vtanh.pop %v602
      %v612 = vtanh.pop %v607
      %v613 = vmul.f32 %v597, 0.5
      %v614 = vmul.f32 %v602, 0.5
      %v615 = vmul.f32 %v607, 0.5
      %v616 = vtanh.pop %v613
      %v617 = vtanh.pop %v614
      %v618 = vtanh.pop %v615
      %v619 = vmul.f32 %v616, 0.5
      %v620 = vmul.f32 %v617, 0.5
      %v621 = vmul.f32 %v618, 0.5
      %v622 = vadd.f32 %v619, 0.5
      %v623 = vadd.f32 %v620, 0.5
      %v624 = vadd.f32 %v621, 0.5
      %628 = vrot.lane.b32.xlu0 %v622, 120
      %v629 = vpop.permute.xlu0 %628
      %630 = vrot.lane.b32.xlu0 %v623, 120
      %v631 = vpop.permute.xlu0 %630
      %632 = vrot.lane.b32.xlu0 %v624, 120
      %v633 = vpop.permute.xlu0 %632
      %v637 = vmul.f32 %v610, %v629
      %v638 = vmul.f32 %v611, %v631
      %v639 = vmul.f32 %v612, %v633
      %v640 = vlaneseq
      %v641 = vshrl.u32 %v640, 7
      %v642 = vadd.s32 %v641, 8
      %v643 = vadd.s32 %v641, 16
      %p644 = scmp.eq.s32.totalorder %s26, 0
      %vm645 = vcmp.lt.s32.totalorder %v641, 2
      %vm646 = vcmp.lt.s32.totalorder %v642, 2
      %vm647 = vcmp.lt.s32.totalorder %v643, 2
      %s648 = scalar_select %p644, 1, 0
      %v649 = vstv %s648
      %vm650 = vcmp.eq.s32.totalorder %v649, 1
      %vm651 = vmand %vm650, %vm645
      %vm652 = vmand %vm650, %vm646
      %vm653 = vmand %vm650, %vm647
      %v654 = vsel %vm651, 1, 0
      %v655 = vsel %vm652, 1, 0
      %v656 = vsel %vm653, 1, 0
      %vm657 = vcmp.eq.s32.totalorder %v654, 1
      %vm658 = vcmp.eq.s32.totalorder %v655, 1
      %vm659 = vcmp.eq.s32.totalorder %v656, 1
      %v660 = vsel %vm657, 0.0, %v637
      %v661 = vsel %vm658, 0.0, %v638
      %v662 = vsel %vm659, 0.0, %v639
      %vm666 = vcmask 1046528
      %v667 = vrot.slane %v660, 1
      %v668 = vrot.slane %v661, 1
      %v669 = vsel %vm666, %v667, %v668
      %v670 = vrot.slane %v662, 1
      %v671 = vsel %vm666, %v668, %v670
      %672 = vrot.lane.b32.xlu0 %v669, 8
      %v673 = vpop.permute.xlu0 %672
      %674 = vrot.lane.b32.xlu0 %v671, 8
      %v675 = vpop.permute.xlu0 %674
      %vm678 = vcmask 1045504
      %v679 = vrot.slane %v660, 2
      %v680 = vrot.slane %v661, 2
      %v681 = vsel %vm678, %v679, %v680
      %v682 = vrot.slane %v662, 2
      %v683 = vsel %vm678, %v680, %v682
      %684 = vrot.lane.b32.xlu0 %v681, 16
      %v685 = vpop.permute.xlu0 %684
      %686 = vrot.lane.b32.xlu0 %v683, 16
      %v687 = vpop.permute.xlu0 %686
      %v690 = vsel %vm503, %v660, %v673
      %v691 = vsel %vm503, %v661, %v675
      %vm692 = vcmask 130048
      %v693 = vsel %vm692, %v690, %v685
      %v694 = vsel %vm692, %v691, %v687
      %v695 = vld [vmem:[%s4] sm:$0xff]
      %v696 = vld [vmem:[%s4 + $0x8] sm:$0xff]
      %v697 = vld [vmem:[%s4 + $0x10] sm:$0xff]
      %v698 = vld [vmem:[%s5] sm:$0x1]
      %v700 = vlaneseq
      %v701 = vshrl.u32 %v700, 7
      %v702 = vsub.s32 0, %v701
      %v703 = vrot.slane %v698, %v702
      %vm705 = vcmask 195584
      %v707 = vsel %vm705, %v693, 0
      %v710 = vsel %vm705, %v694, 0
      %712 = vmatprep.subr.mxu0 0.0
      %713 = vmatpush1.msra.mxu0 0.0
      %714 = vmatprep.subr.mxu0 0.0
      %715 = vmatpush1.msra.mxu0 0.0
      %716 = vmatprep.subr.mxu0 0.0
      %717 = vmatpush1.msra.mxu0 0.0
      %718 = vmatprep.subr.mxu0 0.0
      %719 = vmatpush1.msra.mxu0 0.0
      %720 = vmatprep.subr.mxu0 0.0
      %721 = vmatpush1.msra.mxu0 0.0
      %722 = vmatprep.subr.mxu0 0.0
      %723 = vmatpush1.msra.mxu0 0.0
      %724 = vmatprep.subr.mxu0 0.0
      %725 = vmatpush1.msra.mxu0 0.0
      %726 = vmatprep.subr.mxu0 0.0
      %727 = vmatpush1.msra.mxu0 0.0
      %728 = vmatprep.subr.mxu0 0.0
      %729 = vmatpush1.msra.mxu0 0.0
      %730 = vmatprep.subr.mxu0 0.0
      %731 = vmatpush1.msra.mxu0 0.0
      %732 = vmatprep.subr.mxu0 0.0
      %733 = vmatpush1.msra.mxu0 0.0
      %734 = vmatprep.subr.mxu0 0.0
      %735 = vmatpush1.msra.mxu0 0.0
      %736 = vmatprep.subr.mxu0 0.0
      %737 = vmatpush1.msra.mxu0 0.0
      %738 = vmatprep.subr.mxu0 0.0
      %739 = vmatpush1.msra.mxu0 %v697
      %740 = vmatprep.subr.mxu0 0.0
      %741 = vmatpush1.msra.mxu0 %v696
      %742 = vmatprep.subr.mxu0 0.0
      %743 = vmatpush1.msra.mxu0 %v695
      %744 = vmatprep.subr.mxu0 0.0
      %745 = vmatpush2.msra.mxu0 0.0
      %746 = vmatprep.subr.mxu0 0.0
      %747 = vmatpush2.msra.mxu0 0.0
      %748 = vmatprep.subr.mxu0 0.0
      %749 = vmatpush2.msra.mxu0 0.0
      %750 = vmatprep.subr.mxu0 0.0
      %751 = vmatpush2.msra.mxu0 0.0
      %752 = vmatprep.subr.mxu0 0.0
      %753 = vmatpush2.msra.mxu0 0.0
      %754 = vmatprep.subr.mxu0 0.0
      %755 = vmatpush2.msra.mxu0 0.0
      %756 = vmatprep.subr.mxu0 0.0
      %757 = vmatpush2.msra.mxu0 0.0
      %758 = vmatprep.subr.mxu0 0.0
      %759 = vmatpush2.msra.mxu0 0.0
      %760 = vmatprep.subr.mxu0 0.0
      %761 = vmatpush2.msra.mxu0 0.0
      %762 = vmatprep.subr.mxu0 0.0
      %763 = vmatpush2.msra.mxu0 0.0
      %764 = vmatprep.subr.mxu0 0.0
      %765 = vmatpush2.msra.mxu0 0.0
      %766 = vmatprep.subr.mxu0 0.0
      %767 = vmatpush2.msra.mxu0 0.0
      %768 = vmatprep.subr.mxu0 0.0
      %769 = vmatpush2.msra.mxu0 0.0
      %770 = vmatprep.subr.mxu0 0.0
      %771 = vmatpush2.msra.mxu0 0.0
      %772 = vmatprep.subr.mxu0 0.0
      %773 = vmatpush2.msra.mxu0 0.0
      %774 = vmatprep.subr.mxu0 0.0
      %775 = vmatpush2.msra.mxu0 0.0
      %776 = vmatprep.mubr.f32.mxu0 0.0
      %777 = vmatmul.mubr.f32.gmra.mxu0 %v707
      %v778 = vpop.f32.mrf.mxu0
      %v779 = vadd.f32 %v703, %v778
      %v780 = vpop.f32.mrf.mxu0
      %781 = vmatprep.mubr.f32.mxu0 0.0
      %782 = vmatmul.mubr.f32.gmra.mxu0 %v710
      %v783 = vpop.f32.mrf.mxu0
      %v784 = vadd.f32 %v703, %v783
      %v785 = vpop.f32.mrf.mxu0
      %786 = vdwg.mxu0
      %v787 = vtanh.pop %v779
      %v788 = vtanh.pop %v784
      %v789 = vmul.f32 %v779, 0.5
      %v790 = vmul.f32 %v784, 0.5
      %v791 = vtanh.pop %v789
      %v792 = vtanh.pop %v790
      %v793 = vmul.f32 %v791, 0.5
      %v794 = vmul.f32 %v792, 0.5
      %v795 = vadd.f32 %v793, 0.5
      %v796 = vadd.f32 %v794, 0.5
      %799 = vrot.lane.b32.xlu0 %v795, 120
      %v800 = vpop.permute.xlu0 %799
      %801 = vrot.lane.b32.xlu0 %v796, 120
      %v802 = vpop.permute.xlu0 %801
      %v805 = vmul.f32 %v787, %v800
      %v806 = vmul.f32 %v788, %v802
      %v807 = vld [vmem:[%s6] sm:$0xf]
      %v808 = vld [vmem:[%s7] sm:$0x1]
      %v810 = vlaneseq
      %v811 = vshrl.u32 %v810, 7
      %v812 = vsub.s32 0, %v811
      %v813 = vrot.slane %v808, %v812
      %v816 = vsel %vm457, %v455, 0
      %v819 = vsel %vm457, %v456, 0
      %v822 = vsel %vm526, %v807, 0
      %824 = vmatprep.subr.mxu0 0.0
      %825 = vmatpush1.msra.mxu0 0.0
      %826 = vmatprep.subr.mxu0 0.0
      %827 = vmatpush1.msra.mxu0 0.0
      %828 = vmatprep.subr.mxu0 0.0
      %829 = vmatpush1.msra.mxu0 0.0
      %830 = vmatprep.subr.mxu0 0.0
      %831 = vmatpush1.msra.mxu0 0.0
      %832 = vmatprep.subr.mxu0 0.0
      %833 = vmatpush1.msra.mxu0 0.0
      %834 = vmatprep.subr.mxu0 0.0
      %835 = vmatpush1.msra.mxu0 0.0
      %836 = vmatprep.subr.mxu0 0.0
      %837 = vmatpush1.msra.mxu0 0.0
      %838 = vmatprep.subr.mxu0 0.0
      %839 = vmatpush1.msra.mxu0 0.0
      %840 = vmatprep.subr.mxu0 0.0
      %841 = vmatpush1.msra.mxu0 0.0
      %842 = vmatprep.subr.mxu0 0.0
      %843 = vmatpush1.msra.mxu0 0.0
      %844 = vmatprep.subr.mxu0 0.0
      %845 = vmatpush1.msra.mxu0 0.0
      %846 = vmatprep.subr.mxu0 0.0
      %847 = vmatpush1.msra.mxu0 0.0
      %848 = vmatprep.subr.mxu0 0.0
      %849 = vmatpush1.msra.mxu0 0.0
      %850 = vmatprep.subr.mxu0 0.0
      %851 = vmatpush1.msra.mxu0 0.0
      %852 = vmatprep.subr.mxu0 0.0
      %853 = vmatpush1.msra.mxu0 0.0
      %854 = vmatprep.subr.mxu0 0.0
      %855 = vmatpush1.msra.mxu0 %v822
      %856 = vmatprep.subr.mxu0 0.0
      %857 = vmatpush2.msra.mxu0 0.0
      %858 = vmatprep.subr.mxu0 0.0
      %859 = vmatpush2.msra.mxu0 0.0
      %860 = vmatprep.subr.mxu0 0.0
      %861 = vmatpush2.msra.mxu0 0.0
      %862 = vmatprep.subr.mxu0 0.0
      %863 = vmatpush2.msra.mxu0 0.0
      %864 = vmatprep.subr.mxu0 0.0
      %865 = vmatpush2.msra.mxu0 0.0
      %866 = vmatprep.subr.mxu0 0.0
      %867 = vmatpush2.msra.mxu0 0.0
      %868 = vmatprep.subr.mxu0 0.0
      %869 = vmatpush2.msra.mxu0 0.0
      %870 = vmatprep.subr.mxu0 0.0
      %871 = vmatpush2.msra.mxu0 0.0
      %872 = vmatprep.subr.mxu0 0.0
      %873 = vmatpush2.msra.mxu0 0.0
      %874 = vmatprep.subr.mxu0 0.0
      %875 = vmatpush2.msra.mxu0 0.0
      %876 = vmatprep.subr.mxu0 0.0
      %877 = vmatpush2.msra.mxu0 0.0
      %878 = vmatprep.subr.mxu0 0.0
      %879 = vmatpush2.msra.mxu0 0.0
      %880 = vmatprep.subr.mxu0 0.0
      %881 = vmatpush2.msra.mxu0 0.0
      %882 = vmatprep.subr.mxu0 0.0
      %883 = vmatpush2.msra.mxu0 0.0
      %884 = vmatprep.subr.mxu0 0.0
      %885 = vmatpush2.msra.mxu0 0.0
      %886 = vmatprep.subr.mxu0 0.0
      %887 = vmatpush2.msra.mxu0 0.0
      %888 = vmatprep.mubr.f32.mxu0 0.0
      %889 = vmatmul.mubr.f32.gmra.mxu0 %v816
      %v890 = vpop.f32.mrf.mxu0
      %v891 = vadd.f32 %v813, %v890
      %v892 = vpop.f32.mrf.mxu0
      %893 = vmatprep.mubr.f32.mxu0 0.0
      %894 = vmatmul.mubr.f32.gmra.mxu0 %v819
      %v895 = vpop.f32.mrf.mxu0
      %v896 = vadd.f32 %v813, %v895
      %v897 = vpop.f32.mrf.mxu0
      %898 = vdwg.mxu0
      %v899 = vadd.f32 %v805, %v891
      %v900 = vadd.f32 %v806, %v896
      %v901 = vmax.f32 %v899, 0.0
      %v902 = vmax.f32 %v900, 0.0
      %903 = vst.msk [vmem:[%s443] sm:$0xff] %vm503, %v901
      %904 = vst.msk [vmem:[%s443 + $0x8] sm:$0xff] %vm503, %v902
      %905 = vst.msk [vmem:[%s453] sm:$0xff] %vm503, %v805
      %906 = vst.msk [vmem:[%s453 + $0x8] sm:$0xff] %vm503, %v806
      %s907 = smul.u32 2, %s26
      %p908 = scmp.lt.s32.totalorder %s25, 1
      %s909 = scalar_select %p908, %s25, 1
      %p910 = scmp.lt.s32.totalorder %s907, 3
      %s911 = scalar_select %p910, %s907, 3
      %s912 = smul.addr %s909, 4
      %s913 = sadd.s32 %s911, %s912
      %s914 = smul.addr %s913, 8
      %s915 = scalar_lea.vmem %s8, %s914
      %s916 = smul.u32 2, %s26
      %p917 = scmp.lt.s32.totalorder %s25, 1
      %s918 = scalar_select %p917, %s25, 1
      %p919 = scmp.lt.s32.totalorder %s916, 3
      %s920 = scalar_select %p919, %s916, 3
      %s921 = smul.addr %s918, 4
      %s922 = sadd.s32 %s920, %s921
      %s923 = smul.addr %s922, 8
      %s924 = scalar_lea.vmem %s9, %s923
      // Predicated region
      $region53: #{shared_tcn_forward.3} parent=51 // pred_check
        %p925 = pneg %p243
      $region54: #{shared_tcn_forward.3} parent=51 // pred_check_branch
        %927 = sbr.rel (%p925) target = $region56
      $region55: #{shared_tcn_forward.3} parent=51 // pred_region
        %s928 = smul.u32 2, %s26
      $region56: #{shared_tcn_forward.3} parent=51 // pred_fallthru
        _
      // Predicated region
      $region57: #{shared_tcn_forward.3} parent=51 // pred_check
        %p929 = pneg %p271
      $region58: #{shared_tcn_forward.3} parent=51 // pred_check_branch
        %931 = sbr.rel (%p929) target = $region60
      $region59: #{shared_tcn_forward.3} parent=51 // pred_region
        %s932 = smul.u32 2, %s26
      $region60: #{shared_tcn_forward.3} parent=51 // pred_fallthru
        _
    $region52: #{shared_tcn_forward.3} parent=5 // pred_fallthru
      _
    %p933 = scmp.le.s32.totalorder 2, %s16
    // Predicated region
    $region61: #{shared_tcn_forward.3} parent=5 // pred_check
      %p934 = pneg %p933
    $region62: #{shared_tcn_forward.3} parent=5 // pred_check_branch
      %936 = sbr.rel (%p934) target = $region64
    $region63: #{shared_tcn_forward.3} parent=5 // pred_region
      %s937 = ssub.s32 %s16, 2
      // Predicated region
      $region65: #{shared_tcn_forward.3} parent=63 // pred_check
        %p938 = pneg %p249
      $region66: #{shared_tcn_forward.3} parent=63 // pred_check_branch
        %940 = sbr.rel (%p938) target = $region68
      $region67: #{shared_tcn_forward.3} parent=63 // pred_region
        %s941 = smul.u32 2, %s28
        %p942 = scmp.lt.s32.totalorder %s27, 1
        %s943 = scalar_select %p942, %s27, 1
        %p944 = scmp.lt.s32.totalorder %s941, 3
        %s945 = scalar_select %p944, %s941, 3
        %s946 = smul.addr %s943, 4
        %s947 = sadd.s32 %s945, %s946
        %s948 = smul.addr %s947, 8
        %s949 = scalar_lea.vmem %s8, %s948
      $region68: #{shared_tcn_forward.3} parent=63 // pred_fallthru
        _
      // Predicated region
      $region69: #{shared_tcn_forward.3} parent=63 // pred_check
        %p950 = pneg %p277
      $region70: #{shared_tcn_forward.3} parent=63 // pred_check_branch
        %952 = sbr.rel (%p950) target = $region72
      $region71: #{shared_tcn_forward.3} parent=63 // pred_region
        %s953 = smul.u32 2, %s28
        %p954 = scmp.lt.s32.totalorder %s27, 1
        %s955 = scalar_select %p954, %s27, 1
        %p956 = scmp.lt.s32.totalorder %s953, 3
        %s957 = scalar_select %p956, %s953, 3
        %s958 = smul.addr %s955, 4
        %s959 = sadd.s32 %s957, %s958
        %s960 = smul.addr %s959, 8
        %s961 = scalar_lea.vmem %s9, %s960
      $region72: #{shared_tcn_forward.3} parent=63 // pred_fallthru
        _
    $region64: #{shared_tcn_forward.3} parent=5 // pred_fallthru
      _
  $region6: #{shared_tcn_forward.3} parent=0 // loop_footer
    %s20 = sadd.s32 1, %s16
  $region7: #{shared_tcn_forward.3} parent=0 // loop_footer_branch
    %15 = sbr.rel target = $region3
  $region8: #{shared_tcn_forward.3} parent=0 // loop_exit
    _

// kernel: shared_tcn_forward.5
$region0: #{shared_tcn_forward.5}
  #allocation0 [shape = 'u32[]', space=smem, size = 0x4, offset = 0x4, fixed_abs, tag = 'smem constant byte address 0x4 - core index']
  #allocation1 [shape = 'u32[144,128]{1,0:T(1,128)}', space=vmem, size = 0x12000, scoped, tag = 'internal scratch']
  #allocation2 [shape = 'f32[32,8]{1,0:T(8,128)}', space=vmem, size = 0x4000, scoped, tag = 'scratch operand']
  %s0 = inlined_call_operand.vmem [shape: f32[2,32,8], index: 0, kind: input, shape index: {}, may-alias: {0,1}]
  %s1 = inlined_call_operand.vmem [shape: f32[2,32,8], index: 1, kind: input, shape index: {}, may-alias: {0,1}]
  %s2 = inlined_call_operand.vmem [shape: f32[24,16], index: 2, kind: input, shape index: {}]
  %s3 = inlined_call_operand.vmem [shape: f32[1,16], index: 3, kind: input, shape index: {}]
  %s4 = inlined_call_operand.vmem [shape: f32[24,16], index: 4, kind: input, shape index: {}]
  %s5 = inlined_call_operand.vmem [shape: f32[1,16], index: 5, kind: input, shape index: {}]
  %s6 = inlined_call_operand.vmem [shape: f32[2,32,8], index: 6, kind: input, shape index: {}]
  %s7 = inlined_call_operand.vmem [shape: f32[2,32,8], index: 7, kind: output, shape index: {}]
  %s8 = sld [smem:[#allocation0]]
  $region61: #{shared_tcn_forward.5} parent=0
    _
  %s10 = ssub.s32 1, %s8
  %s11 = scalar_select 0, %s10, %s8
  loop: start=0, step=1, limit=6
  $region2: #{shared_tcn_forward.5} parent=0 // loop_pre_header
    _
  $region3: #{shared_tcn_forward.5} parent=0 // loop_header
    %s13 = sphi 0, %s17
    %p14 = scmp.ge.s32.totalorder %s13, 6
    %s20 = sphi 0, %s32
    %s21 = sphi 0, %s28
    %s22 = sphi 0, %s20
    %s23 = sphi 0, %s21
    %s24 = sphi 0, %s22
    %s25 = sphi 0, %s23
    %s37 = sphi 0, %s39
    %s40 = sphi 0, %s37
    %s41 = sphi 0, %s40
    %s57 = sphi 0, %s41
    %s71 = sphi 0, %s73
    %s74 = sphi 0, %s71
    %s75 = sphi 0, %s74
    %s91 = sphi 0, %s75
    %s95 = sphi 0, %s95
    %s97 = sphi 0, %s95
    %s98 = sphi 0, %s97
    %s112 = sphi 0, %s98
    %s116 = sphi 0, %s116
    %s118 = sphi 0, %s116
    %s119 = sphi 0, %s118
    %s133 = sphi 0, %s119
    %s137 = sphi 0, %s137
    %s139 = sphi 0, %s137
    %s140 = sphi 0, %s139
    %s154 = sphi 0, %s140
    %s158 = sphi 0, %s158
    %s160 = sphi 0, %s158
    %s161 = sphi 0, %s160
    %s175 = sphi 0, %s161
    %s183 = sphi 0, %s185
    %s186 = sphi 0, %s183
    %s187 = sphi 0, %s186
    %s203 = sphi 0, %s187
    %s211 = sphi 0, %s213
    %s214 = sphi 0, %s211
    %s215 = sphi 0, %s214
    %s231 = sphi 0, %s215
  $region4: #{shared_tcn_forward.5} parent=0 // loop_header_branch
    %16 = sbr.rel (%p14) target = $region8
  $region5: #{shared_tcn_forward.5} parent=0 // loop_body
    %s18 = ssub.s32 %s13, 1
    %s19 = ssub.s32 %s13, 2
    %s26 = sadd.s32 1, %s21
    %p27 = scmp.ge.s32.totalorder %s26, 2
    %s28 = scalar_select %p27, 0, %s26
    %s29 = sadd.s32 1, %s20
    %s30 = scalar_select %p27, %s29, %s20
    %p31 = scmp.ge.s32.totalorder %s30, 2
    %s32 = scalar_select %p31, 0, %s30
    %s33 = ssub.s32 %s20, %s32
    %s34 = ssub.s32 %s21, %s28
    %s35 = sor.u32 %s33, %s34
    %p36 = scmp.eq.s32.totalorder %s35, 0
    %s38 = sadd.s32 %s37, 1
    %s39 = scalar_select %p36, %s37, %s38
    %p42 = pneg %p36
    %p43 = scmp.eq.s32.totalorder %s13, 3
    %p44 = por %p42, %p43
    %p45 = scmp.ne.s32.totalorder %s37, %s40
    %p46 = scmp.eq.s32.totalorder %s13, 0
    %p47 = por %p45, %p46
    %p48 = scmp.ne.s32.totalorder %s37, %s40
    %p49 = scmp.eq.s32.totalorder %s18, 3
    %p50 = por %p48, %p49
    %p51 = scmp.ne.s32.totalorder %s40, %s41
    %p52 = scmp.eq.s32.totalorder %s18, 0
    %p53 = por %p51, %p52
    %p54 = scmp.ne.s32.totalorder %s40, %s41
    %p55 = scmp.eq.s32.totalorder %s19, 3
    %p56 = por %p54, %p55
    %p58 = scmp.ne.s32.totalorder %s41, %s57
    %p59 = scmp.eq.s32.totalorder %s19, 0
    %p60 = por %p58, %p59
    %s61 = ssub.s32 %s21, 1
    %p62 = scmp.gt.s32.totalorder %s61, 0
    %s63 = scalar_select %p62, %s61, 0
    %s64 = ssub.s32 %s28, 1
    %p65 = scmp.gt.s32.totalorder %s64, 0
    %s66 = scalar_select %p65, %s64, 0
    %s67 = ssub.s32 %s20, %s32
    %s68 = ssub.s32 %s63, %s66
    %s69 = sor.u32 %s67, %s68
    %p70 = scmp.eq.s32.totalorder %s69, 0
    %s72 = sadd.s32 %s71, 1
    %s73 = scalar_select %p70, %s71, %s72
    %p76 = pneg %p70
    %p77 = scmp.eq.s32.totalorder %s13, 3
    %p78 = por %p76, %p77
    %p79 = scmp.ne.s32.totalorder %s71, %s74
    %p80 = scmp.eq.s32.totalorder %s13, 0
    %p81 = por %p79, %p80
    %p82 = scmp.ne.s32.totalorder %s71, %s74
    %p83 = scmp.eq.s32.totalorder %s18, 3
    %p84 = por %p82, %p83
    %p85 = scmp.ne.s32.totalorder %s74, %s75
    %p86 = scmp.eq.s32.totalorder %s18, 0
    %p87 = por %p85, %p86
    %p88 = scmp.ne.s32.totalorder %s74, %s75
    %p89 = scmp.eq.s32.totalorder %s19, 3
    %p90 = por %p88, %p89
    %p92 = scmp.ne.s32.totalorder %s75, %s91
    %p93 = scmp.eq.s32.totalorder %s19, 0
    %p94 = por %p92, %p93
    %s96 = sadd.s32 %s95, 1
    %p99 = scmp.eq.s32.totalorder %s13, 3
    %p100 = scmp.ne.s32.totalorder %s95, %s97
    %p101 = scmp.eq.s32.totalorder %s13, 0
    %p102 = por %p100, %p101
    %p103 = scmp.ne.s32.totalorder %s95, %s97
    %p104 = scmp.eq.s32.totalorder %s18, 3
    %p105 = por %p103, %p104
    %p106 = scmp.ne.s32.totalorder %s97, %s98
    %p107 = scmp.eq.s32.totalorder %s18, 0
    %p108 = por %p106, %p107
    %p109 = scmp.ne.s32.totalorder %s97, %s98
    %p110 = scmp.eq.s32.totalorder %s19, 3
    %p111 = por %p109, %p110
    %p113 = scmp.ne.s32.totalorder %s98, %s112
    %p114 = scmp.eq.s32.totalorder %s19, 0
    %p115 = por %p113, %p114
    %s117 = sadd.s32 %s116, 1
    %p120 = scmp.eq.s32.totalorder %s13, 3
    %p121 = scmp.ne.s32.totalorder %s116, %s118
    %p122 = scmp.eq.s32.totalorder %s13, 0
    %p123 = por %p121, %p122
    %p124 = scmp.ne.s32.totalorder %s116, %s118
    %p125 = scmp.eq.s32.totalorder %s18, 3
    %p126 = por %p124, %p125
    %p127 = scmp.ne.s32.totalorder %s118, %s119
    %p128 = scmp.eq.s32.totalorder %s18, 0
    %p129 = por %p127, %p128
    %p130 = scmp.ne.s32.totalorder %s118, %s119
    %p131 = scmp.eq.s32.totalorder %s19, 3
    %p132 = por %p130, %p131
    %p134 = scmp.ne.s32.totalorder %s119, %s133
    %p135 = scmp.eq.s32.totalorder %s19, 0
    %p136 = por %p134, %p135
    %s138 = sadd.s32 %s137, 1
    %p141 = scmp.eq.s32.totalorder %s13, 3
    %p142 = scmp.ne.s32.totalorder %s137, %s139
    %p143 = scmp.eq.s32.totalorder %s13, 0
    %p144 = por %p142, %p143
    %p145 = scmp.ne.s32.totalorder %s137, %s139
    %p146 = scmp.eq.s32.totalorder %s18, 3
    %p147 = por %p145, %p146
    %p148 = scmp.ne.s32.totalorder %s139, %s140
    %p149 = scmp.eq.s32.totalorder %s18, 0
    %p150 = por %p148, %p149
    %p151 = scmp.ne.s32.totalorder %s139, %s140
    %p152 = scmp.eq.s32.totalorder %s19, 3
    %p153 = por %p151, %p152
    %p155 = scmp.ne.s32.totalorder %s140, %s154
    %p156 = scmp.eq.s32.totalorder %s19, 0
    %p157 = por %p155, %p156
    %s159 = sadd.s32 %s158, 1
    %p162 = scmp.eq.s32.totalorder %s13, 3
    %p163 = scmp.ne.s32.totalorder %s158, %s160
    %p164 = scmp.eq.s32.totalorder %s13, 0
    %p165 = por %p163, %p164
    %p166 = scmp.ne.s32.totalorder %s158, %s160
    %p167 = scmp.eq.s32.totalorder %s18, 3
    %p168 = por %p166, %p167
    %p169 = scmp.ne.s32.totalorder %s160, %s161
    %p170 = scmp.eq.s32.totalorder %s18, 0
    %p171 = por %p169, %p170
    %p172 = scmp.ne.s32.totalorder %s160, %s161
    %p173 = scmp.eq.s32.totalorder %s19, 3
    %p174 = por %p172, %p173
    %p176 = scmp.ne.s32.totalorder %s161, %s175
    %p177 = scmp.eq.s32.totalorder %s19, 0
    %p178 = por %p176, %p177
    %s179 = ssub.s32 %s20, %s32
    %s180 = ssub.s32 %s21, %s28
    %s181 = sor.u32 %s179, %s180
    %p182 = scmp.eq.s32.totalorder %s181, 0
    %s184 = sadd.s32 %s183, 1
    %s185 = scalar_select %p182, %s183, %s184
    %p188 = pneg %p182
    %p189 = scmp.eq.s32.totalorder %s13, 3
    %p190 = por %p188, %p189
    %p191 = scmp.ne.s32.totalorder %s183, %s186
    %p192 = scmp.eq.s32.totalorder %s13, 0
    %p193 = por %p191, %p192
    %p194 = scmp.ne.s32.totalorder %s183, %s186
    %p195 = scmp.eq.s32.totalorder %s18, 3
    %p196 = por %p194, %p195
    %p197 = scmp.ne.s32.totalorder %s186, %s187
    %p198 = scmp.eq.s32.totalorder %s18, 0
    %p199 = por %p197, %p198
    %p200 = scmp.ne.s32.totalorder %s186, %s187
    %p201 = scmp.eq.s32.totalorder %s19, 3
    %p202 = por %p200, %p201
    %p204 = scmp.ne.s32.totalorder %s187, %s203
    %p205 = scmp.eq.s32.totalorder %s19, 0
    %p206 = por %p204, %p205
    %s207 = ssub.s32 %s20, %s32
    %s208 = ssub.s32 %s21, %s28
    %s209 = sor.u32 %s207, %s208
    %p210 = scmp.eq.s32.totalorder %s209, 0
    %s212 = sadd.s32 %s211, 1
    %s213 = scalar_select %p210, %s211, %s212
    %p216 = pneg %p210
    %p217 = scmp.eq.s32.totalorder %s13, 3
    %p218 = por %p216, %p217
    %p219 = scmp.ne.s32.totalorder %s211, %s214
    %p220 = scmp.eq.s32.totalorder %s13, 0
    %p221 = por %p219, %p220
    %p222 = scmp.ne.s32.totalorder %s211, %s214
    %p223 = scmp.eq.s32.totalorder %s18, 3
    %p224 = por %p222, %p223
    %p225 = scmp.ne.s32.totalorder %s214, %s215
    %p226 = scmp.eq.s32.totalorder %s18, 0
    %p227 = por %p225, %p226
    %p228 = scmp.ne.s32.totalorder %s214, %s215
    %p229 = scmp.eq.s32.totalorder %s19, 3
    %p230 = por %p228, %p229
    %p232 = scmp.ne.s32.totalorder %s215, %s231
    %p233 = scmp.eq.s32.totalorder %s19, 0
    %p234 = por %p232, %p233
    %p235 = scmp.le.s32.totalorder 1, %s13
    %p236 = scmp.lt.s32.totalorder %s13, 5
    %p237 = pnand %p235, %p236
    %p238 = pneg %p237
    // Predicated region
    $region9: #{shared_tcn_forward.5} parent=5 // pred_check
      _
    $region10: #{shared_tcn_forward.5} parent=5 // pred_check_branch
      %240 = sbr.rel (%p237) target = $region12
    $region11: #{shared_tcn_forward.5} parent=5 // pred_region
      %s241 = ssub.s32 %s13, 1
      // Predicated region
      $region13: #{shared_tcn_forward.5} parent=11 // pred_check
        %p242 = pneg %p108
      $region14: #{shared_tcn_forward.5} parent=11 // pred_check_branch
        %244 = sbr.rel (%p242) target = $region16
      $region15: #{shared_tcn_forward.5} parent=11 // pred_region
        _
      $region16: #{shared_tcn_forward.5} parent=11 // pred_fallthru
        _
      // Predicated region
      $region17: #{shared_tcn_forward.5} parent=11 // pred_check
        %p245 = pneg %p129
      $region18: #{shared_tcn_forward.5} parent=11 // pred_check_branch
        %247 = sbr.rel (%p245) target = $region20
      $region19: #{shared_tcn_forward.5} parent=11 // pred_region
        _
      $region20: #{shared_tcn_forward.5} parent=11 // pred_fallthru
        _
      // Predicated region
      $region21: #{shared_tcn_forward.5} parent=11 // pred_check
        %p248 = pneg %p150
      $region22: #{shared_tcn_forward.5} parent=11 // pred_check_branch
        %250 = sbr.rel (%p248) target = $region24
      $region23: #{shared_tcn_forward.5} parent=11 // pred_region
        _
      $region24: #{shared_tcn_forward.5} parent=11 // pred_fallthru
        _
      // Predicated region
      $region25: #{shared_tcn_forward.5} parent=11 // pred_check
        %p251 = pneg %p171
      $region26: #{shared_tcn_forward.5} parent=11 // pred_check_branch
        %253 = sbr.rel (%p251) target = $region28
      $region27: #{shared_tcn_forward.5} parent=11 // pred_region
        _
      $region28: #{shared_tcn_forward.5} parent=11 // pred_fallthru
        _
    $region12: #{shared_tcn_forward.5} parent=5 // pred_fallthru
      _
    %p254 = scmp.lt.s32.totalorder %s13, 4
    // Predicated region
    $region29: #{shared_tcn_forward.5} parent=5 // pred_check
      %p255 = pneg %p254
    $region30: #{shared_tcn_forward.5} parent=5 // pred_check_branch
      %257 = sbr.rel (%p255) target = $region32
    $region31: #{shared_tcn_forward.5} parent=5 // pred_region
      // Predicated region
      $region33: #{shared_tcn_forward.5} parent=31 // pred_check
        %p258 = pneg %p47
      $region34: #{shared_tcn_forward.5} parent=31 // pred_check_branch
        %260 = sbr.rel (%p258) target = $region36
      $region35: #{shared_tcn_forward.5} parent=31 // pred_region
        %s261 = smul.u32 2, %s21
        %p262 = scmp.lt.s32.totalorder %s20, 1
        %s263 = scalar_select %p262, %s20, 1
        %p264 = scmp.lt.s32.totalorder %s261, 3
        %s265 = scalar_select %p264, %s261, 3
        %s266 = smul.addr %s263, 4
        %s267 = sadd.s32 %s265, %s266
        %s268 = smul.addr %s267, 8
        %s269 = scalar_lea.vmem %s0, %s268
        %s270 = smul.u32 2, %s21
      $region36: #{shared_tcn_forward.5} parent=31 // pred_fallthru
        _
      // Predicated region
      $region37: #{shared_tcn_forward.5} parent=31 // pred_check
        %p271 = pneg %p81
      $region38: #{shared_tcn_forward.5} parent=31 // pred_check_branch
        %273 = sbr.rel (%p271) target = $region40
      $region39: #{shared_tcn_forward.5} parent=31 // pred_region
        %s274 = ssub.s32 %s21, 1
        %p275 = scmp.gt.s32.totalorder %s274, 0
        %s276 = scalar_select %p275, %s274, 0
        %s277 = smul.u32 2, %s276
        %p278 = scmp.lt.s32.totalorder %s20, 1
        %s279 = scalar_select %p278, %s20, 1
        %p280 = scmp.lt.s32.totalorder %s277, 3
        %s281 = scalar_select %p280, %s277, 3
        %s282 = smul.addr %s279, 4
        %s283 = sadd.s32 %s281, %s282
        %s284 = smul.addr %s283, 8
        %s285 = scalar_lea.vmem %s1, %s284
        %s286 = ssub.s32 %s21, 1
        %p287 = scmp.gt.s32.totalorder %s286, 0
        %s288 = scalar_select %p287, %s286, 0
        %s289 = smul.u32 2, %s288
      $region40: #{shared_tcn_forward.5} parent=31 // pred_fallthru
        _
      // Predicated region
      $region41: #{shared_tcn_forward.5} parent=31 // pred_check
        %p290 = pneg %p193
      $region42: #{shared_tcn_forward.5} parent=31 // pred_check_branch
        %292 = sbr.rel (%p290) target = $region44
      $region43: #{shared_tcn_forward.5} parent=31 // pred_region
        %s293 = smul.u32 2, %s21
        %p294 = scmp.lt.s32.totalorder %s20, 1
        %s295 = scalar_select %p294, %s20, 1
        %p296 = scmp.lt.s32.totalorder %s293, 3
        %s297 = scalar_select %p296, %s293, 3
        %s298 = smul.addr %s295, 4
        %s299 = sadd.s32 %s297, %s298
        %s300 = smul.addr %s299, 8
        %s301 = scalar_lea.vmem %s6, %s300
        %s302 = smul.u32 2, %s21
      $region44: #{shared_tcn_forward.5} parent=31 // pred_fallthru
        _
    $region32: #{shared_tcn_forward.5} parent=5 // pred_fallthru
      _
    %p303 = scmp.le.s32.totalorder 1, %s13
    %p304 = scmp.lt.s32.totalorder %s13, 5
    %p305 = pnand %p303, %p304
    %p306 = pneg %p305
    // Predicated region
    $region45: #{shared_tcn_forward.5} parent=5 // pred_check
      _
    $region46: #{shared_tcn_forward.5} parent=5 // pred_check_branch
      %308 = sbr.rel (%p305) target = $region48
    $region47: #{shared_tcn_forward.5} parent=5 // pred_region
      %s309 = ssub.s32 %s13, 1
      %s310 = smul.u32 2, %s23
      %p311 = scmp.lt.s32.totalorder %s22, 1
      %s312 = scalar_select %p311, %s22, 1
      %p313 = scmp.lt.s32.totalorder %s310, 3
      %s314 = scalar_select %p313, %s310, 3
      %s315 = smul.addr %s312, 4
      %s316 = sadd.s32 %s314, %s315
      %s317 = smul.addr %s316, 8
      %s318 = scalar_lea.vmem %s0, %s317
      %p319 = pneg %p53
      %p320 = pneg %p50
      %s321 = ssub.s32 %s23, 1
      %p322 = scmp.gt.s32.totalorder %s321, 0
      %s323 = scalar_select %p322, %s321, 0
      %s324 = smul.u32 2, %s323
      %p325 = scmp.lt.s32.totalorder %s22, 1
      %s326 = scalar_select %p325, %s22, 1
      %p327 = scmp.lt.s32.totalorder %s324, 3
      %s328 = scalar_select %p327, %s324, 3
      %s329 = smul.addr %s326, 4
      %s330 = sadd.s32 %s328, %s329
      %s331 = smul.addr %s330, 8
      %s332 = scalar_lea.vmem %s1, %s331
      %p333 = pneg %p87
      %p334 = pneg %p84
      %p335 = pneg %p108
      %p336 = pneg %p105
      %p337 = pneg %p129
      %p338 = pneg %p126
      %p339 = pneg %p150
      %p340 = pneg %p147
      %p341 = pneg %p171
      %p342 = pneg %p168
      %s343 = smul.u32 2, %s23
      %p344 = scmp.lt.s32.totalorder %s22, 1
      %s345 = scalar_select %p344, %s22, 1
      %p346 = scmp.lt.s32.totalorder %s343, 3
      %s347 = scalar_select %p346, %s343, 3
      %s348 = smul.addr %s345, 4
      %s349 = sadd.s32 %s347, %s348
      %s350 = smul.addr %s349, 8
      %s351 = scalar_lea.vmem %s6, %s350
      %p352 = pneg %p199
      %p353 = pneg %p196
      %p354 = pneg %p227
      %p355 = pneg %p224
      %s356 = smul.u32 2, %s23
      %p357 = scmp.lt.s32.totalorder %s22, 1
      %s358 = scalar_select %p357, %s22, 1
      %p359 = scmp.lt.s32.totalorder %s356, 3
      %s360 = scalar_select %p359, %s356, 3
      %s361 = smul.addr %s358, 4
      %s362 = sadd.s32 %s360, %s361
      %s363 = smul.addr %s362, 8
      %s364 = scalar_lea.vmem %s7, %s363
      %s365 = smul.u32 2, %s23
      %p366 = scmp.lt.s32.totalorder %s22, 1
      %s367 = scalar_select %p366, %s22, 1
      %p368 = scmp.lt.s32.totalorder %s365, 3
      %s369 = scalar_select %p368, %s365, 3
      %s370 = smul.addr %s367, 4
      %s371 = sadd.s32 %s369, %s370
      %s372 = smul.addr %s371, 8
      %s373 = scalar_lea.vmem %s0, %s372
      %s374 = smul.u32 2, %s23
      %s375 = ssub.s32 %s23, 1
      %p376 = scmp.gt.s32.totalorder %s375, 0
      %s377 = scalar_select %p376, %s375, 0
      %s378 = smul.u32 2, %s377
      %p379 = scmp.lt.s32.totalorder %s22, 1
      %s380 = scalar_select %p379, %s22, 1
      %p381 = scmp.lt.s32.totalorder %s378, 3
      %s382 = scalar_select %p381, %s378, 3
      %s383 = smul.addr %s380, 4
      %s384 = sadd.s32 %s382, %s383
      %s385 = smul.addr %s384, 8
      %s386 = scalar_lea.vmem %s1, %s385
      %s387 = ssub.s32 %s23, 1
      %p388 = scmp.gt.s32.totalorder %s387, 0
      %s389 = scalar_select %p388, %s387, 0
      %s390 = smul.u32 2, %s389
      %s391 = smul.u32 2, %s23
      %p392 = scmp.lt.s32.totalorder %s22, 1
      %s393 = scalar_select %p392, %s22, 1
      %p394 = scmp.lt.s32.totalorder %s391, 3
      %s395 = scalar_select %p394, %s391, 3
      %s396 = smul.addr %s393, 4
      %s397 = sadd.s32 %s395, %s396
      %s398 = smul.addr %s397, 8
      %s399 = scalar_lea.vmem %s6, %s398
      %s400 = smul.u32 2, %s23
      %s401 = smul.u32 2, %s23
      %p402 = scmp.lt.s32.totalorder %s22, 1
      %s403 = scalar_select %p402, %s22, 1
      %p404 = scmp.lt.s32.totalorder %s401, 3
      %s405 = scalar_select %p404, %s401, 3
      %s406 = smul.addr %s403, 4
      %s407 = sadd.s32 %s405, %s406
      %s408 = smul.addr %s407, 8
      %s409 = scalar_lea.vmem %s7, %s408
      %s410 = smul.u32 2, %s23
      %v411 = vld [vmem:[%s373] sm:$0xff]
      %v412 = vld [vmem:[%s373 + $0x8] sm:$0xff]
      %vm413 = vcmask 64512
      %414 = vst.msk [vmem:[#allocation2 + $0x10] sm:$0xff] %vm413, %v411
      %415 = vst.msk [vmem:[#allocation2 + $0x18] sm:$0xff] %vm413, %v412
      %v416 = vld [vmem:[%s386] sm:$0xff]
      %v417 = vld [vmem:[%s386 + $0x8] sm:$0xff]
      %p418 = scmp.gt.s32.totalorder %s23, 0
      %s419 = scalar_select %p418, 1, 0
      %v420 = vstv %s419
      %vm421 = vcmp.eq.s32.totalorder %v420, 1
      %v422 = vsel %vm421, %v416, 0.0
      %v423 = vsel %vm421, %v417, 0.0
      %424 = vst.msk [vmem:[#allocation2] sm:$0xff] %vm413, %v422
      %425 = vst.msk [vmem:[#allocation2 + $0x8] sm:$0xff] %vm413, %v423
      %v426 = vld [vmem:[#allocation2] sm:$0xff]
      %v427 = vld [vmem:[#allocation2 + $0x8] sm:$0xff]
      %v428 = vld [vmem:[#allocation2 + $0x10] sm:$0xff]
      %v429 = vld [vmem:[#allocation2 + $0x4] sm:$0xff]
      %v430 = vld [vmem:[#allocation2 + $0xc] sm:$0xff]
      %v431 = vld [vmem:[#allocation2 + $0x14] sm:$0xff]
      %v432 = vld [vmem:[#allocation2 + $0x18] sm:$0xff]
      %436 = vrot.lane.b32.xlu0 %v429, 8
      %v437 = vpop.permute.xlu0 %436
      %438 = vrot.lane.b32.xlu0 %v430, 8
      %v439 = vpop.permute.xlu0 %438
      %440 = vrot.lane.b32.xlu0 %v431, 8
      %v441 = vpop.permute.xlu0 %440
      %448 = vrot.lane.b32.xlu0 %v427, 16
      %v449 = vpop.permute.xlu0 %448
      %450 = vrot.lane.b32.xlu0 %v428, 16
      %v451 = vpop.permute.xlu0 %450
      %452 = vrot.lane.b32.xlu0 %v432, 16
      %v453 = vpop.permute.xlu0 %452
      %v457 = vsel %vm413, %v426, %v437
      %v458 = vsel %vm413, %v427, %v439
      %v459 = vsel %vm413, %v428, %v441
      %vm460 = vcmask 130048
      %v461 = vsel %vm460, %v457, %v449
      %v462 = vsel %vm460, %v458, %v451
      %v463 = vsel %vm460, %v459, %v453
      %v464 = vld [vmem:[%s2] sm:$0xff]
      %v465 = vld [vmem:[%s2 + $0x8] sm:$0xff]
      %v466 = vld [vmem:[%s2 + $0x10] sm:$0xff]
      %v467 = vld [vmem:[%s3] sm:$0x1]
      %v469 = vlaneseq
      %v470 = vshrl.u32 %v469, 7
      %v471 = vsub.s32 0, %v470
      %v472 = vrot.slane %v467, %v471
      %vm474 = vcmask 195584
      %v476 = vsel %vm474, %v461, 0
      %v479 = vsel %vm474, %v462, 0
      %v482 = vsel %vm474, %v463, 0
      %484 = vmatprep.subr.mxu0 0.0
      %485 = vmatpush1.msra.mxu0 0.0
      %486 = vmatprep.subr.mxu0 0.0
      %487 = vmatpush1.msra.mxu0 0.0
      %488 = vmatprep.subr.mxu0 0.0
      %489 = vmatpush1.msra.mxu0 0.0
      %490 = vmatprep.subr.mxu0 0.0
      %491 = vmatpush1.msra.mxu0 0.0
      %492 = vmatprep.subr.mxu0 0.0
      %493 = vmatpush1.msra.mxu0 0.0
      %494 = vmatprep.subr.mxu0 0.0
      %495 = vmatpush1.msra.mxu0 0.0
      %496 = vmatprep.subr.mxu0 0.0
      %497 = vmatpush1.msra.mxu0 0.0
      %498 = vmatprep.subr.mxu0 0.0
      %499 = vmatpush1.msra.mxu0 0.0
      %500 = vmatprep.subr.mxu0 0.0
      %501 = vmatpush1.msra.mxu0 0.0
      %502 = vmatprep.subr.mxu0 0.0
      %503 = vmatpush1.msra.mxu0 0.0
      %504 = vmatprep.subr.mxu0 0.0
      %505 = vmatpush1.msra.mxu0 0.0
      %506 = vmatprep.subr.mxu0 0.0
      %507 = vmatpush1.msra.mxu0 0.0
      %508 = vmatprep.subr.mxu0 0.0
      %509 = vmatpush1.msra.mxu0 0.0
      %510 = vmatprep.subr.mxu0 0.0
      %511 = vmatpush1.msra.mxu0 %v466
      %512 = vmatprep.subr.mxu0 0.0
      %513 = vmatpush1.msra.mxu0 %v465
      %514 = vmatprep.subr.mxu0 0.0
      %515 = vmatpush1.msra.mxu0 %v464
      %516 = vmatprep.subr.mxu0 0.0
      %517 = vmatpush2.msra.mxu0 0.0
      %518 = vmatprep.subr.mxu0 0.0
      %519 = vmatpush2.msra.mxu0 0.0
      %520 = vmatprep.subr.mxu0 0.0
      %521 = vmatpush2.msra.mxu0 0.0
      %522 = vmatprep.subr.mxu0 0.0
      %523 = vmatpush2.msra.mxu0 0.0
      %524 = vmatprep.subr.mxu0 0.0
      %525 = vmatpush2.msra.mxu0 0.0
      %526 = vmatprep.subr.mxu0 0.0
      %527 = vmatpush2.msra.mxu0 0.0
      %528 = vmatprep.subr.mxu0 0.0
      %529 = vmatpush2.msra.mxu0 0.0
      %530 = vmatprep.subr.mxu0 0.0
      %531 = vmatpush2.msra.mxu0 0.0
      %532 = vmatprep.subr.mxu0 0.0
      %533 = vmatpush2.msra.mxu0 0.0
      %534 = vmatprep.subr.mxu0 0.0
      %535 = vmatpush2.msra.mxu0 0.0
      %536 = vmatprep.subr.mxu0 0.0
      %537 = vmatpush2.msra.mxu0 0.0
      %538 = vmatprep.subr.mxu0 0.0
      %539 = vmatpush2.msra.mxu0 0.0
      %540 = vmatprep.subr.mxu0 0.0
      %541 = vmatpush2.msra.mxu0 0.0
      %542 = vmatprep.subr.mxu0 0.0
      %543 = vmatpush2.msra.mxu0 0.0
      %544 = vmatprep.subr.mxu0 0.0
      %545 = vmatpush2.msra.mxu0 0.0
      %546 = vmatprep.subr.mxu0 0.0
      %547 = vmatpush2.msra.mxu0 0.0
      %548 = vmatprep.mubr.f32.mxu0 0.0
      %549 = vmatmul.mubr.f32.gmra.mxu0 %v476
      %v550 = vpop.f32.mrf.mxu0
      %v551 = vadd.f32 %v472, %v550
      %v552 = vpop.f32.mrf.mxu0
      %553 = vmatprep.mubr.f32.mxu0 0.0
      %554 = vmatmul.mubr.f32.gmra.mxu0 %v479
      %v555 = vpop.f32.mrf.mxu0
      %v556 = vadd.f32 %v472, %v555
      %v557 = vpop.f32.mrf.mxu0
      %558 = vmatprep.mubr.f32.mxu0 0.0
      %559 = vmatmul.mubr.f32.gmra.mxu0 %v482
      %v560 = vpop.f32.mrf.mxu0
      %v561 = vadd.f32 %v472, %v560
      %v562 = vpop.f32.mrf.mxu0
      %563 = vdwg.mxu0
      %v564 = vtanh.pop %v551
      %v565 = vtanh.pop %v556
      %v566 = vtanh.pop %v561
      %v567 = vmul.f32 %v551, 0.5
      %v568 = vmul.f32 %v556, 0.5
      %v569 = vmul.f32 %v561, 0.5
      %v570 = vtanh.pop %v567
      %v571 = vtanh.pop %v568
      %v572 = vtanh.pop %v569
      %v573 = vmul.f32 %v570, 0.5
      %v574 = vmul.f32 %v571, 0.5
      %v575 = vmul.f32 %v572, 0.5
      %v576 = vadd.f32 %v573, 0.5
      %v577 = vadd.f32 %v574, 0.5
      %v578 = vadd.f32 %v575, 0.5
      %582 = vrot.lane.b32.xlu0 %v576, 120
      %v583 = vpop.permute.xlu0 %582
      %584 = vrot.lane.b32.xlu0 %v577, 120
      %v585 = vpop.permute.xlu0 %584
      %586 = vrot.lane.b32.xlu0 %v578, 120
      %v587 = vpop.permute.xlu0 %586
      %v591 = vmul.f32 %v564, %v583
      %v592 = vmul.f32 %v565, %v585
      %v593 = vmul.f32 %v566, %v587
      %v594 = vlaneseq
      %v595 = vshrl.u32 %v594, 7
      %v596 = vadd.s32 %v595, 8
      %v597 = vadd.s32 %v595, 16
      %p598 = scmp.eq.s32.totalorder %s23, 0
      %vm599 = vcmp.lt.s32.totalorder %v595, 8
      %vm600 = vcmp.lt.s32.totalorder %v596, 8
      %vm601 = vcmp.lt.s32.totalorder %v597, 8
      %s602 = scalar_select %p598, 1, 0
      %v603 = vstv %s602
      %vm604 = vcmp.eq.s32.totalorder %v603, 1
      %vm605 = vmand %vm604, %vm599
      %vm606 = vmand %vm604, %vm600
      %vm607 = vmand %vm604, %vm601
      %v608 = vsel %vm605, 1, 0
      %v609 = vsel %vm606, 1, 0
      %v610 = vsel %vm607, 1, 0
      %vm611 = vcmp.eq.s32.totalorder %v608, 1
      %vm612 = vcmp.eq.s32.totalorder %v609, 1
      %vm613 = vcmp.eq.s32.totalorder %v610, 1
      %v614 = vsel %vm611, 0.0, %v591
      %v615 = vsel %vm612, 0.0, %v592
      %v616 = vsel %vm613, 0.0, %v593
      %vm620 = vcmask 1043456
      %v621 = vrot.slane %v614, 4
      %v622 = vrot.slane %v615, 4
      %v623 = vsel %vm620, %v621, %v622
      %v624 = vrot.slane %v616, 4
      %v625 = vsel %vm620, %v622, %v624
      %626 = vrot.lane.b32.xlu0 %v623, 8
      %v627 = vpop.permute.xlu0 %626
      %628 = vrot.lane.b32.xlu0 %v625, 8
      %v629 = vpop.permute.xlu0 %628
      %632 = vrot.lane.b32.xlu0 %v615, 16
      %v633 = vpop.permute.xlu0 %632
      %634 = vrot.lane.b32.xlu0 %v616, 16
      %v635 = vpop.permute.xlu0 %634
      %v638 = vsel %vm413, %v614, %v627
      %v639 = vsel %vm413, %v615, %v629
      %v640 = vsel %vm460, %v638, %v633
      %v641 = vsel %vm460, %v639, %v635
      %v642 = vld [vmem:[%s4] sm:$0xff]
      %v643 = vld [vmem:[%s4 + $0x8] sm:$0xff]
      %v644 = vld [vmem:[%s4 + $0x10] sm:$0xff]
      %v645 = vld [vmem:[%s5] sm:$0x1]
      %v647 = vlaneseq
      %v648 = vshrl.u32 %v647, 7
      %v649 = vsub.s32 0, %v648
      %v650 = vrot.slane %v645, %v649
      %v653 = vsel %vm474, %v640, 0
      %v656 = vsel %vm474, %v641, 0
      %658 = vmatprep.subr.mxu0 0.0
      %659 = vmatpush1.msra.mxu0 0.0
      %660 = vmatprep.subr.mxu0 0.0
      %661 = vmatpush1.msra.mxu0 0.0
      %662 = vmatprep.subr.mxu0 0.0
      %663 = vmatpush1.msra.mxu0 0.0
      %664 = vmatprep.subr.mxu0 0.0
      %665 = vmatpush1.msra.mxu0 0.0
      %666 = vmatprep.subr.mxu0 0.0
      %667 = vmatpush1.msra.mxu0 0.0
      %668 = vmatprep.subr.mxu0 0.0
      %669 = vmatpush1.msra.mxu0 0.0
      %670 = vmatprep.subr.mxu0 0.0
      %671 = vmatpush1.msra.mxu0 0.0
      %672 = vmatprep.subr.mxu0 0.0
      %673 = vmatpush1.msra.mxu0 0.0
      %674 = vmatprep.subr.mxu0 0.0
      %675 = vmatpush1.msra.mxu0 0.0
      %676 = vmatprep.subr.mxu0 0.0
      %677 = vmatpush1.msra.mxu0 0.0
      %678 = vmatprep.subr.mxu0 0.0
      %679 = vmatpush1.msra.mxu0 0.0
      %680 = vmatprep.subr.mxu0 0.0
      %681 = vmatpush1.msra.mxu0 0.0
      %682 = vmatprep.subr.mxu0 0.0
      %683 = vmatpush1.msra.mxu0 0.0
      %684 = vmatprep.subr.mxu0 0.0
      %685 = vmatpush1.msra.mxu0 %v644
      %686 = vmatprep.subr.mxu0 0.0
      %687 = vmatpush1.msra.mxu0 %v643
      %688 = vmatprep.subr.mxu0 0.0
      %689 = vmatpush1.msra.mxu0 %v642
      %690 = vmatprep.subr.mxu0 0.0
      %691 = vmatpush2.msra.mxu0 0.0
      %692 = vmatprep.subr.mxu0 0.0
      %693 = vmatpush2.msra.mxu0 0.0
      %694 = vmatprep.subr.mxu0 0.0
      %695 = vmatpush2.msra.mxu0 0.0
      %696 = vmatprep.subr.mxu0 0.0
      %697 = vmatpush2.msra.mxu0 0.0
      %698 = vmatprep.subr.mxu0 0.0
      %699 = vmatpush2.msra.mxu0 0.0
      %700 = vmatprep.subr.mxu0 0.0
      %701 = vmatpush2.msra.mxu0 0.0
      %702 = vmatprep.subr.mxu0 0.0
      %703 = vmatpush2.msra.mxu0 0.0
      %704 = vmatprep.subr.mxu0 0.0
      %705 = vmatpush2.msra.mxu0 0.0
      %706 = vmatprep.subr.mxu0 0.0
      %707 = vmatpush2.msra.mxu0 0.0
      %708 = vmatprep.subr.mxu0 0.0
      %709 = vmatpush2.msra.mxu0 0.0
      %710 = vmatprep.subr.mxu0 0.0
      %711 = vmatpush2.msra.mxu0 0.0
      %712 = vmatprep.subr.mxu0 0.0
      %713 = vmatpush2.msra.mxu0 0.0
      %714 = vmatprep.subr.mxu0 0.0
      %715 = vmatpush2.msra.mxu0 0.0
      %716 = vmatprep.subr.mxu0 0.0
      %717 = vmatpush2.msra.mxu0 0.0
      %718 = vmatprep.subr.mxu0 0.0
      %719 = vmatpush2.msra.mxu0 0.0
      %720 = vmatprep.subr.mxu0 0.0
      %721 = vmatpush2.msra.mxu0 0.0
      %722 = vmatprep.mubr.f32.mxu0 0.0
      %723 = vmatmul.mubr.f32.gmra.mxu0 %v653
      %v724 = vpop.f32.mrf.mxu0
      %v725 = vadd.f32 %v650, %v724
      %v726 = vpop.f32.mrf.mxu0
      %727 = vmatprep.mubr.f32.mxu0 0.0
      %728 = vmatmul.mubr.f32.gmra.mxu0 %v656
      %v729 = vpop.f32.mrf.mxu0
      %v730 = vadd.f32 %v650, %v729
      %v731 = vpop.f32.mrf.mxu0
      %732 = vdwg.mxu0
      %v733 = vtanh.pop %v725
      %v734 = vtanh.pop %v730
      %v735 = vmul.f32 %v725, 0.5
      %v736 = vmul.f32 %v730, 0.5
      %v737 = vtanh.pop %v735
      %v738 = vtanh.pop %v736
      %v739 = vmul.f32 %v737, 0.5
      %v740 = vmul.f32 %v738, 0.5
      %v741 = vadd.f32 %v739, 0.5
      %v742 = vadd.f32 %v740, 0.5
      %745 = vrot.lane.b32.xlu0 %v741, 120
      %v746 = vpop.permute.xlu0 %745
      %747 = vrot.lane.b32.xlu0 %v742, 120
      %v748 = vpop.permute.xlu0 %747
      %v751 = vmul.f32 %v733, %v746
      %v752 = vmul.f32 %v734, %v748
      %v753 = vld [vmem:[%s399] sm:$0xff]
      %v754 = vld [vmem:[%s399 + $0x8] sm:$0xff]
      %v755 = vadd.f32 %v753, %v751
      %v756 = vadd.f32 %v754, %v752
      %v757 = vmax.f32 %v755, 0.0
      %v758 = vmax.f32 %v756, 0.0
      %759 = vst.msk [vmem:[%s409] sm:$0xff] %vm413, %v757
      %760 = vst.msk [vmem:[%s409 + $0x8] sm:$0xff] %vm413, %v758
      %s761 = smul.u32 2, %s23
      %p762 = scmp.lt.s32.totalorder %s22, 1
      %s763 = scalar_select %p762, %s22, 1
      %p764 = scmp.lt.s32.totalorder %s761, 3
      %s765 = scalar_select %p764, %s761, 3
      %s766 = smul.addr %s763, 4
      %s767 = sadd.s32 %s765, %s766
      %s768 = smul.addr %s767, 8
      %s769 = scalar_lea.vmem %s7, %s768
      // Predicated region
      $region49: #{shared_tcn_forward.5} parent=47 // pred_check
        %p770 = pneg %p224
      $region50: #{shared_tcn_forward.5} parent=47 // pred_check_branch
        %772 = sbr.rel (%p770) target = $region52
      $region51: #{shared_tcn_forward.5} parent=47 // pred_region
        %s773 = smul.u32 2, %s23
      $region52: #{shared_tcn_forward.5} parent=47 // pred_fallthru
        _
    $region48: #{shared_tcn_forward.5} parent=5 // pred_fallthru
      _
    %p774 = scmp.le.s32.totalorder 2, %s13
    // Predicated region
    $region53: #{shared_tcn_forward.5} parent=5 // pred_check
      %p775 = pneg %p774
    $region54: #{shared_tcn_forward.5} parent=5 // pred_check_branch
      %777 = sbr.rel (%p775) target = $region56
    $region55: #{shared_tcn_forward.5} parent=5 // pred_region
      %s778 = ssub.s32 %s13, 2
      // Predicated region
      $region57: #{shared_tcn_forward.5} parent=55 // pred_check
        %p779 = pneg %p230
      $region58: #{shared_tcn_forward.5} parent=55 // pred_check_branch
        %781 = sbr.rel (%p779) target = $region60
      $region59: #{shared_tcn_forward.5} parent=55 // pred_region
        %s782 = smul.u32 2, %s25
        %p783 = scmp.lt.s32.totalorder %s24, 1
        %s784 = scalar_select %p783, %s24, 1
        %p785 = scmp.lt.s32.totalorder %s782, 3
        %s786 = scalar_select %p785, %s782, 3
        %s787 = smul.addr %s784, 4
        %s788 = sadd.s32 %s786, %s787
        %s789 = smul.addr %s788, 8
        %s790 = scalar_lea.vmem %s7, %s789
      $region60: #{shared_tcn_forward.5} parent=55 // pred_fallthru
        _
    $region56: #{shared_tcn_forward.5} parent=5 // pred_fallthru
      _
  $region6: #{shared_tcn_forward.5} parent=0 // loop_footer
    %s17 = sadd.s32 1, %s13
  $region7: #{shared_tcn_forward.5} parent=0 // loop_footer_branch
    %12 = sbr.rel target = $region3
  $region8: #{shared_tcn_forward.5} parent=0 // loop_exit
    _

</llo_original>
